<compile_context>
chip_gen: v6e
topology: v6e:2x2x1
jax: 0.10.0
libtpu: 0.0.40
codegen_flags: <defaults>
</compile_context>

<pallas_src>
import functools

import numpy as np
import jax
import jax.numpy as jnp
from jax import lax
from jax.experimental import pallas as pl
from jax.experimental.pallas import tpu as pltpu


def _round_up(x, m):
    return ((x + m - 1) // m) * m


# ----------------------- kernel 1: pairwise squared distances -----------------------

def _pdist_kernel(c_ref, ct_ref, d_ref):
    c = c_ref[0]                                   # (TB, 8)  f32, lanes 3..7 are zero
    ct = ct_ref[0]                                 # (8, TB)  f32
    ra = jnp.sum(c * c, axis=1, keepdims=True)     # (TB, 1)
    rb = jnp.sum(ct * ct, axis=0, keepdims=True)   # (1, TB)
    cross = jnp.dot(c, ct, preferred_element_type=jnp.float32)   # MXU
    d2 = ra + rb - 2.0 * cross
    # Force self-distance to -1 (strictly smallest) so top_k column 0 is always "self".
    tm, tn = d2.shape
    row = lax.broadcasted_iota(jnp.int32, (tm, tn), 0) + pl.program_id(1) * tm
    col = lax.broadcasted_iota(jnp.int32, (tm, tn), 1) + pl.program_id(2) * tn
    d_ref[0] = jnp.where(row == col, -1.0, d2)


def pairwise_sqdist(coords8, coords8_t, tb):
    B, vp, _ = coords8.shape
    nb = vp // tb
    return pl.pallas_call(
        _pdist_kernel,
        grid=(B, nb, nb),
        in_specs=[
            pl.BlockSpec((1, tb, 8), lambda b, i, j: (b, i, 0)),
            pl.BlockSpec((1, 8, tb), lambda b, i, j: (b, 0, j)),
        ],
        out_specs=pl.BlockSpec((1, tb, tb), lambda b, i, j: (b, i, j)),
        out_shape=jax.ShapeDtypeStruct((B, vp, vp), jnp.float32),
        compiler_params=pltpu.CompilerParams(
            dimension_semantics=("parallel", "parallel", "parallel")),
    )(coords8, coords8_t)


# ---------------- kernel 2: edge scoring MLP + per-anchor softmax over knn ----------------

def _edge_mlp_kernel(tok_ref, enr_ref, w1a_ref, w1nr_ref, b1_ref, w2_ref, out_ref):
    tok = tok_ref[0]                                    # (VB, D)        bf16
    enr = enr_ref[0]                                    # (VB, K*(D+3))  bf16
    # First MLP layer for all K edges of VB anchors at once: column-block k of h equals
    # Linear1([anchor | knn_k | rel_k]).  The anchor part is shared across k (tiled weights),
    # the neighbor/rel part uses block-diagonal weights.
    h = (jnp.dot(tok, w1a_ref[...], preferred_element_type=jnp.float32)
         + jnp.dot(enr, w1nr_ref[...], preferred_element_type=jnp.float32)
         + b1_ref[...])                                 # (VB, K*Hd) f32
    h = jnp.maximum(h, 0.0)
    # Second layer (block-diagonal) -> per-edge score with K on the lane axis.
    # Linear2's bias shifts every edge of an anchor equally -> softmax-invariant, dropped.
    s = jnp.dot(h.astype(jnp.bfloat16), w2_ref[...],
                preferred_element_type=jnp.float32)     # (VB, K) f32
    s = s - jnp.max(s, axis=-1, keepdims=True)
    e = jnp.exp(s)
    out_ref[0] = e * pl.reciprocal(jnp.sum(e, axis=-1, keepdims=True), approx=True)


def edge_mlp_softmax(tokens_bf, edge_nr, w1, b1, w2, knn_size, vb):
    B, vp, D = tokens_bf.shape
    K = knn_size
    Hd = w1.shape[1]
    Fnr = K * (D + 3)
    KH = K * Hd
    eye = jnp.eye(K, dtype=jnp.float32)
    w1a_t = jnp.tile(w1[:D, :], (1, K)).astype(jnp.bfloat16)        # (D, K*Hd)
    w1nr_bd = jnp.kron(eye, w1[D:, :]).astype(jnp.bfloat16)         # (K*(D+3), K*Hd)
    b1_t = jnp.tile(b1, K).reshape(1, KH).astype(jnp.float32)       # (1, K*Hd)
    w2_bd = jnp.kron(eye, w2).astype(jnp.bfloat16)                  # (K*Hd, K)
    return pl.pallas_call(
        _edge_mlp_kernel,
        grid=(B, vp // vb),
        in_specs=[
            pl.BlockSpec((1, vb, D), lambda b, i: (b, i, 0)),
            pl.BlockSpec((1, vb, Fnr), lambda b, i: (b, i, 0)),
            pl.BlockSpec((D, KH), lambda b, i: (0, 0)),
            pl.BlockSpec((Fnr, KH), lambda b, i: (0, 0)),
            pl.BlockSpec((1, KH), lambda b, i: (0, 0)),
            pl.BlockSpec((KH, K), lambda b, i: (0, 0)),
        ],
        out_specs=pl.BlockSpec((1, vb, K), lambda b, i: (b, i, 0)),
        out_shape=jax.ShapeDtypeStruct((B, vp, K), jnp.float32),
        compiler_params=pltpu.CompilerParams(dimension_semantics=("parallel", "parallel")),
    )(tokens_bf, edge_nr, w1a_t, w1nr_bd, b1_t, w2_bd)


# -------------------- kernel 3: fused multi-head cross attention --------------------

def _cross_attn_kernel(a_ref, n_ref, wq_ref, bq_ref, wk_ref, bk_ref, wv_ref, bv_ref,
                       wo_ref, bo_ref, hsum_ref, hexp_ref, o_ref, *, ksel, scale):
    a = a_ref[0]                                                       # (VB, D) bf16
    q = jnp.dot(a, wq_ref[...], preferred_element_type=jnp.float32) + bq_ref[...]
    q = q * scale                                                      # fold 1/sqrt(Dh) into Q
    hsum = hsum_ref[...]                                               # (D, H) 0/1 bf16
    hexp = hexp_ref[...]                                               # (H, D) 0/1 bf16
    scores = []
    vals = []
    for kk in range(ksel):                                             # ksel is small & static
        nb = n_ref[0, kk]                                              # (VB, D) bf16
        kf = jnp.dot(nb, wk_ref[...], preferred_element_type=jnp.float32) + bk_ref[...]
        vf = jnp.dot(nb, wv_ref[...], preferred_element_type=jnp.float32) + bv_ref[...]
        # per-head score = sum over each head's Dh lanes -> MXU via head-sum matrix
        scores.append(jnp.dot((q * kf).astype(jnp.bfloat16), hsum,
                              preferred_element_type=jnp.float32))     # (VB, H)
        vals.append(vf)
    m = scores[0]
    for kk in range(1, ksel):
        m = jnp.maximum(m, scores[kk])
    exps = [jnp.exp(scores[kk] - m) for kk in range(ksel)]
    den = exps[0]
    for kk in range(1, ksel):
        den = den + exps[kk]
    inv = pl.reciprocal(den, approx=True)                              # (VB, H)
    acc = jnp.zeros_like(q)                                            # (VB, D) f32
    for kk in range(ksel):
        # broadcast each head's weight across its Dh lanes via MXU (no lane slicing / concat)
        w_full = jnp.dot((exps[kk] * inv).astype(jnp.bfloat16), hexp,
                         preferred_element_type=jnp.float32)           # (VB, D)
        acc = acc + w_full * vals[kk]
    o = jnp.dot(acc.astype(jnp.bfloat16), wo_ref[...],
                preferred_element_type=jnp.float32) + bo_ref[...]
    o_ref[0] = o.astype(o_ref.dtype)


def cross_attention(tokens_bf, neighbors_t, params, num_heads, vb):
    B, vp, D = tokens_bf.shape
    ksel = neighbors_t.shape[1]
    H = num_heads
    Dh = D // H
    scale = 1.0 / float(np.sqrt(Dh))
    hsum = (jnp.arange(D)[:, None] // Dh == jnp.arange(H)[None, :]).astype(jnp.bfloat16)
    hexp = hsum.T
    bf = lambda w: w.astype(jnp.bfloat16)
    row = lambda v: v.reshape(1, D).astype(jnp.float32)
    wspec = pl.BlockSpec((D, D), lambda b, i: (0, 0))
    bspec = pl.BlockSpec((1, D), lambda b, i: (0, 0))
    kern = functools.partial(_cross_attn_kernel, ksel=ksel, scale=scale)
    return pl.pallas_call(
        kern,
        grid=(B, vp // vb),
        in_specs=[
            pl.BlockSpec((1, vb, D), lambda b, i: (b, i, 0)),
            pl.BlockSpec((1, ksel, vb, D), lambda b, i: (b, 0, i, 0)),
            wspec, bspec, wspec, bspec, wspec, bspec, wspec, bspec,
            pl.BlockSpec((D, H), lambda b, i: (0, 0)),
            pl.BlockSpec((H, D), lambda b, i: (0, 0)),
        ],
        out_specs=pl.BlockSpec((1, vb, D), lambda b, i: (b, i, 0)),
        out_shape=jax.ShapeDtypeStruct((B, vp, D), jnp.float32),
        compiler_params=pltpu.CompilerParams(dimension_semantics=("parallel", "parallel")),
    )(tokens_bf, neighbors_t,
      bf(params["wq"]), row(params["bq"]),
      bf(params["wk"]), row(params["bk"]),
      bf(params["wv"]), row(params["bv"]),
      bf(params["wo"]), row(params["bo"]),
      hsum, hexp)


# ----------------------------- module forward (padded, jitted) -----------------------------

@functools.partial(jax.jit, static_argnames=("num_heads", "knn_size", "top_k_select", "vb"))
def _forward_padded(tokens, coords, counts, params, *, num_heads, knn_size, top_k_select, vb):
    B, vp, D = tokens.shape
    K = knn_size

    tokens_bf = tokens.astype(jnp.bfloat16)
    coords8 = jnp.pad(coords, ((0, 0), (0, 0), (0, 5)))           # (B, vp, 8) zero lane pad
    coords8_t = jnp.swapaxes(coords8, 1, 2)                       # (B, 8, vp)

    # 1) pairwise squared distances (diag forced to -1; pad voxels at far sentinel coords)
    d2 = pairwise_sqdist(coords8, coords8_t, vb)                  # (B, vp, vp) f32

    # kNN selection: sqrt dropped (monotone).  Column 0 is always self -> drop it.
    _, knn_all = lax.top_k(-d2, K + 1)                            # (B, vp, K+1)
    knn_idx = knn_all[:, :, 1:]
    # columns past (Vp_real - 1) replicate the reference's zero-index padding of knn_idx
    col_valid = jnp.arange(K)[None, None, :] < (counts[:, None, None] - 1)
    knn_idx = jnp.where(col_valid, knn_idx, 0)

    # 2) edge features: the anchor-token broadcast is NOT materialized (folded into tiled
    #    first-layer weights inside the kernel); only [knn_token | rel_pos] goes to HBM.
    gather = jax.vmap(lambda src, idx: src[idx])
    knn_tok = gather(tokens_bf, knn_idx)                          # (B, vp, K, D)  bf16
    knn_crd = gather(coords, knn_idx)                             # (B, vp, K, 3)  f32
    rel = (knn_crd - coords[:, :, None, :]).astype(jnp.bfloat16)
    edge_nr = jnp.concatenate([knn_tok, rel], axis=-1).reshape(B, vp, K * (D + 3))
    # TODO(synk): gather knn_tok/rel inside kernel 2 via PrefetchScalarGridSpec + manual DMA
    # to remove this (B, vp, K*(D+3)) HBM round trip entirely.

    attn_w = edge_mlp_softmax(tokens_bf, edge_nr,
                              params["w1e"], params["b1e"], params["w2e"], K, vb)  # (B, vp, K)
    # edge_dropout: eval-mode identity

    # top-k neighbor selection
    _, top_local = lax.top_k(attn_w, top_k_select)                # (B, vp, ksel)
    top_idx = jnp.take_along_axis(knn_idx, top_local, axis=-1)
    top_nb = gather(tokens_bf, top_idx)                           # (B, vp, ksel, D)
    top_nb_t = jnp.swapaxes(top_nb, 1, 2)                         # (B, ksel, vp, D)

    # 3) fused multi-head cross attention (attn_dropout: eval-mode identity)
    return cross_attention(tokens_bf, top_nb_t, params, num_heads, vb)   # (B, vp, D) f32


def sparse_dynamic_voxel_attention(voxel_tokens, voxel_coords, mask, params,
                                   num_heads=4, knn_size=10, top_k_select=4):
    """Returns a list of length B; entry b has shape (Vp_b, D), matching the PyTorch module."""
    B, V, D = voxel_tokens.shape
    mask_np = np.asarray(mask)
    counts = mask_np.sum(axis=1).astype(np.int32)                 # (B,), host
    max_vp = int(counts.max()) if B else 0

    # One fixed padded voxel count for the whole batch -> kernels compile once, batch rides a
    # "parallel" grid axis.  Pad rows: zero tokens + sentinel coords (never a kNN of a real voxel).
    vp_pad = _round_up(max(max_vp, knn_size + 1, 8), 8)
    if vp_pad > 256:
        vp_pad = _round_up(vp_pad, 256)                           # row block must divide vp_pad
    vb = min(vp_pad, 256)                                         # 256-row blocks fit v7x VMEM too

    tok_np = np.asarray(voxel_tokens, np.float32)
    crd_np = np.asarray(voxel_coords, np.float32)
    tok_pad = np.zeros((B, vp_pad, D), np.float32)
    crd_pad = np.full((B, vp_pad, 3), 1.0e4, np.float32)
    for b in range(B):
        idx = np.nonzero(mask_np[b])[0]
        n = int(idx.size)
        if n:
            tok_pad[b, :n] = tok_np[b, idx]
            crd_pad[b, :n] = crd_np[b, idx]

    out = _forward_padded(jnp.asarray(tok_pad), jnp.asarray(crd_pad), jnp.asarray(counts),
                          params, num_heads=num_heads, knn_size=knn_size,
                          top_k_select=top_k_select, vb=vb)
    return [out[b, :int(counts[b])] for b in range(B)]


def init_params(dim, hidden=64, seed=1):
    key = jax.random.PRNGKey(seed)
    ks = jax.random.split(key, 12)
    f = 2 * dim + 3

    def lin(kw, kb, fan_in, fan_out):
        w = jax.random.normal(kw, (fan_in, fan_out), jnp.float32) * (1.0 / np.sqrt(fan_in))
        b = jax.random.normal(kb, (fan_out,), jnp.float32) * 0.01
        return w, b

    w1e, b1e = lin(ks[0], ks[1], f, hidden)
    w2e, b2e = lin(ks[2], ks[3], hidden, 1)
    wq, bq = lin(ks[4], ks[5], dim, dim)
    wk, bk = lin(ks[6], ks[7], dim, dim)
    wv, bv = lin(ks[8], ks[9], dim, dim)
    wo, bo = lin(ks[10], ks[11], dim, dim)
    return dict(w1e=w1e, b1e=b1e, w2e=w2e, b2e=b2e,
                wq=wq, bq=bq, wk=wk, bk=bk, wv=wv, bv=bv, wo=wo, bo=bo)


if __name__ == "__main__":
    B, V, D = 2, 16, 32
    num_heads, knn_size, top_k_select = 4, 10, 4

    key = jax.random.PRNGKey(0)
    k_tok, k_coord = jax.random.split(key, 2)
    voxel_tokens = jax.random.normal(k_tok, (B, V, D), jnp.float32)
    voxel_coords = jax.random.uniform(k_coord, (B, V, 3), jnp.float32, 0.0, 4.0)
    # deterministic mask: batch 0 fully occupied, batch 1 has 12 non-empty voxels
    mask = jnp.ones((B, V), dtype=bool).at[1, 12:].set(False)

    params = init_params(D, hidden=64, seed=1)

    outs = sparse_dynamic_voxel_attention(voxel_tokens, voxel_coords, mask, params,
                                          num_heads=num_heads, knn_size=knn_size,
                                          top_k_select=top_k_select)
    for o in outs:
        jax.block_until_ready(o)
    assert outs[0].shape == (16, D) and outs[1].shape == (12, D)
    assert all(bool(jnp.all(jnp.isfinite(o))) for o in outs)
    print("KERNEL_OK")
</pallas_src>

<mosaic_0001>
module attributes {stable_mosaic.version = 11 : i64} {
  func.func @_pdist_kernel(%arg0: i32, %arg1: i32, %arg2: i32, %arg3: memref<1x16x8xf32, #tpu.memory_space<vmem>>, %arg4: memref<1x8x16xf32, #tpu.memory_space<vmem>>, %arg5: memref<1x16x16xf32, #tpu.memory_space<vmem>>) attributes {dimension_semantics = [#tpu.dimension_semantics<parallel>, #tpu.dimension_semantics<parallel>, #tpu.dimension_semantics<parallel>], iteration_bounds = array<i64: 2, 1, 1>, scalar_prefetch = 0 : i64, scratch_operands = 0 : i64, tpu.core_type = #tpu.core_type<tc>, window_params = [{transform_indices = @transform_0, window_bounds = array<i64: 1, 16, 8>}, {transform_indices = @transform_1, window_bounds = array<i64: 1, 8, 16>}, {transform_indices = @transform_2, window_bounds = array<i64: 1, 16, 16>}]} {
    %c0 = arith.constant 0 : index
    %c0_0 = arith.constant 0 : index
    %c0_1 = arith.constant 0 : index
    %0 = vector.load %arg3[%c0, %c0_0, %c0_1] : memref<1x16x8xf32, #tpu.memory_space<vmem>>, vector<1x16x8xf32>
    %1 = vector.shape_cast %0 : vector<1x16x8xf32> to vector<16x8xf32>
    %c0_2 = arith.constant 0 : index
    %c0_3 = arith.constant 0 : index
    %c0_4 = arith.constant 0 : index
    %2 = vector.load %arg4[%c0_2, %c0_3, %c0_4] : memref<1x8x16xf32, #tpu.memory_space<vmem>>, vector<1x8x16xf32>
    %3 = vector.shape_cast %2 : vector<1x8x16xf32> to vector<8x16xf32>
    %4 = arith.mulf %1, %1 : vector<16x8xf32>
    %cst = arith.constant dense<0.000000e+00> : vector<16xf32>
    %5 = vector.multi_reduction <add>, %4, %cst [1] : vector<16x8xf32> to vector<16xf32>
    %6 = vector.shape_cast %5 : vector<16xf32> to vector<16x1xf32>
    %7 = arith.mulf %3, %3 : vector<8x16xf32>
    %cst_5 = arith.constant dense<0.000000e+00> : vector<16xf32>
    %8 = vector.multi_reduction <add>, %7, %cst_5 [0] : vector<8x16xf32> to vector<16xf32>
    %9 = vector.shape_cast %8 : vector<16xf32> to vector<1x16xf32>
    %cst_6 = arith.constant dense<0.000000e+00> : vector<16x16xf32>
    %10 = tpu.matmul %1, %3, %cst_6 {dimension_numbers = #tpu.dot_dimension_numbers<[1], [0], [0], [1], [0, 0, 1, 1], [], []>} : vector<16x8xf32>, vector<8x16xf32>, vector<16x16xf32> -> vector<16x16xf32>
    %11 = vector.broadcast %6 : vector<16x1xf32> to vector<16x16xf32>
    %12 = vector.broadcast %9 : vector<1x16xf32> to vector<16x16xf32>
    %13 = arith.addf %11, %12 : vector<16x16xf32>
    %cst_7 = arith.constant 2.000000e+00 : f32
    %14 = vector.broadcast %cst_7 : f32 to vector<16x16xf32>
    %15 = arith.mulf %14, %10 : vector<16x16xf32>
    %16 = arith.subf %13, %15 : vector<16x16xf32>
    %17 = tpu.iota {dimensions = array<i32: 0>} : vector<16x16xi32>
    %c16_i32 = arith.constant 16 : i32
    %18 = arith.muli %arg1, %c16_i32 : i32
    %19 = vector.broadcast %18 : i32 to vector<16x16xi32>
    %20 = arith.addi %17, %19 : vector<16x16xi32>
    %21 = tpu.iota {dimensions = array<i32: 1>} : vector<16x16xi32>
    %c16_i32_8 = arith.constant 16 : i32
    %22 = arith.muli %arg2, %c16_i32_8 : i32
    %23 = vector.broadcast %22 : i32 to vector<16x16xi32>
    %24 = arith.addi %21, %23 : vector<16x16xi32>
    %25 = arith.cmpi eq, %20, %24 : vector<16x16xi32>
    %cst_9 = arith.constant -1.000000e+00 : f32
    %26 = vector.broadcast %cst_9 : f32 to vector<16x16xf32>
    %27 = arith.select %25, %26, %16 : vector<16x16xi1>, vector<16x16xf32>
    %c0_10 = arith.constant 0 : index
    %c0_11 = arith.constant 0 : index
    %c0_12 = arith.constant 0 : index
    %28 = vector.load %arg5[%c0_10, %c0_11, %c0_12] : memref<1x16x16xf32, #tpu.memory_space<vmem>>, vector<1x16x16xf32>
    %29 = vector.shape_cast %28 : vector<1x16x16xf32> to vector<16x16xf32>
    %30 = vector.shape_cast %27 : vector<16x16xf32> to vector<1x16x16xf32>
    tpu.vector_store %arg5[%c0_10, %c0_11, %c0_12], %30 {strides = array<i32>} : memref<1x16x16xf32, #tpu.memory_space<vmem>>, vector<1x16x16xf32>,
    return
  }
  func.func @transform_0(%arg0: i32, %arg1: i32, %arg2: i32) -> (i32, i32, i32) {
    %c0_i32 = arith.constant 0 : i32
    %c0_i32_0 = arith.constant 0 : i32
    return %arg0, %arg1, %c0_i32 : i32, i32, i32
  }
  func.func @transform_1(%arg0: i32, %arg1: i32, %arg2: i32) -> (i32, i32, i32) {
    %c0_i32 = arith.constant 0 : i32
    %c0_i32_0 = arith.constant 0 : i32
    return %arg0, %c0_i32, %arg2 : i32, i32, i32
  }
  func.func @transform_2(%arg0: i32, %arg1: i32, %arg2: i32) -> (i32, i32, i32) {
    %c0_i32 = arith.constant 0 : i32
    return %arg0, %arg1, %arg2 : i32, i32, i32
  }
}

module attributes {stable_mosaic.version = 11 : i64} {
  func.func @_edge_mlp_kernel(%arg0: i32, %arg1: i32, %arg2: memref<1x16x32xbf16, #tpu.memory_space<vmem>>, %arg3: memref<1x16x350xbf16, #tpu.memory_space<vmem>>, %arg4: memref<32x640xbf16, #tpu.memory_space<vmem>>, %arg5: memref<350x640xbf16, #tpu.memory_space<vmem>>, %arg6: memref<1x640xf32, #tpu.memory_space<vmem>>, %arg7: memref<640x10xbf16, #tpu.memory_space<vmem>>, %arg8: memref<1x16x10xf32, #tpu.memory_space<vmem>>) attributes {dimension_semantics = [#tpu.dimension_semantics<parallel>, #tpu.dimension_semantics<parallel>], iteration_bounds = array<i64: 2, 1>, scalar_prefetch = 0 : i64, scratch_operands = 0 : i64, tpu.core_type = #tpu.core_type<tc>, window_params = [{transform_indices = @transform_0, window_bounds = array<i64: 1, 16, 32>}, {transform_indices = @transform_1, window_bounds = array<i64: 1, 16, 350>}, {pipeline_mode = #tpu.pipeline_mode<synchronous>, transform_indices = @transform_2, window_bounds = array<i64: 32, 640>}, {pipeline_mode = #tpu.pipeline_mode<synchronous>, transform_indices = @transform_3, window_bounds = array<i64: 350, 640>}, {pipeline_mode = #tpu.pipeline_mode<synchronous>, transform_indices = @transform_4, window_bounds = array<i64: 1, 640>}, {pipeline_mode = #tpu.pipeline_mode<synchronous>, transform_indices = @transform_5, window_bounds = array<i64: 640, 10>}, {transform_indices = @transform_6, window_bounds = array<i64: 1, 16, 10>}]} {
    %c0 = arith.constant 0 : index
    %c0_0 = arith.constant 0 : index
    %c0_1 = arith.constant 0 : index
    %0 = vector.load %arg2[%c0, %c0_0, %c0_1] : memref<1x16x32xbf16, #tpu.memory_space<vmem>>, vector<1x16x32xbf16>
    %1 = vector.shape_cast %0 : vector<1x16x32xbf16> to vector<16x32xbf16>
    %c0_2 = arith.constant 0 : index
    %c0_3 = arith.constant 0 : index
    %c0_4 = arith.constant 0 : index
    %2 = vector.load %arg3[%c0_2, %c0_3, %c0_4] : memref<1x16x350xbf16, #tpu.memory_space<vmem>>, vector<1x16x350xbf16>
    %3 = vector.shape_cast %2 : vector<1x16x350xbf16> to vector<16x350xbf16>
    %c0_5 = arith.constant 0 : index
    %c0_6 = arith.constant 0 : index
    %4 = vector.load %arg4[%c0_5, %c0_6] : memref<32x640xbf16, #tpu.memory_space<vmem>>, vector<32x640xbf16>
    %cst = arith.constant dense<0.000000e+00> : vector<16x640xf32>
    %5 = tpu.matmul %1, %4, %cst {dimension_numbers = #tpu.dot_dimension_numbers<[1], [0], [0], [1], [0, 0, 1, 1], [], []>} : vector<16x32xbf16>, vector<32x640xbf16>, vector<16x640xf32> -> vector<16x640xf32>
    %c0_7 = arith.constant 0 : index
    %c0_8 = arith.constant 0 : index
    %6 = vector.load %arg5[%c0_7, %c0_8] : memref<350x640xbf16, #tpu.memory_space<vmem>>, vector<350x640xbf16>
    %cst_9 = arith.constant dense<0.000000e+00> : vector<16x640xf32>
    %7 = tpu.matmul %3, %6, %cst_9 {dimension_numbers = #tpu.dot_dimension_numbers<[1], [0], [0], [1], [0, 0, 1, 1], [], []>} : vector<16x350xbf16>, vector<350x640xbf16>, vector<16x640xf32> -> vector<16x640xf32>
    %8 = arith.addf %5, %7 : vector<16x640xf32>
    %c0_10 = arith.constant 0 : index
    %c0_11 = arith.constant 0 : index
    %9 = vector.load %arg6[%c0_10, %c0_11] : memref<1x640xf32, #tpu.memory_space<vmem>>, vector<1x640xf32>
    %10 = vector.broadcast %9 : vector<1x640xf32> to vector<16x640xf32>
    %11 = arith.addf %8, %10 : vector<16x640xf32>
    %cst_12 = arith.constant 0.000000e+00 : f32
    %12 = vector.broadcast %cst_12 : f32 to vector<16x640xf32>
    %13 = arith.maximumf %11, %12 : vector<16x640xf32>
    %14 = arith.truncf %13 : vector<16x640xf32> to vector<16x640xbf16>
    %c0_13 = arith.constant 0 : index
    %c0_14 = arith.constant 0 : index
    %15 = vector.load %arg7[%c0_13, %c0_14] : memref<640x10xbf16, #tpu.memory_space<vmem>>, vector<640x10xbf16>
    %cst_15 = arith.constant dense<0.000000e+00> : vector<16x10xf32>
    %16 = tpu.matmul %14, %15, %cst_15 {dimension_numbers = #tpu.dot_dimension_numbers<[1], [0], [0], [1], [0, 0, 1, 1], [], []>} : vector<16x640xbf16>, vector<640x10xbf16>, vector<16x10xf32> -> vector<16x10xf32>
    %cst_16 = arith.constant dense<0xFF800000> : vector<16xf32>
    %17 = vector.multi_reduction <maximumf>, %16, %cst_16 [1] : vector<16x10xf32> to vector<16xf32>
    %18 = vector.shape_cast %17 : vector<16xf32> to vector<16x1xf32>
    %19 = vector.broadcast %18 : vector<16x1xf32> to vector<16x10xf32>
    %20 = arith.subf %16, %19 : vector<16x10xf32>
    %21 = math.exp %20 : vector<16x10xf32>
    %cst_17 = arith.constant dense<0.000000e+00> : vector<16xf32>
    %22 = vector.multi_reduction <add>, %21, %cst_17 [1] : vector<16x10xf32> to vector<16xf32>
    %23 = vector.shape_cast %22 : vector<16xf32> to vector<16x1xf32>
    %24 = tpu.reciprocal %23 {approx = true} : vector<16x1xf32> -> vector<16x1xf32>
    %25 = vector.broadcast %24 : vector<16x1xf32> to vector<16x10xf32>
    %26 = arith.mulf %21, %25 : vector<16x10xf32>
    %c0_18 = arith.constant 0 : index
    %c0_19 = arith.constant 0 : index
    %c0_20 = arith.constant 0 : index
    %27 = vector.load %arg8[%c0_18, %c0_19, %c0_20] : memref<1x16x10xf32, #tpu.memory_space<vmem>>, vector<1x16x10xf32>
    %28 = vector.shape_cast %27 : vector<1x16x10xf32> to vector<16x10xf32>
    %29 = vector.shape_cast %26 : vector<16x10xf32> to vector<1x16x10xf32>
    tpu.vector_store %arg8[%c0_18, %c0_19, %c0_20], %29 {strides = array<i32>} : memref<1x16x10xf32, #tpu.memory_space<vmem>>, vector<1x16x10xf32>,
    return
  }
  func.func @transform_0(%arg0: i32, %arg1: i32) -> (i32, i32, i32) {
    %c0_i32 = arith.constant 0 : i32
    %c0_i32_0 = arith.constant 0 : i32
    return %arg0, %arg1, %c0_i32 : i32, i32, i32
  }
  func.func @transform_1(%arg0: i32, %arg1: i32) -> (i32, i32, i32) {
    %c0_i32 = arith.constant 0 : i32
    %c0_i32_0 = arith.constant 0 : i32
    return %arg0, %arg1, %c0_i32 : i32, i32, i32
  }
  func.func @transform_2(%arg0: i32, %arg1: i32) -> (i32, i32) {
    %c0_i32 = arith.constant 0 : i32
    %c0_i32_0 = arith.constant 0 : i32
    %c0_i32_1 = arith.constant 0 : i32
    return %c0_i32, %c0_i32_0 : i32, i32
  }
  func.func @transform_3(%arg0: i32, %arg1: i32) -> (i32, i32) {
    %c0_i32 = arith.constant 0 : i32
    %c0_i32_0 = arith.constant 0 : i32
    %c0_i32_1 = arith.constant 0 : i32
    return %c0_i32, %c0_i32_0 : i32, i32
  }
  func.func @transform_4(%arg0: i32, %arg1: i32) -> (i32, i32) {
    %c0_i32 = arith.constant 0 : i32
    %c0_i32_0 = arith.constant 0 : i32
    %c0_i32_1 = arith.constant 0 : i32
    return %c0_i32, %c0_i32_0 : i32, i32
  }
  func.func @transform_5(%arg0: i32, %arg1: i32) -> (i32, i32) {
    %c0_i32 = arith.constant 0 : i32
    %c0_i32_0 = arith.constant 0 : i32
    %c0_i32_1 = arith.constant 0 : i32
    return %c0_i32, %c0_i32_0 : i32, i32
  }
  func.func @transform_6(%arg0: i32, %arg1: i32) -> (i32, i32, i32) {
    %c0_i32 = arith.constant 0 : i32
    %c0_i32_0 = arith.constant 0 : i32
    return %arg0, %arg1, %c0_i32 : i32, i32, i32
  }
}

module attributes {stable_mosaic.version = 11 : i64} {
  func.func @_cross_attn_kernel(%arg0: i32, %arg1: i32, %arg2: memref<1x16x32xbf16, #tpu.memory_space<vmem>>, %arg3: memref<1x4x16x32xbf16, #tpu.memory_space<vmem>>, %arg4: memref<32x32xbf16, #tpu.memory_space<vmem>>, %arg5: memref<1x32xf32, #tpu.memory_space<vmem>>, %arg6: memref<32x32xbf16, #tpu.memory_space<vmem>>, %arg7: memref<1x32xf32, #tpu.memory_space<vmem>>, %arg8: memref<32x32xbf16, #tpu.memory_space<vmem>>, %arg9: memref<1x32xf32, #tpu.memory_space<vmem>>, %arg10: memref<32x32xbf16, #tpu.memory_space<vmem>>, %arg11: memref<1x32xf32, #tpu.memory_space<vmem>>, %arg12: memref<32x4xbf16, #tpu.memory_space<vmem>>, %arg13: memref<4x32xbf16, #tpu.memory_space<vmem>>, %arg14: memref<1x16x32xf32, #tpu.memory_space<vmem>>) attributes {dimension_semantics = [#tpu.dimension_semantics<parallel>, #tpu.dimension_semantics<parallel>], iteration_bounds = array<i64: 2, 1>, scalar_prefetch = 0 : i64, scratch_operands = 0 : i64, tpu.core_type = #tpu.core_type<tc>, window_params = [{transform_indices = @transform_0, window_bounds = array<i64: 1, 16, 32>}, {transform_indices = @transform_1, window_bounds = array<i64: 1, 4, 16, 32>}, {pipeline_mode = #tpu.pipeline_mode<synchronous>, transform_indices = @transform_2, window_bounds = array<i64: 32, 32>}, {pipeline_mode = #tpu.pipeline_mode<synchronous>, transform_indices = @transform_3, window_bounds = array<i64: 1, 32>}, {pipeline_mode = #tpu.pipeline_mode<synchronous>, transform_indices = @transform_4, window_bounds = array<i64: 32, 32>}, {pipeline_mode = #tpu.pipeline_mode<synchronous>, transform_indices = @transform_5, window_bounds = array<i64: 1, 32>}, {pipeline_mode = #tpu.pipeline_mode<synchronous>, transform_indices = @transform_6, window_bounds = array<i64: 32, 32>}, {pipeline_mode = #tpu.pipeline_mode<synchronous>, transform_indices = @transform_7, window_bounds = array<i64: 1, 32>}, {pipeline_mode = #tpu.pipeline_mode<synchronous>, transform_indices = @transform_8, window_bounds = array<i64: 32, 32>}, {pipeline_mode = #tpu.pipeline_mode<synchronous>, transform_indices = @transform_9, window_bounds = array<i64: 1, 32>}, {pipeline_mode = #tpu.pipeline_mode<synchronous>, transform_indices = @transform_10, window_bounds = array<i64: 32, 4>}, {pipeline_mode = #tpu.pipeline_mode<synchronous>, transform_indices = @transform_11, window_bounds = array<i64: 4, 32>}, {transform_indices = @transform_12, window_bounds = array<i64: 1, 16, 32>}]} {
    %c0 = arith.constant 0 : index
    %c0_0 = arith.constant 0 : index
    %c0_1 = arith.constant 0 : index
    %0 = vector.load %arg2[%c0, %c0_0, %c0_1] : memref<1x16x32xbf16, #tpu.memory_space<vmem>>, vector<1x16x32xbf16>
    %1 = vector.shape_cast %0 : vector<1x16x32xbf16> to vector<16x32xbf16>
    %c0_2 = arith.constant 0 : index
    %c0_3 = arith.constant 0 : index
    %2 = vector.load %arg4[%c0_2, %c0_3] : memref<32x32xbf16, #tpu.memory_space<vmem>>, vector<32x32xbf16>
    %cst = arith.constant dense<0.000000e+00> : vector<16x32xf32>
    %3 = tpu.matmul %1, %2, %cst {dimension_numbers = #tpu.dot_dimension_numbers<[1], [0], [0], [1], [0, 0, 1, 1], [], []>} : vector<16x32xbf16>, vector<32x32xbf16>, vector<16x32xf32> -> vector<16x32xf32>
    %c0_4 = arith.constant 0 : index
    %c0_5 = arith.constant 0 : index
    %4 = vector.load %arg5[%c0_4, %c0_5] : memref<1x32xf32, #tpu.memory_space<vmem>>, vector<1x32xf32>
    %5 = vector.broadcast %4 : vector<1x32xf32> to vector<16x32xf32>
    %6 = arith.addf %3, %5 : vector<16x32xf32>
    %cst_6 = arith.constant 0.353553385 : f32
    %7 = vector.broadcast %cst_6 : f32 to vector<16x32xf32>
    %8 = arith.mulf %6, %7 : vector<16x32xf32>
    %c0_7 = arith.constant 0 : index
    %c0_8 = arith.constant 0 : index
    %9 = vector.load %arg12[%c0_7, %c0_8] : memref<32x4xbf16, #tpu.memory_space<vmem>>, vector<32x4xbf16>
    %c0_9 = arith.constant 0 : index
    %c0_10 = arith.constant 0 : index
    %10 = vector.load %arg13[%c0_9, %c0_10] : memref<4x32xbf16, #tpu.memory_space<vmem>>, vector<4x32xbf16>
    %c0_11 = arith.constant 0 : index
    %c0_12 = arith.constant 0 : index
    %c0_13 = arith.constant 0 : index
    %c0_14 = arith.constant 0 : index
    %11 = vector.load %arg3[%c0_11, %c0_12, %c0_13, %c0_14] : memref<1x4x16x32xbf16, #tpu.memory_space<vmem>>, vector<1x1x16x32xbf16>
    %12 = vector.shape_cast %11 : vector<1x1x16x32xbf16> to vector<16x32xbf16>
    %c0_15 = arith.constant 0 : index
    %c0_16 = arith.constant 0 : index
    %13 = vector.load %arg6[%c0_15, %c0_16] : memref<32x32xbf16, #tpu.memory_space<vmem>>, vector<32x32xbf16>
    %cst_17 = arith.constant dense<0.000000e+00> : vector<16x32xf32>
    %14 = tpu.matmul %12, %13, %cst_17 {dimension_numbers = #tpu.dot_dimension_numbers<[1], [0], [0], [1], [0, 0, 1, 1], [], []>} : vector<16x32xbf16>, vector<32x32xbf16>, vector<16x32xf32> -> vector<16x32xf32>
    %c0_18 = arith.constant 0 : index
    %c0_19 = arith.constant 0 : index
    %15 = vector.load %arg7[%c0_18, %c0_19] : memref<1x32xf32, #tpu.memory_space<vmem>>, vector<1x32xf32>
    %16 = vector.broadcast %15 : vector<1x32xf32> to vector<16x32xf32>
    %17 = arith.addf %14, %16 : vector<16x32xf32>
    %c0_20 = arith.constant 0 : index
    %c0_21 = arith.constant 0 : index
    %18 = vector.load %arg8[%c0_20, %c0_21] : memref<32x32xbf16, #tpu.memory_space<vmem>>, vector<32x32xbf16>
    %cst_22 = arith.constant dense<0.000000e+00> : vector<16x32xf32>
    %19 = tpu.matmul %12, %18, %cst_22 {dimension_numbers = #tpu.dot_dimension_numbers<[1], [0], [0], [1], [0, 0, 1, 1], [], []>} : vector<16x32xbf16>, vector<32x32xbf16>, vector<16x32xf32> -> vector<16x32xf32>
    %c0_23 = arith.constant 0 : index
    %c0_24 = arith.constant 0 : index
    %20 = vector.load %arg9[%c0_23, %c0_24] : memref<1x32xf32, #tpu.memory_space<vmem>>, vector<1x32xf32>
    %21 = vector.broadcast %20 : vector<1x32xf32> to vector<16x32xf32>
    %22 = arith.addf %19, %21 : vector<16x32xf32>
    %23 = arith.mulf %8, %17 : vector<16x32xf32>
    %24 = arith.truncf %23 : vector<16x32xf32> to vector<16x32xbf16>
    %cst_25 = arith.constant dense<0.000000e+00> : vector<16x4xf32>
    %25 = tpu.matmul %24, %9, %cst_25 {dimension_numbers = #tpu.dot_dimension_numbers<[1], [0], [0], [1], [0, 0, 1, 1], [], []>} : vector<16x32xbf16>, vector<32x4xbf16>, vector<16x4xf32> -> vector<16x4xf32>
    %c0_26 = arith.constant 0 : index
    %c1 = arith.constant 1 : index
    %c0_27 = arith.constant 0 : index
    %c0_28 = arith.constant 0 : index
    %26 = vector.load %arg3[%c0_26, %c1, %c0_27, %c0_28] : memref<1x4x16x32xbf16, #tpu.memory_space<vmem>>, vector<1x1x16x32xbf16>
    %27 = vector.shape_cast %26 : vector<1x1x16x32xbf16> to vector<16x32xbf16>
    %c0_29 = arith.constant 0 : index
    %c0_30 = arith.constant 0 : index
    %28 = vector.load %arg6[%c0_29, %c0_30] : memref<32x32xbf16, #tpu.memory_space<vmem>>, vector<32x32xbf16>
    %cst_31 = arith.constant dense<0.000000e+00> : vector<16x32xf32>
    %29 = tpu.matmul %27, %28, %cst_31 {dimension_numbers = #tpu.dot_dimension_numbers<[1], [0], [0], [1], [0, 0, 1, 1], [], []>} : vector<16x32xbf16>, vector<32x32xbf16>, vector<16x32xf32> -> vector<16x32xf32>
    %c0_32 = arith.constant 0 : index
    %c0_33 = arith.constant 0 : index
    %30 = vector.load %arg7[%c0_32, %c0_33] : memref<1x32xf32, #tpu.memory_space<vmem>>, vector<1x32xf32>
    %31 = vector.broadcast %30 : vector<1x32xf32> to vector<16x32xf32>
    %32 = arith.addf %29, %31 : vector<16x32xf32>
    %c0_34 = arith.constant 0 : index
    %c0_35 = arith.constant 0 : index
    %33 = vector.load %arg8[%c0_34, %c0_35] : memref<32x32xbf16, #tpu.memory_space<vmem>>, vector<32x32xbf16>
    %cst_36 = arith.constant dense<0.000000e+00> : vector<16x32xf32>
    %34 = tpu.matmul %27, %33, %cst_36 {dimension_numbers = #tpu.dot_dimension_numbers<[1], [0], [0], [1], [0, 0, 1, 1], [], []>} : vector<16x32xbf16>, vector<32x32xbf16>, vector<16x32xf32> -> vector<16x32xf32>
    %c0_37 = arith.constant 0 : index
    %c0_38 = arith.constant 0 : index
    %35 = vector.load %arg9[%c0_37, %c0_38] : memref<1x32xf32, #tpu.memory_space<vmem>>, vector<1x32xf32>
    %36 = vector.broadcast %35 : vector<1x32xf32> to vector<16x32xf32>
    %37 = arith.addf %34, %36 : vector<16x32xf32>
    %38 = arith.mulf %8, %32 : vector<16x32xf32>
    %39 = arith.truncf %38 : vector<16x32xf32> to vector<16x32xbf16>
    %cst_39 = arith.constant dense<0.000000e+00> : vector<16x4xf32>
    %40 = tpu.matmul %39, %9, %cst_39 {dimension_numbers = #tpu.dot_dimension_numbers<[1], [0], [0], [1], [0, 0, 1, 1], [], []>} : vector<16x32xbf16>, vector<32x4xbf16>, vector<16x4xf32> -> vector<16x4xf32>
    %c0_40 = arith.constant 0 : index
    %c2 = arith.constant 2 : index
    %c0_41 = arith.constant 0 : index
    %c0_42 = arith.constant 0 : index
    %41 = vector.load %arg3[%c0_40, %c2, %c0_41, %c0_42] : memref<1x4x16x32xbf16, #tpu.memory_space<vmem>>, vector<1x1x16x32xbf16>
    %42 = vector.shape_cast %41 : vector<1x1x16x32xbf16> to vector<16x32xbf16>
    %c0_43 = arith.constant 0 : index
    %c0_44 = arith.constant 0 : index
    %43 = vector.load %arg6[%c0_43, %c0_44] : memref<32x32xbf16, #tpu.memory_space<vmem>>, vector<32x32xbf16>
    %cst_45 = arith.constant dense<0.000000e+00> : vector<16x32xf32>
    %44 = tpu.matmul %42, %43, %cst_45 {dimension_numbers = #tpu.dot_dimension_numbers<[1], [0], [0], [1], [0, 0, 1, 1], [], []>} : vector<16x32xbf16>, vector<32x32xbf16>, vector<16x32xf32> -> vector<16x32xf32>
    %c0_46 = arith.constant 0 : index
    %c0_47 = arith.constant 0 : index
    %45 = vector.load %arg7[%c0_46, %c0_47] : memref<1x32xf32, #tpu.memory_space<vmem>>, vector<1x32xf32>
    %46 = vector.broadcast %45 : vector<1x32xf32> to vector<16x32xf32>
    %47 = arith.addf %44, %46 : vector<16x32xf32>
    %c0_48 = arith.constant 0 : index
    %c0_49 = arith.constant 0 : index
    %48 = vector.load %arg8[%c0_48, %c0_49] : memref<32x32xbf16, #tpu.memory_space<vmem>>, vector<32x32xbf16>
    %cst_50 = arith.constant dense<0.000000e+00> : vector<16x32xf32>
    %49 = tpu.matmul %42, %48, %cst_50 {dimension_numbers = #tpu.dot_dimension_numbers<[1], [0], [0], [1], [0, 0, 1, 1], [], []>} : vector<16x32xbf16>, vector<32x32xbf16>, vector<16x32xf32> -> vector<16x32xf32>
    %c0_51 = arith.constant 0 : index
    %c0_52 = arith.constant 0 : index
    %50 = vector.load %arg9[%c0_51, %c0_52] : memref<1x32xf32, #tpu.memory_space<vmem>>, vector<1x32xf32>
    %51 = vector.broadcast %50 : vector<1x32xf32> to vector<16x32xf32>
    %52 = arith.addf %49, %51 : vector<16x32xf32>
    %53 = arith.mulf %8, %47 : vector<16x32xf32>
    %54 = arith.truncf %53 : vector<16x32xf32> to vector<16x32xbf16>
    %cst_53 = arith.constant dense<0.000000e+00> : vector<16x4xf32>
    %55 = tpu.matmul %54, %9, %cst_53 {dimension_numbers = #tpu.dot_dimension_numbers<[1], [0], [0], [1], [0, 0, 1, 1], [], []>} : vector<16x32xbf16>, vector<32x4xbf16>, vector<16x4xf32> -> vector<16x4xf32>
    %c0_54 = arith.constant 0 : index
    %c3 = arith.constant 3 : index
    %c0_55 = arith.constant 0 : index
    %c0_56 = arith.constant 0 : index
    %56 = vector.load %arg3[%c0_54, %c3, %c0_55, %c0_56] : memref<1x4x16x32xbf16, #tpu.memory_space<vmem>>, vector<1x1x16x32xbf16>
    %57 = vector.shape_cast %56 : vector<1x1x16x32xbf16> to vector<16x32xbf16>
    %c0_57 = arith.constant 0 : index
    %c0_58 = arith.constant 0 : index
    %58 = vector.load %arg6[%c0_57, %c0_58] : memref<32x32xbf16, #tpu.memory_space<vmem>>, vector<32x32xbf16>
    %cst_59 = arith.constant dense<0.000000e+00> : vector<16x32xf32>
    %59 = tpu.matmul %57, %58, %cst_59 {dimension_numbers = #tpu.dot_dimension_numbers<[1], [0], [0], [1], [0, 0, 1, 1], [], []>} : vector<16x32xbf16>, vector<32x32xbf16>, vector<16x32xf32> -> vector<16x32xf32>
    %c0_60 = arith.constant 0 : index
    %c0_61 = arith.constant 0 : index
    %60 = vector.load %arg7[%c0_60, %c0_61] : memref<1x32xf32, #tpu.memory_space<vmem>>, vector<1x32xf32>
    %61 = vector.broadcast %60 : vector<1x32xf32> to vector<16x32xf32>
    %62 = arith.addf %59, %61 : vector<16x32xf32>
    %c0_62 = arith.constant 0 : index
    %c0_63 = arith.constant 0 : index
    %63 = vector.load %arg8[%c0_62, %c0_63] : memref<32x32xbf16, #tpu.memory_space<vmem>>, vector<32x32xbf16>
    %cst_64 = arith.constant dense<0.000000e+00> : vector<16x32xf32>
    %64 = tpu.matmul %57, %63, %cst_64 {dimension_numbers = #tpu.dot_dimension_numbers<[1], [0], [0], [1], [0, 0, 1, 1], [], []>} : vector<16x32xbf16>, vector<32x32xbf16>, vector<16x32xf32> -> vector<16x32xf32>
    %c0_65 = arith.constant 0 : index
    %c0_66 = arith.constant 0 : index
    %65 = vector.load %arg9[%c0_65, %c0_66] : memref<1x32xf32, #tpu.memory_space<vmem>>, vector<1x32xf32>
    %66 = vector.broadcast %65 : vector<1x32xf32> to vector<16x32xf32>
    %67 = arith.addf %64, %66 : vector<16x32xf32>
    %68 = arith.mulf %8, %62 : vector<16x32xf32>
    %69 = arith.truncf %68 : vector<16x32xf32> to vector<16x32xbf16>
    %cst_67 = arith.constant dense<0.000000e+00> : vector<16x4xf32>
    %70 = tpu.matmul %69, %9, %cst_67 {dimension_numbers = #tpu.dot_dimension_numbers<[1], [0], [0], [1], [0, 0, 1, 1], [], []>} : vector<16x32xbf16>, vector<32x4xbf16>, vector<16x4xf32> -> vector<16x4xf32>
    %71 = arith.maximumf %25, %40 : vector<16x4xf32>
    %72 = arith.maximumf %71, %55 : vector<16x4xf32>
    %73 = arith.maximumf %72, %70 : vector<16x4xf32>
    %74 = arith.subf %25, %73 : vector<16x4xf32>
    %75 = math.exp %74 : vector<16x4xf32>
    %76 = arith.subf %40, %73 : vector<16x4xf32>
    %77 = math.exp %76 : vector<16x4xf32>
    %78 = arith.subf %55, %73 : vector<16x4xf32>
    %79 = math.exp %78 : vector<16x4xf32>
    %80 = arith.subf %70, %73 : vector<16x4xf32>
    %81 = math.exp %80 : vector<16x4xf32>
    %82 = arith.addf %75, %77 : vector<16x4xf32>
    %83 = arith.addf %82, %79 : vector<16x4xf32>
    %84 = arith.addf %83, %81 : vector<16x4xf32>
    %85 = tpu.reciprocal %84 {approx = true} : vector<16x4xf32> -> vector<16x4xf32>
    %cst_68 = arith.constant 0.000000e+00 : f32
    %86 = vector.broadcast %cst_68 : f32 to vector<16x32xf32>
    %87 = arith.mulf %75, %85 : vector<16x4xf32>
    %88 = arith.truncf %87 : vector<16x4xf32> to vector<16x4xbf16>
    %cst_69 = arith.constant dense<0.000000e+00> : vector<16x32xf32>
    %89 = tpu.matmul %88, %10, %cst_69 {dimension_numbers = #tpu.dot_dimension_numbers<[1], [0], [0], [1], [0, 0, 1, 1], [], []>} : vector<16x4xbf16>, vector<4x32xbf16>, vector<16x32xf32> -> vector<16x32xf32>
    %90 = arith.mulf %89, %22 : vector<16x32xf32>
    %91 = arith.addf %86, %90 : vector<16x32xf32>
    %92 = arith.mulf %77, %85 : vector<16x4xf32>
    %93 = arith.truncf %92 : vector<16x4xf32> to vector<16x4xbf16>
    %cst_70 = arith.constant dense<0.000000e+00> : vector<16x32xf32>
    %94 = tpu.matmul %93, %10, %cst_70 {dimension_numbers = #tpu.dot_dimension_numbers<[1], [0], [0], [1], [0, 0, 1, 1], [], []>} : vector<16x4xbf16>, vector<4x32xbf16>, vector<16x32xf32> -> vector<16x32xf32>
    %95 = arith.mulf %94, %37 : vector<16x32xf32>
    %96 = arith.addf %91, %95 : vector<16x32xf32>
    %97 = arith.mulf %79, %85 : vector<16x4xf32>
    %98 = arith.truncf %97 : vector<16x4xf32> to vector<16x4xbf16>
    %cst_71 = arith.constant dense<0.000000e+00> : vector<16x32xf32>
    %99 = tpu.matmul %98, %10, %cst_71 {dimension_numbers = #tpu.dot_dimension_numbers<[1], [0], [0], [1], [0, 0, 1, 1], [], []>} : vector<16x4xbf16>, vector<4x32xbf16>, vector<16x32xf32> -> vector<16x32xf32>
    %100 = arith.mulf %99, %52 : vector<16x32xf32>
    %101 = arith.addf %96, %100 : vector<16x32xf32>
    %102 = arith.mulf %81, %85 : vector<16x4xf32>
    %103 = arith.truncf %102 : vector<16x4xf32> to vector<16x4xbf16>
    %cst_72 = arith.constant dense<0.000000e+00> : vector<16x32xf32>
    %104 = tpu.matmul %103, %10, %cst_72 {dimension_numbers = #tpu.dot_dimension_numbers<[1], [0], [0], [1], [0, 0, 1, 1], [], []>} : vector<16x4xbf16>, vector<4x32xbf16>, vector<16x32xf32> -> vector<16x32xf32>
    %105 = arith.mulf %104, %67 : vector<16x32xf32>
    %106 = arith.addf %101, %105 : vector<16x32xf32>
    %107 = arith.truncf %106 : vector<16x32xf32> to vector<16x32xbf16>
    %c0_73 = arith.constant 0 : index
    %c0_74 = arith.constant 0 : index
    %108 = vector.load %arg10[%c0_73, %c0_74] : memref<32x32xbf16, #tpu.memory_space<vmem>>, vector<32x32xbf16>
    %cst_75 = arith.constant dense<0.000000e+00> : vector<16x32xf32>
    %109 = tpu.matmul %107, %108, %cst_75 {dimension_numbers = #tpu.dot_dimension_numbers<[1], [0], [0], [1], [0, 0, 1, 1], [], []>} : vector<16x32xbf16>, vector<32x32xbf16>, vector<16x32xf32> -> vector<16x32xf32>
    %c0_76 = arith.constant 0 : index
    %c0_77 = arith.constant 0 : index
    %110 = vector.load %arg11[%c0_76, %c0_77] : memref<1x32xf32, #tpu.memory_space<vmem>>, vector<1x32xf32>
    %111 = vector.broadcast %110 : vector<1x32xf32> to vector<16x32xf32>
    %112 = arith.addf %109, %111 : vector<16x32xf32>
    %c0_78 = arith.constant 0 : index
    %c0_79 = arith.constant 0 : index
    %c0_80 = arith.constant 0 : index
    %113 = vector.load %arg14[%c0_78, %c0_79, %c0_80] : memref<1x16x32xf32, #tpu.memory_space<vmem>>, vector<1x16x32xf32>
    %114 = vector.shape_cast %113 : vector<1x16x32xf32> to vector<16x32xf32>
    %115 = vector.shape_cast %112 : vector<16x32xf32> to vector<1x16x32xf32>
    tpu.vector_store %arg14[%c0_78, %c0_79, %c0_80], %115 {strides = array<i32>} : memref<1x16x32xf32, #tpu.memory_space<vmem>>, vector<1x16x32xf32>,
    return
  }
  func.func @transform_0(%arg0: i32, %arg1: i32) -> (i32, i32, i32) {
    %c0_i32 = arith.constant 0 : i32
    %c0_i32_0 = arith.constant 0 : i32
    return %arg0, %arg1, %c0_i32 : i32, i32, i32
  }
  func.func @transform_1(%arg0: i32, %arg1: i32) -> (i32, i32, i32, i32) {
    %c0_i32 = arith.constant 0 : i32
    %c0_i32_0 = arith.constant 0 : i32
    %c0_i32_1 = arith.constant 0 : i32
    return %arg0, %c0_i32, %arg1, %c0_i32_0 : i32, i32, i32, i32
  }
  func.func @transform_2(%arg0: i32, %arg1: i32) -> (i32, i32) {
    %c0_i32 = arith.constant 0 : i32
    %c0_i32_0 = arith.constant 0 : i32
    %c0_i32_1 = arith.constant 0 : i32
    return %c0_i32, %c0_i32_0 : i32, i32
  }
  func.func @transform_3(%arg0: i32, %arg1: i32) -> (i32, i32) {
    %c0_i32 = arith.constant 0 : i32
    %c0_i32_0 = arith.constant 0 : i32
    %c0_i32_1 = arith.constant 0 : i32
    return %c0_i32, %c0_i32_0 : i32, i32
  }
  func.func @transform_4(%arg0: i32, %arg1: i32) -> (i32, i32) {
    %c0_i32 = arith.constant 0 : i32
    %c0_i32_0 = arith.constant 0 : i32
    %c0_i32_1 = arith.constant 0 : i32
    return %c0_i32, %c0_i32_0 : i32, i32
  }
  func.func @transform_5(%arg0: i32, %arg1: i32) -> (i32, i32) {
    %c0_i32 = arith.constant 0 : i32
    %c0_i32_0 = arith.constant 0 : i32
    %c0_i32_1 = arith.constant 0 : i32
    return %c0_i32, %c0_i32_0 : i32, i32
  }
  func.func @transform_6(%arg0: i32, %arg1: i32) -> (i32, i32) {
    %c0_i32 = arith.constant 0 : i32
    %c0_i32_0 = arith.constant 0 : i32
    %c0_i32_1 = arith.constant 0 : i32
    return %c0_i32, %c0_i32_0 : i32, i32
  }
  func.func @transform_7(%arg0: i32, %arg1: i32) -> (i32, i32) {
    %c0_i32 = arith.constant 0 : i32
    %c0_i32_0 = arith.constant 0 : i32
    %c0_i32_1 = arith.constant 0 : i32
    return %c0_i32, %c0_i32_0 : i32, i32
  }
  func.func @transform_8(%arg0: i32, %arg1: i32) -> (i32, i32) {
    %c0_i32 = arith.constant 0 : i32
    %c0_i32_0 = arith.constant 0 : i32
    %c0_i32_1 = arith.constant 0 : i32
    return %c0_i32, %c0_i32_0 : i32, i32
  }
  func.func @transform_9(%arg0: i32, %arg1: i32) -> (i32, i32) {
    %c0_i32 = arith.constant 0 : i32
    %c0_i32_0 = arith.constant 0 : i32
    %c0_i32_1 = arith.constant 0 : i32
    return %c0_i32, %c0_i32_0 : i32, i32
  }
  func.func @transform_10(%arg0: i32, %arg1: i32) -> (i32, i32) {
    %c0_i32 = arith.constant 0 : i32
    %c0_i32_0 = arith.constant 0 : i32
    %c0_i32_1 = arith.constant 0 : i32
    return %c0_i32, %c0_i32_0 : i32, i32
  }
  func.func @transform_11(%arg0: i32, %arg1: i32) -> (i32, i32) {
    %c0_i32 = arith.constant 0 : i32
    %c0_i32_0 = arith.constant 0 : i32
    %c0_i32_1 = arith.constant 0 : i32
    return %c0_i32, %c0_i32_0 : i32, i32
  }
  func.func @transform_12(%arg0: i32, %arg1: i32) -> (i32, i32, i32) {
    %c0_i32 = arith.constant 0 : i32
    %c0_i32_0 = arith.constant 0 : i32
    return %arg0, %arg1, %c0_i32 : i32, i32, i32
  }
}

</mosaic_0001>

<llo_original>
// kernel: neg.1
$region0: #{neg.1}
  #allocation0 [shape = 's32[1]{0}', space=sflag, size = 0x4, scoped, tag = 'scoped memory for neg.1']
  %s0 = inlined_call_operand.vmem [shape: f32[2,16,16], index: 0, kind: input, shape index: {}]
  %s1 = inlined_call_operand.vmem [shape: f32[2,16,16], index: 1, kind: output, shape index: {}]
  %v2 = vld [vmem:[%s0] sm:$0xff]
  %3 = xla_tuple %v2
  %4 = xla_tuple %3
  %v5 = vxor.u32 %v2, 2147483648
  %6 = xla_tuple %v5
  %7 = vst [vmem:[%s1] sm:$0xff] %v5
  %s8 = scalar_lea.vmem %s0, 16
  %v9 = vld [vmem:[%s8] sm:$0xff]
  %10 = xla_tuple %v9
  %11 = xla_tuple %10
  %v12 = vxor.u32 %v9, 2147483648
  %13 = xla_tuple %v12
  %s14 = scalar_lea.vmem %s1, 16
  %15 = vst [vmem:[%s14] sm:$0xff] %v12
  %s16 = scalar_lea.vmem %s0, 8
  %v17 = vld [vmem:[%s16] sm:$0xff]
  %18 = xla_tuple %v17
  %19 = xla_tuple %18
  %v20 = vxor.u32 %v17, 2147483648
  %21 = xla_tuple %v20
  %s22 = scalar_lea.vmem %s1, 8
  %23 = vst [vmem:[%s22] sm:$0xff] %v20
  %s24 = scalar_lea.vmem %s0, 24
  %v25 = vld [vmem:[%s24] sm:$0xff]
  %26 = xla_tuple %v25
  %27 = xla_tuple %26
  %v28 = vxor.u32 %v25, 2147483648
  %29 = xla_tuple %v28
  %s30 = scalar_lea.vmem %s1, 24
  %31 = vst [vmem:[%s30] sm:$0xff] %v28

// kernel: _forward_padded.3
$region0: #{_forward_padded.3}
  #allocation0 [shape = 'u32[]', space=smem, size = 0x4, offset = 0x4, fixed_abs, tag = 'smem constant byte address 0x4 - core index']
  #allocation1 [shape = 'u32[144,128]{1,0:T(1,128)}', space=vmem, size = 0x12000, scoped, tag = 'internal scratch']
  %s0 = inlined_call_operand.vmem [shape: f32[2,16,8], index: 0, kind: input, shape index: {}]
  %s1 = inlined_call_operand.vmem [shape: f32[2,8,16], index: 1, kind: input, shape index: {}]
  %s2 = inlined_call_operand.vmem [shape: f32[2,16,16], index: 2, kind: output, shape index: {}]
  %s3 = sld [smem:[#allocation0]]
  $region41: #{_forward_padded.3} parent=0
    _
  %s5 = ssub.s32 1, %s3
  %s6 = scalar_select 0, %s5, %s3
  loop: start=0, step=1, limit=4
  $region2: #{_forward_padded.3} parent=0 // loop_pre_header
    _
  $region3: #{_forward_padded.3} parent=0 // loop_header
    %s8 = sphi 0, %s12
    %p9 = scmp.ge.s32.totalorder %s8, 4
    %s15 = sphi 0, %s34
    %s16 = sphi 0, %s30
    %s17 = sphi 0, %s26
    %s18 = sphi 0, %s15
    %s19 = sphi 0, %s16
    %s20 = sphi 0, %s17
    %s21 = sphi 0, %s18
    %s22 = sphi 0, %s19
    %s23 = sphi 0, %s20
    %s39 = sphi 0, %s41
    %s42 = sphi 0, %s39
    %s43 = sphi 0, %s42
    %s59 = sphi 0, %s43
    %s67 = sphi 0, %s69
    %s70 = sphi 0, %s67
    %s71 = sphi 0, %s70
    %s87 = sphi 0, %s71
    %s97 = sphi 0, %s99
    %s100 = sphi 0, %s97
    %s101 = sphi 0, %s100
    %s117 = sphi 0, %s101
  $region4: #{_forward_padded.3} parent=0 // loop_header_branch
    %11 = sbr.rel (%p9) target = $region8
  $region5: #{_forward_padded.3} parent=0 // loop_body
    %s13 = ssub.s32 %s8, 1
    %s14 = ssub.s32 %s8, 2
    %s24 = sadd.s32 1, %s17
    %p25 = scmp.ge.s32.totalorder %s24, 1
    %s26 = scalar_select %p25, 0, %s24
    %s27 = sadd.s32 1, %s16
    %s28 = scalar_select %p25, %s27, %s16
    %p29 = scmp.ge.s32.totalorder %s28, 1
    %s30 = scalar_select %p29, 0, %s28
    %s31 = sadd.s32 1, %s15
    %s32 = scalar_select %p29, %s31, %s15
    %p33 = scmp.ge.s32.totalorder %s32, 2
    %s34 = scalar_select %p33, 0, %s32
    %s35 = ssub.s32 %s15, %s34
    %s36 = ssub.s32 %s16, %s30
    %s37 = sor.u32 %s35, %s36
    %p38 = scmp.eq.s32.totalorder %s37, 0
    %s40 = sadd.s32 %s39, 1
    %s41 = scalar_select %p38, %s39, %s40
    %p44 = pneg %p38
    %p45 = scmp.eq.s32.totalorder %s8, 1
    %p46 = por %p44, %p45
    %p47 = scmp.ne.s32.totalorder %s39, %s42
    %p48 = scmp.eq.s32.totalorder %s8, 0
    %p49 = por %p47, %p48
    %p50 = scmp.ne.s32.totalorder %s39, %s42
    %p51 = scmp.eq.s32.totalorder %s13, 1
    %p52 = por %p50, %p51
    %p53 = scmp.ne.s32.totalorder %s42, %s43
    %p54 = scmp.eq.s32.totalorder %s13, 0
    %p55 = por %p53, %p54
    %p56 = scmp.ne.s32.totalorder %s42, %s43
    %p57 = scmp.eq.s32.totalorder %s14, 1
    %p58 = por %p56, %p57
    %p60 = scmp.ne.s32.totalorder %s43, %s59
    %p61 = scmp.eq.s32.totalorder %s14, 0
    %p62 = por %p60, %p61
    %s63 = ssub.s32 %s15, %s34
    %s64 = ssub.s32 %s17, %s26
    %s65 = sor.u32 %s63, %s64
    %p66 = scmp.eq.s32.totalorder %s65, 0
    %s68 = sadd.s32 %s67, 1
    %s69 = scalar_select %p66, %s67, %s68
    %p72 = pneg %p66
    %p73 = scmp.eq.s32.totalorder %s8, 1
    %p74 = por %p72, %p73
    %p75 = scmp.ne.s32.totalorder %s67, %s70
    %p76 = scmp.eq.s32.totalorder %s8, 0
    %p77 = por %p75, %p76
    %p78 = scmp.ne.s32.totalorder %s67, %s70
    %p79 = scmp.eq.s32.totalorder %s13, 1
    %p80 = por %p78, %p79
    %p81 = scmp.ne.s32.totalorder %s70, %s71
    %p82 = scmp.eq.s32.totalorder %s13, 0
    %p83 = por %p81, %p82
    %p84 = scmp.ne.s32.totalorder %s70, %s71
    %p85 = scmp.eq.s32.totalorder %s14, 1
    %p86 = por %p84, %p85
    %p88 = scmp.ne.s32.totalorder %s71, %s87
    %p89 = scmp.eq.s32.totalorder %s14, 0
    %p90 = por %p88, %p89
    %s91 = ssub.s32 %s15, %s34
    %s92 = ssub.s32 %s16, %s30
    %s93 = sor.u32 %s91, %s92
    %s94 = ssub.s32 %s17, %s26
    %s95 = sor.u32 %s93, %s94
    %p96 = scmp.eq.s32.totalorder %s95, 0
    %s98 = sadd.s32 %s97, 1
    %s99 = scalar_select %p96, %s97, %s98
    %p102 = pneg %p96
    %p103 = scmp.eq.s32.totalorder %s8, 1
    %p104 = por %p102, %p103
    %p105 = scmp.ne.s32.totalorder %s97, %s100
    %p106 = scmp.eq.s32.totalorder %s8, 0
    %p107 = por %p105, %p106
    %p108 = scmp.ne.s32.totalorder %s97, %s100
    %p109 = scmp.eq.s32.totalorder %s13, 1
    %p110 = por %p108, %p109
    %p111 = scmp.ne.s32.totalorder %s100, %s101
    %p112 = scmp.eq.s32.totalorder %s13, 0
    %p113 = por %p111, %p112
    %p114 = scmp.ne.s32.totalorder %s100, %s101
    %p115 = scmp.eq.s32.totalorder %s14, 1
    %p116 = por %p114, %p115
    %p118 = scmp.ne.s32.totalorder %s101, %s117
    %p119 = scmp.eq.s32.totalorder %s14, 0
    %p120 = por %p118, %p119
    %p121 = scmp.le.s32.totalorder 1, %s8
    %p122 = scmp.lt.s32.totalorder %s8, 3
    %p123 = pnand %p121, %p122
    %p124 = pneg %p123
    // Predicated region
    $region9: #{_forward_padded.3} parent=5 // pred_check
      _
    $region10: #{_forward_padded.3} parent=5 // pred_check_branch
      %126 = sbr.rel (%p123) target = $region12
    $region11: #{_forward_padded.3} parent=5 // pred_region
      %s127 = ssub.s32 %s8, 1
    $region12: #{_forward_padded.3} parent=5 // pred_fallthru
      _
    %p128 = scmp.lt.s32.totalorder %s8, 2
    // Predicated region
    $region13: #{_forward_padded.3} parent=5 // pred_check
      %p129 = pneg %p128
    $region14: #{_forward_padded.3} parent=5 // pred_check_branch
      %131 = sbr.rel (%p129) target = $region16
    $region15: #{_forward_padded.3} parent=5 // pred_region
      // Predicated region
      $region17: #{_forward_padded.3} parent=15 // pred_check
        %p132 = pneg %p49
      $region18: #{_forward_padded.3} parent=15 // pred_check_branch
        %134 = sbr.rel (%p132) target = $region20
      $region19: #{_forward_padded.3} parent=15 // pred_region
        %s135 = smul.u32 2, %s16
        %p136 = scmp.lt.s32.totalorder %s15, 1
        %s137 = scalar_select %p136, %s15, 1
        %p138 = scmp.lt.s32.totalorder %s135, 1
        %s139 = scalar_select %p138, %s135, 1
        %s140 = smul.addr %s137, 2
        %s141 = sadd.s32 %s139, %s140
        %s142 = smul.addr %s141, 8
        %s143 = scalar_lea.vmem %s0, %s142
        %s144 = smul.u32 2, %s16
      $region20: #{_forward_padded.3} parent=15 // pred_fallthru
        _
      // Predicated region
      $region21: #{_forward_padded.3} parent=15 // pred_check
        %p145 = pneg %p77
      $region22: #{_forward_padded.3} parent=15 // pred_check_branch
        %147 = sbr.rel (%p145) target = $region24
      $region23: #{_forward_padded.3} parent=15 // pred_region
        %p148 = scmp.lt.s32.totalorder %s15, 1
        %s149 = scalar_select %p148, %s15, 1
        %p150 = scmp.lt.s32.totalorder %s17, 0
        %s151 = scalar_select %p150, %s17, 0
        %s152 = sadd.s32 %s151, %s149
        %s153 = smul.addr %s152, 8
        %s154 = scalar_lea.vmem %s1, %s153
      $region24: #{_forward_padded.3} parent=15 // pred_fallthru
        _
    $region16: #{_forward_padded.3} parent=5 // pred_fallthru
      _
    %p155 = scmp.le.s32.totalorder 1, %s8
    %p156 = scmp.lt.s32.totalorder %s8, 3
    %p157 = pnand %p155, %p156
    %p158 = pneg %p157
    // Predicated region
    $region25: #{_forward_padded.3} parent=5 // pred_check
      _
    $region26: #{_forward_padded.3} parent=5 // pred_check_branch
      %160 = sbr.rel (%p157) target = $region28
    $region27: #{_forward_padded.3} parent=5 // pred_region
      %s161 = ssub.s32 %s8, 1
      %s162 = smul.u32 2, %s19
      %p163 = scmp.lt.s32.totalorder %s18, 1
      %s164 = scalar_select %p163, %s18, 1
      %p165 = scmp.lt.s32.totalorder %s162, 1
      %s166 = scalar_select %p165, %s162, 1
      %s167 = smul.addr %s164, 2
      %s168 = sadd.s32 %s166, %s167
      %s169 = smul.addr %s168, 8
      %s170 = scalar_lea.vmem %s0, %s169
      %p171 = pneg %p55
      %p172 = pneg %p52
      %p173 = scmp.lt.s32.totalorder %s18, 1
      %s174 = scalar_select %p173, %s18, 1
      %p175 = scmp.lt.s32.totalorder %s20, 0
      %s176 = scalar_select %p175, %s20, 0
      %s177 = sadd.s32 %s176, %s174
      %s178 = smul.addr %s177, 8
      %s179 = scalar_lea.vmem %s1, %s178
      %p180 = pneg %p83
      %p181 = pneg %p80
      %p182 = pneg %p113
      %p183 = pneg %p110
      %s184 = smul.u32 2, %s19
      %p185 = scmp.lt.s32.totalorder %s18, 1
      %s186 = scalar_select %p185, %s18, 1
      %p187 = scmp.lt.s32.totalorder %s184, 1
      %s188 = scalar_select %p187, %s184, 1
      %p189 = scmp.lt.s32.totalorder %s20, 0
      %s190 = scalar_select %p189, %s20, 0
      %s191 = sadd.s32 %s190, %s188
      %s192 = smul.addr %s186, 2
      %s193 = sadd.s32 %s191, %s192
      %s194 = smul.addr %s193, 8
      %s195 = scalar_lea.vmem %s2, %s194
      %s196 = smul.u32 2, %s19
      %p197 = scmp.lt.s32.totalorder %s18, 1
      %s198 = scalar_select %p197, %s18, 1
      %p199 = scmp.lt.s32.totalorder %s196, 1
      %s200 = scalar_select %p199, %s196, 1
      %s201 = smul.addr %s198, 2
      %s202 = sadd.s32 %s200, %s201
      %s203 = smul.addr %s202, 8
      %s204 = scalar_lea.vmem %s0, %s203
      %s205 = smul.u32 2, %s19
      %p206 = scmp.lt.s32.totalorder %s18, 1
      %s207 = scalar_select %p206, %s18, 1
      %p208 = scmp.lt.s32.totalorder %s20, 0
      %s209 = scalar_select %p208, %s20, 0
      %s210 = sadd.s32 %s209, %s207
      %s211 = smul.addr %s210, 8
      %s212 = scalar_lea.vmem %s1, %s211
      %s213 = smul.u32 2, %s19
      %p214 = scmp.lt.s32.totalorder %s18, 1
      %s215 = scalar_select %p214, %s18, 1
      %p216 = scmp.lt.s32.totalorder %s213, 1
      %s217 = scalar_select %p216, %s213, 1
      %p218 = scmp.lt.s32.totalorder %s20, 0
      %s219 = scalar_select %p218, %s20, 0
      %s220 = sadd.s32 %s219, %s217
      %s221 = smul.addr %s215, 2
      %s222 = sadd.s32 %s220, %s221
      %s223 = smul.addr %s222, 8
      %s224 = scalar_lea.vmem %s2, %s223
      %s225 = smul.u32 2, %s19
      %v226 = vld [vmem:[%s204] sm:$0xff]
      %v227 = vld [vmem:[%s204 + $0x8] sm:$0xff]
      %v228 = vld [vmem:[%s212] sm:$0xff]
      %v229 = vmul.f32 %v226, %v226
      %v230 = vmul.f32 %v227, %v227
      %vm231 = vcmask 64512
      %v232 = vsel %vm231, %v229, 0.0
      %233 = vadd.xlane.f32.xlu0 %v232
      %v234 = vpop.xlane.xlu0 %233
      %v235 = vsel %vm231, %v230, 0.0
      %236 = vadd.xlane.f32.xlu0 %v235
      %v237 = vpop.xlane.xlu0 %236
      %v238 = vmul.f32 %v228, %v228
      %vm239 = vcmask 130048
      %v240 = vsel %vm239, %v238, 0.0
      %v241 = vrot.slane %v240, 4
      %v242 = vadd.f32 %v240, %v241
      %v243 = vrot.slane %v242, 2
      %v244 = vadd.f32 %v242, %v243
      %v245 = vrot.slane %v244, 1
      %v246 = vadd.f32 %v244, %v245
      %v248 = vsel %vm231, %v226, 0
      %v251 = vsel %vm231, %v227, 0
      %253 = vmatprep.subr.mxu0 0.0
      %254 = vmatpush1.msra.mxu0 0.0
      %255 = vmatprep.subr.mxu0 0.0
      %256 = vmatpush1.msra.mxu0 0.0
      %257 = vmatprep.subr.mxu0 0.0
      %258 = vmatpush1.msra.mxu0 0.0
      %259 = vmatprep.subr.mxu0 0.0
      %260 = vmatpush1.msra.mxu0 0.0
      %261 = vmatprep.subr.mxu0 0.0
      %262 = vmatpush1.msra.mxu0 0.0
      %263 = vmatprep.subr.mxu0 0.0
      %264 = vmatpush1.msra.mxu0 0.0
      %265 = vmatprep.subr.mxu0 0.0
      %266 = vmatpush1.msra.mxu0 0.0
      %267 = vmatprep.subr.mxu0 0.0
      %268 = vmatpush1.msra.mxu0 0.0
      %269 = vmatprep.subr.mxu0 0.0
      %270 = vmatpush1.msra.mxu0 0.0
      %271 = vmatprep.subr.mxu0 0.0
      %272 = vmatpush1.msra.mxu0 0.0
      %273 = vmatprep.subr.mxu0 0.0
      %274 = vmatpush1.msra.mxu0 0.0
      %275 = vmatprep.subr.mxu0 0.0
      %276 = vmatpush1.msra.mxu0 0.0
      %277 = vmatprep.subr.mxu0 0.0
      %278 = vmatpush1.msra.mxu0 0.0
      %279 = vmatprep.subr.mxu0 0.0
      %280 = vmatpush1.msra.mxu0 0.0
      %281 = vmatprep.subr.mxu0 0.0
      %282 = vmatpush1.msra.mxu0 0.0
      %283 = vmatprep.subr.mxu0 0.0
      %284 = vmatpush1.msra.mxu0 %v228
      %285 = vmatprep.subr.mxu0 0.0
      %286 = vmatpush2.msra.mxu0 0.0
      %287 = vmatprep.subr.mxu0 0.0
      %288 = vmatpush2.msra.mxu0 0.0
      %289 = vmatprep.subr.mxu0 0.0
      %290 = vmatpush2.msra.mxu0 0.0
      %291 = vmatprep.subr.mxu0 0.0
      %292 = vmatpush2.msra.mxu0 0.0
      %293 = vmatprep.subr.mxu0 0.0
      %294 = vmatpush2.msra.mxu0 0.0
      %295 = vmatprep.subr.mxu0 0.0
      %296 = vmatpush2.msra.mxu0 0.0
      %297 = vmatprep.subr.mxu0 0.0
      %298 = vmatpush2.msra.mxu0 0.0
      %299 = vmatprep.subr.mxu0 0.0
      %300 = vmatpush2.msra.mxu0 0.0
      %301 = vmatprep.subr.mxu0 0.0
      %302 = vmatpush2.msra.mxu0 0.0
      %303 = vmatprep.subr.mxu0 0.0
      %304 = vmatpush2.msra.mxu0 0.0
      %305 = vmatprep.subr.mxu0 0.0
      %306 = vmatpush2.msra.mxu0 0.0
      %307 = vmatprep.subr.mxu0 0.0
      %308 = vmatpush2.msra.mxu0 0.0
      %309 = vmatprep.subr.mxu0 0.0
      %310 = vmatpush2.msra.mxu0 0.0
      %311 = vmatprep.subr.mxu0 0.0
      %312 = vmatpush2.msra.mxu0 0.0
      %313 = vmatprep.subr.mxu0 0.0
      %314 = vmatpush2.msra.mxu0 0.0
      %315 = vmatprep.subr.mxu0 0.0
      %316 = vmatpush2.msra.mxu0 0.0
      %317 = vmatprep.mubr.f32.mxu0 0.0
      %318 = vmatmul.mubr.f32.gmra.mxu0 %v248
      %v319 = vpop.f32.mrf.mxu0
      %v320 = vadd.f32 0.0, %v319
      %v321 = vpop.f32.mrf.mxu0
      %322 = vmatprep.mubr.f32.mxu0 0.0
      %323 = vmatmul.mubr.f32.gmra.mxu0 %v251
      %v324 = vpop.f32.mrf.mxu0
      %v325 = vadd.f32 0.0, %v324
      %v326 = vpop.f32.mrf.mxu0
      %327 = vdwg.mxu0
      %v328 = vadd.f32 %v234, %v246
      %v329 = vadd.f32 %v237, %v246
      %v330 = vmul.f32 %v320, 2.0
      %v331 = vmul.f32 %v325, 2.0
      %v332 = vsub.f32 %v328, %v330
      %v333 = vsub.f32 %v329, %v331
      %v334 = vlaneseq
      %v335 = vshrl.u32 %v334, 7
      %v336 = vadd.s32 %v335, 8
      %s337 = smul.u32 %s19, 16
      %v338 = vstv %s337
      %v339 = vadd.s32 %v335, %v338
      %v340 = vadd.s32 %v336, %v338
      %v341 = vlaneseq
      %v342 = vand.u32 %v341, 127
      %s343 = smul.u32 %s20, 16
      %v344 = vstv %s343
      %v345 = vadd.s32 %v342, %v344
      %vm346 = vcmp.eq.s32.totalorder %v339, %v345
      %vm347 = vcmp.eq.s32.totalorder %v340, %v345
      %v348 = vsel %vm346, -1.0, %v332
      %v349 = vsel %vm347, -1.0, %v333
      %350 = vst.msk [vmem:[%s224] sm:$0xff] %vm239, %v348
      %351 = vst.msk [vmem:[%s224 + $0x8] sm:$0xff] %vm239, %v349
      %s352 = smul.u32 2, %s19
      %p353 = scmp.lt.s32.totalorder %s18, 1
      %s354 = scalar_select %p353, %s18, 1
      %p355 = scmp.lt.s32.totalorder %s352, 1
      %s356 = scalar_select %p355, %s352, 1
      %p357 = scmp.lt.s32.totalorder %s20, 0
      %s358 = scalar_select %p357, %s20, 0
      %s359 = sadd.s32 %s358, %s356
      %s360 = smul.addr %s354, 2
      %s361 = sadd.s32 %s359, %s360
      %s362 = smul.addr %s361, 8
      %s363 = scalar_lea.vmem %s2, %s362
      // Predicated region
      $region29: #{_forward_padded.3} parent=27 // pred_check
        %p364 = pneg %p110
      $region30: #{_forward_padded.3} parent=27 // pred_check_branch
        %366 = sbr.rel (%p364) target = $region32
      $region31: #{_forward_padded.3} parent=27 // pred_region
        %s367 = smul.u32 2, %s19
      $region32: #{_forward_padded.3} parent=27 // pred_fallthru
        _
    $region28: #{_forward_padded.3} parent=5 // pred_fallthru
      _
    %p368 = scmp.le.s32.totalorder 2, %s8
    // Predicated region
    $region33: #{_forward_padded.3} parent=5 // pred_check
      %p369 = pneg %p368
    $region34: #{_forward_padded.3} parent=5 // pred_check_branch
      %371 = sbr.rel (%p369) target = $region36
    $region35: #{_forward_padded.3} parent=5 // pred_region
      %s372 = ssub.s32 %s8, 2
      // Predicated region
      $region37: #{_forward_padded.3} parent=35 // pred_check
        %p373 = pneg %p116
      $region38: #{_forward_padded.3} parent=35 // pred_check_branch
        %375 = sbr.rel (%p373) target = $region40
      $region39: #{_forward_padded.3} parent=35 // pred_region
        %s376 = smul.u32 2, %s22
        %p377 = scmp.lt.s32.totalorder %s21, 1
        %s378 = scalar_select %p377, %s21, 1
        %p379 = scmp.lt.s32.totalorder %s376, 1
        %s380 = scalar_select %p379, %s376, 1
        %p381 = scmp.lt.s32.totalorder %s23, 0
        %s382 = scalar_select %p381, %s23, 0
        %s383 = sadd.s32 %s382, %s380
        %s384 = smul.addr %s378, 2
        %s385 = sadd.s32 %s383, %s384
        %s386 = smul.addr %s385, 8
        %s387 = scalar_lea.vmem %s2, %s386
      $region40: #{_forward_padded.3} parent=35 // pred_fallthru
        _
    $region36: #{_forward_padded.3} parent=5 // pred_fallthru
      _
  $region6: #{_forward_padded.3} parent=0 // loop_footer
    %s12 = sadd.s32 1, %s8
  $region7: #{_forward_padded.3} parent=0 // loop_footer_branch
    %7 = sbr.rel target = $region3
  $region8: #{_forward_padded.3} parent=0 // loop_exit
    _

// kernel: tile.19
$region0: #{tile.19}
  %s0 = inlined_call_operand.vmem [shape: f32[10,64], index: 0, kind: input, shape index: {}]
  %s1 = inlined_call_operand.vmem [shape: f32[1,640], index: 1, kind: output, shape index: {}]
  $region1: #{tile.19} parent=0
    #allocation0 [shape = 'u8[20480]{0}', space=vmem, size = 0x5000, scoped, tag = 'scoped mem for output reshape']
    %v2 = vld [vmem:[%s0] ss:$2 sm:$0x1f]
    %vm3 = vcmask 523264
    %4 = vst.msk [vmem:[#allocation0] ss:$8 sm:$0xf] %vm3, %v2
    %s5 = scalar_lea.vmem [#allocation0], 28
    %6 = vst.msk [vmem:[%s5] sm:$0x10] %vm3, %v2
    %s7 = scalar_lea.vmem %s0, 1
    %v8 = vld [vmem:[%s7] ss:$2 sm:$0x1f]
    %9 = vrot.lane.b32.xlu0 %v8, 64
    %v10 = vpop.permute.xlu0 %9
    %vm11 = vcmask 1048064
    %12 = vst.msk [vmem:[#allocation0] ss:$8 sm:$0xf] %vm11, %v10
    %s13 = scalar_lea.vmem [#allocation0], 28
    %14 = vst.msk [vmem:[%s13] sm:$0x10] %vm11, %v10
    %s16 = sshll.u32 1, 1
    %s17 = ssub.s32 %s16, 1
    %v19 = vld [vmem:[#allocation0] sm:%s17]
    %s20 = sshll.u32 1, 1
    %s21 = ssub.s32 %s20, 1
    %22 = vst [vmem:[%s1] sm:%s21] %v19
    %s23 = scalar_lea.vmem [#allocation0], 8
    %v24 = vld [vmem:[%s23] sm:%s17]
    %s25 = sshll.u32 1, 1
    %s26 = ssub.s32 %s25, 1
    %s27 = scalar_lea.vmem %s1, 1
    %28 = vst [vmem:[%s27] sm:%s26] %v24
    %s29 = scalar_lea.vmem [#allocation0], 16
    %v30 = vld [vmem:[%s29] sm:%s17]
    %s31 = sshll.u32 1, 1
    %s32 = ssub.s32 %s31, 1
    %s33 = smul.addr 1, 2
    %s34 = scalar_lea.vmem %s1, %s33
    %35 = vst [vmem:[%s34] sm:%s32] %v30
    %s36 = scalar_lea.vmem [#allocation0], 24
    %v37 = vld [vmem:[%s36] sm:%s17]
    %s38 = sshll.u32 1, 1
    %s39 = ssub.s32 %s38, 1
    %s40 = smul.addr 1, 3
    %s41 = scalar_lea.vmem %s1, %s40
    %42 = vst [vmem:[%s41] sm:%s39] %v37
    %s43 = scalar_lea.vmem [#allocation0], 32
    %v44 = vld [vmem:[%s43] sm:%s17]
    %s45 = sshll.u32 1, 1
    %s46 = ssub.s32 %s45, 1
    %s47 = smul.addr 1, 4
    %s48 = scalar_lea.vmem %s1, %s47
    %49 = vst [vmem:[%s48] sm:%s46] %v44

// kernel: _forward_padded.4
$region0: #{_forward_padded.4}
  #allocation0 [shape = 'u32[]', space=smem, size = 0x4, offset = 0x4, fixed_abs, tag = 'smem constant byte address 0x4 - core index']
  #allocation1 [shape = 'u32[144,128]{1,0:T(1,128)}', space=vmem, size = 0x12000, scoped, tag = 'internal scratch']
  %s0 = inlined_call_operand.vmem [shape: bf16[2,16,32], index: 0, kind: input, shape index: {}]
  %s1 = inlined_call_operand.vmem [shape: bf16[2,16,350], index: 1, kind: input, shape index: {}]
  %s2 = inlined_call_operand.vmem [shape: bf16[32,640], index: 2, kind: input, shape index: {}]
  %s3 = inlined_call_operand.vmem [shape: bf16[350,640], index: 3, kind: input, shape index: {}]
  %s4 = inlined_call_operand.vmem [shape: f32[1,640], index: 4, kind: input, shape index: {}]
  %s5 = inlined_call_operand.vmem [shape: bf16[640,10], index: 5, kind: input, shape index: {}]
  %s6 = inlined_call_operand.vmem [shape: f32[2,16,10], index: 6, kind: output, shape index: {}]
  %s7 = sld [smem:[#allocation0]]
  $region57: #{_forward_padded.4} parent=0
    _
  %s9 = ssub.s32 1, %s7
  %s10 = scalar_select 0, %s9, %s7
  loop: start=0, step=1, limit=4
  $region2: #{_forward_padded.4} parent=0 // loop_pre_header
    _
  $region3: #{_forward_padded.4} parent=0 // loop_header
    %s12 = sphi 0, %s16
    %p13 = scmp.ge.s32.totalorder %s12, 4
    %s19 = sphi 0, %s31
    %s20 = sphi 0, %s27
    %s21 = sphi 0, %s19
    %s22 = sphi 0, %s20
    %s23 = sphi 0, %s21
    %s24 = sphi 0, %s22
    %s36 = sphi 0, %s38
    %s39 = sphi 0, %s36
    %s40 = sphi 0, %s39
    %s56 = sphi 0, %s40
    %s64 = sphi 0, %s66
    %s67 = sphi 0, %s64
    %s68 = sphi 0, %s67
    %s84 = sphi 0, %s68
    %s88 = sphi 0, %s88
    %s90 = sphi 0, %s88
    %s91 = sphi 0, %s90
    %s105 = sphi 0, %s91
    %s109 = sphi 0, %s109
    %s111 = sphi 0, %s109
    %s112 = sphi 0, %s111
    %s126 = sphi 0, %s112
    %s130 = sphi 0, %s130
    %s132 = sphi 0, %s130
    %s133 = sphi 0, %s132
    %s147 = sphi 0, %s133
    %s151 = sphi 0, %s151
    %s153 = sphi 0, %s151
    %s154 = sphi 0, %s153
    %s168 = sphi 0, %s154
    %s176 = sphi 0, %s178
    %s179 = sphi 0, %s176
    %s180 = sphi 0, %s179
    %s196 = sphi 0, %s180
  $region4: #{_forward_padded.4} parent=0 // loop_header_branch
    %15 = sbr.rel (%p13) target = $region8
  $region5: #{_forward_padded.4} parent=0 // loop_body
    %s17 = ssub.s32 %s12, 1
    %s18 = ssub.s32 %s12, 2
    %s25 = sadd.s32 1, %s20
    %p26 = scmp.ge.s32.totalorder %s25, 1
    %s27 = scalar_select %p26, 0, %s25
    %s28 = sadd.s32 1, %s19
    %s29 = scalar_select %p26, %s28, %s19
    %p30 = scmp.ge.s32.totalorder %s29, 2
    %s31 = scalar_select %p30, 0, %s29
    %s32 = ssub.s32 %s19, %s31
    %s33 = ssub.s32 %s20, %s27
    %s34 = sor.u32 %s32, %s33
    %p35 = scmp.eq.s32.totalorder %s34, 0
    %s37 = sadd.s32 %s36, 1
    %s38 = scalar_select %p35, %s36, %s37
    %p41 = pneg %p35
    %p42 = scmp.eq.s32.totalorder %s12, 1
    %p43 = por %p41, %p42
    %p44 = scmp.ne.s32.totalorder %s36, %s39
    %p45 = scmp.eq.s32.totalorder %s12, 0
    %p46 = por %p44, %p45
    %p47 = scmp.ne.s32.totalorder %s36, %s39
    %p48 = scmp.eq.s32.totalorder %s17, 1
    %p49 = por %p47, %p48
    %p50 = scmp.ne.s32.totalorder %s39, %s40
    %p51 = scmp.eq.s32.totalorder %s17, 0
    %p52 = por %p50, %p51
    %p53 = scmp.ne.s32.totalorder %s39, %s40
    %p54 = scmp.eq.s32.totalorder %s18, 1
    %p55 = por %p53, %p54
    %p57 = scmp.ne.s32.totalorder %s40, %s56
    %p58 = scmp.eq.s32.totalorder %s18, 0
    %p59 = por %p57, %p58
    %s60 = ssub.s32 %s19, %s31
    %s61 = ssub.s32 %s20, %s27
    %s62 = sor.u32 %s60, %s61
    %p63 = scmp.eq.s32.totalorder %s62, 0
    %s65 = sadd.s32 %s64, 1
    %s66 = scalar_select %p63, %s64, %s65
    %p69 = pneg %p63
    %p70 = scmp.eq.s32.totalorder %s12, 1
    %p71 = por %p69, %p70
    %p72 = scmp.ne.s32.totalorder %s64, %s67
    %p73 = scmp.eq.s32.totalorder %s12, 0
    %p74 = por %p72, %p73
    %p75 = scmp.ne.s32.totalorder %s64, %s67
    %p76 = scmp.eq.s32.totalorder %s17, 1
    %p77 = por %p75, %p76
    %p78 = scmp.ne.s32.totalorder %s67, %s68
    %p79 = scmp.eq.s32.totalorder %s17, 0
    %p80 = por %p78, %p79
    %p81 = scmp.ne.s32.totalorder %s67, %s68
    %p82 = scmp.eq.s32.totalorder %s18, 1
    %p83 = por %p81, %p82
    %p85 = scmp.ne.s32.totalorder %s68, %s84
    %p86 = scmp.eq.s32.totalorder %s18, 0
    %p87 = por %p85, %p86
    %s89 = sadd.s32 %s88, 1
    %p92 = scmp.eq.s32.totalorder %s12, 1
    %p93 = scmp.ne.s32.totalorder %s88, %s90
    %p94 = scmp.eq.s32.totalorder %s12, 0
    %p95 = por %p93, %p94
    %p96 = scmp.ne.s32.totalorder %s88, %s90
    %p97 = scmp.eq.s32.totalorder %s17, 1
    %p98 = por %p96, %p97
    %p99 = scmp.ne.s32.totalorder %s90, %s91
    %p100 = scmp.eq.s32.totalorder %s17, 0
    %p101 = por %p99, %p100
    %p102 = scmp.ne.s32.totalorder %s90, %s91
    %p103 = scmp.eq.s32.totalorder %s18, 1
    %p104 = por %p102, %p103
    %p106 = scmp.ne.s32.totalorder %s91, %s105
    %p107 = scmp.eq.s32.totalorder %s18, 0
    %p108 = por %p106, %p107
    %s110 = sadd.s32 %s109, 1
    %p113 = scmp.eq.s32.totalorder %s12, 1
    %p114 = scmp.ne.s32.totalorder %s109, %s111
    %p115 = scmp.eq.s32.totalorder %s12, 0
    %p116 = por %p114, %p115
    %p117 = scmp.ne.s32.totalorder %s109, %s111
    %p118 = scmp.eq.s32.totalorder %s17, 1
    %p119 = por %p117, %p118
    %p120 = scmp.ne.s32.totalorder %s111, %s112
    %p121 = scmp.eq.s32.totalorder %s17, 0
    %p122 = por %p120, %p121
    %p123 = scmp.ne.s32.totalorder %s111, %s112
    %p124 = scmp.eq.s32.totalorder %s18, 1
    %p125 = por %p123, %p124
    %p127 = scmp.ne.s32.totalorder %s112, %s126
    %p128 = scmp.eq.s32.totalorder %s18, 0
    %p129 = por %p127, %p128
    %s131 = sadd.s32 %s130, 1
    %p134 = scmp.eq.s32.totalorder %s12, 1
    %p135 = scmp.ne.s32.totalorder %s130, %s132
    %p136 = scmp.eq.s32.totalorder %s12, 0
    %p137 = por %p135, %p136
    %p138 = scmp.ne.s32.totalorder %s130, %s132
    %p139 = scmp.eq.s32.totalorder %s17, 1
    %p140 = por %p138, %p139
    %p141 = scmp.ne.s32.totalorder %s132, %s133
    %p142 = scmp.eq.s32.totalorder %s17, 0
    %p143 = por %p141, %p142
    %p144 = scmp.ne.s32.totalorder %s132, %s133
    %p145 = scmp.eq.s32.totalorder %s18, 1
    %p146 = por %p144, %p145
    %p148 = scmp.ne.s32.totalorder %s133, %s147
    %p149 = scmp.eq.s32.totalorder %s18, 0
    %p150 = por %p148, %p149
    %s152 = sadd.s32 %s151, 1
    %p155 = scmp.eq.s32.totalorder %s12, 1
    %p156 = scmp.ne.s32.totalorder %s151, %s153
    %p157 = scmp.eq.s32.totalorder %s12, 0
    %p158 = por %p156, %p157
    %p159 = scmp.ne.s32.totalorder %s151, %s153
    %p160 = scmp.eq.s32.totalorder %s17, 1
    %p161 = por %p159, %p160
    %p162 = scmp.ne.s32.totalorder %s153, %s154
    %p163 = scmp.eq.s32.totalorder %s17, 0
    %p164 = por %p162, %p163
    %p165 = scmp.ne.s32.totalorder %s153, %s154
    %p166 = scmp.eq.s32.totalorder %s18, 1
    %p167 = por %p165, %p166
    %p169 = scmp.ne.s32.totalorder %s154, %s168
    %p170 = scmp.eq.s32.totalorder %s18, 0
    %p171 = por %p169, %p170
    %s172 = ssub.s32 %s19, %s31
    %s173 = ssub.s32 %s20, %s27
    %s174 = sor.u32 %s172, %s173
    %p175 = scmp.eq.s32.totalorder %s174, 0
    %s177 = sadd.s32 %s176, 1
    %s178 = scalar_select %p175, %s176, %s177
    %p181 = pneg %p175
    %p182 = scmp.eq.s32.totalorder %s12, 1
    %p183 = por %p181, %p182
    %p184 = scmp.ne.s32.totalorder %s176, %s179
    %p185 = scmp.eq.s32.totalorder %s12, 0
    %p186 = por %p184, %p185
    %p187 = scmp.ne.s32.totalorder %s176, %s179
    %p188 = scmp.eq.s32.totalorder %s17, 1
    %p189 = por %p187, %p188
    %p190 = scmp.ne.s32.totalorder %s179, %s180
    %p191 = scmp.eq.s32.totalorder %s17, 0
    %p192 = por %p190, %p191
    %p193 = scmp.ne.s32.totalorder %s179, %s180
    %p194 = scmp.eq.s32.totalorder %s18, 1
    %p195 = por %p193, %p194
    %p197 = scmp.ne.s32.totalorder %s180, %s196
    %p198 = scmp.eq.s32.totalorder %s18, 0
    %p199 = por %p197, %p198
    %p200 = scmp.le.s32.totalorder 1, %s12
    %p201 = scmp.lt.s32.totalorder %s12, 3
    %p202 = pnand %p200, %p201
    %p203 = pneg %p202
    // Predicated region
    $region9: #{_forward_padded.4} parent=5 // pred_check
      _
    $region10: #{_forward_padded.4} parent=5 // pred_check_branch
      %205 = sbr.rel (%p202) target = $region12
    $region11: #{_forward_padded.4} parent=5 // pred_region
      %s206 = ssub.s32 %s12, 1
      // Predicated region
      $region13: #{_forward_padded.4} parent=11 // pred_check
        %p207 = pneg %p101
      $region14: #{_forward_padded.4} parent=11 // pred_check_branch
        %209 = sbr.rel (%p207) target = $region16
      $region15: #{_forward_padded.4} parent=11 // pred_region
        _
      $region16: #{_forward_padded.4} parent=11 // pred_fallthru
        _
      // Predicated region
      $region17: #{_forward_padded.4} parent=11 // pred_check
        %p210 = pneg %p122
      $region18: #{_forward_padded.4} parent=11 // pred_check_branch
        %212 = sbr.rel (%p210) target = $region20
      $region19: #{_forward_padded.4} parent=11 // pred_region
        _
      $region20: #{_forward_padded.4} parent=11 // pred_fallthru
        _
      // Predicated region
      $region21: #{_forward_padded.4} parent=11 // pred_check
        %p213 = pneg %p143
      $region22: #{_forward_padded.4} parent=11 // pred_check_branch
        %215 = sbr.rel (%p213) target = $region24
      $region23: #{_forward_padded.4} parent=11 // pred_region
        _
      $region24: #{_forward_padded.4} parent=11 // pred_fallthru
        _
      // Predicated region
      $region25: #{_forward_padded.4} parent=11 // pred_check
        %p216 = pneg %p164
      $region26: #{_forward_padded.4} parent=11 // pred_check_branch
        %218 = sbr.rel (%p216) target = $region28
      $region27: #{_forward_padded.4} parent=11 // pred_region
        _
      $region28: #{_forward_padded.4} parent=11 // pred_fallthru
        _
    $region12: #{_forward_padded.4} parent=5 // pred_fallthru
      _
    %p219 = scmp.lt.s32.totalorder %s12, 2
    // Predicated region
    $region29: #{_forward_padded.4} parent=5 // pred_check
      %p220 = pneg %p219
    $region30: #{_forward_padded.4} parent=5 // pred_check_branch
      %222 = sbr.rel (%p220) target = $region32
    $region31: #{_forward_padded.4} parent=5 // pred_region
      // Predicated region
      $region33: #{_forward_padded.4} parent=31 // pred_check
        %p223 = pneg %p46
      $region34: #{_forward_padded.4} parent=31 // pred_check_branch
        %225 = sbr.rel (%p223) target = $region36
      $region35: #{_forward_padded.4} parent=31 // pred_region
        %s226 = smul.u32 2, %s20
        %p227 = scmp.lt.s32.totalorder %s19, 1
        %s228 = scalar_select %p227, %s19, 1
        %p229 = scmp.lt.s32.totalorder %s226, 1
        %s230 = scalar_select %p229, %s226, 1
        %s231 = smul.addr %s228, 2
        %s232 = sadd.s32 %s230, %s231
        %s233 = smul.addr %s232, 4
        %s234 = scalar_lea.vmem %s0, %s233
        %s235 = smul.u32 2, %s20
      $region36: #{_forward_padded.4} parent=31 // pred_fallthru
        _
      // Predicated region
      $region37: #{_forward_padded.4} parent=31 // pred_check
        %p236 = pneg %p74
      $region38: #{_forward_padded.4} parent=31 // pred_check_branch
        %238 = sbr.rel (%p236) target = $region40
      $region39: #{_forward_padded.4} parent=31 // pred_region
        %s239 = smul.u32 2, %s20
        %p240 = scmp.lt.s32.totalorder %s19, 1
        %s241 = scalar_select %p240, %s19, 1
        %p242 = scmp.lt.s32.totalorder %s239, 1
        %s243 = scalar_select %p242, %s239, 1
        %s244 = smul.addr %s243, 3
        %s245 = smul.addr %s241, 6
        %s246 = sadd.s32 %s244, %s245
        %s247 = smul.addr %s246, 4
        %s248 = scalar_lea.vmem %s1, %s247
        %s249 = smul.u32 2, %s20
      $region40: #{_forward_padded.4} parent=31 // pred_fallthru
        _
    $region32: #{_forward_padded.4} parent=5 // pred_fallthru
      _
    %p250 = scmp.le.s32.totalorder 1, %s12
    %p251 = scmp.lt.s32.totalorder %s12, 3
    %p252 = pnand %p250, %p251
    %p253 = pneg %p252
    // Predicated region
    $region41: #{_forward_padded.4} parent=5 // pred_check
      _
    $region42: #{_forward_padded.4} parent=5 // pred_check_branch
      %255 = sbr.rel (%p252) target = $region44
    $region43: #{_forward_padded.4} parent=5 // pred_region
      %s256 = ssub.s32 %s12, 1
      %s257 = smul.u32 2, %s22
      %p258 = scmp.lt.s32.totalorder %s21, 1
      %s259 = scalar_select %p258, %s21, 1
      %p260 = scmp.lt.s32.totalorder %s257, 1
      %s261 = scalar_select %p260, %s257, 1
      %s262 = smul.addr %s259, 2
      %s263 = sadd.s32 %s261, %s262
      %s264 = smul.addr %s263, 4
      %s265 = scalar_lea.vmem %s0, %s264
      %p266 = pneg %p52
      %p267 = pneg %p49
      %s268 = smul.u32 2, %s22
      %p269 = scmp.lt.s32.totalorder %s21, 1
      %s270 = scalar_select %p269, %s21, 1
      %p271 = scmp.lt.s32.totalorder %s268, 1
      %s272 = scalar_select %p271, %s268, 1
      %s273 = smul.addr %s272, 3
      %s274 = smul.addr %s270, 6
      %s275 = sadd.s32 %s273, %s274
      %s276 = smul.addr %s275, 4
      %s277 = scalar_lea.vmem %s1, %s276
      %p278 = pneg %p80
      %p279 = pneg %p77
      %p280 = pneg %p101
      %p281 = pneg %p98
      %p282 = pneg %p122
      %p283 = pneg %p119
      %p284 = pneg %p143
      %p285 = pneg %p140
      %p286 = pneg %p164
      %p287 = pneg %p161
      %p288 = pneg %p192
      %p289 = pneg %p189
      %s290 = smul.u32 2, %s22
      %p291 = scmp.lt.s32.totalorder %s21, 1
      %s292 = scalar_select %p291, %s21, 1
      %p293 = scmp.lt.s32.totalorder %s290, 1
      %s294 = scalar_select %p293, %s290, 1
      %s295 = smul.addr %s292, 2
      %s296 = sadd.s32 %s294, %s295
      %s297 = smul.addr %s296, 8
      %s298 = scalar_lea.vmem %s6, %s297
      %s299 = smul.u32 2, %s22
      %p300 = scmp.lt.s32.totalorder %s21, 1
      %s301 = scalar_select %p300, %s21, 1
      %p302 = scmp.lt.s32.totalorder %s299, 1
      %s303 = scalar_select %p302, %s299, 1
      %s304 = smul.addr %s301, 2
      %s305 = sadd.s32 %s303, %s304
      %s306 = smul.addr %s305, 4
      %s307 = scalar_lea.vmem %s0, %s306
      %s308 = smul.u32 2, %s22
      %s309 = smul.u32 2, %s22
      %p310 = scmp.lt.s32.totalorder %s21, 1
      %s311 = scalar_select %p310, %s21, 1
      %p312 = scmp.lt.s32.totalorder %s309, 1
      %s313 = scalar_select %p312, %s309, 1
      %s314 = smul.addr %s313, 3
      %s315 = smul.addr %s311, 6
      %s316 = sadd.s32 %s314, %s315
      %s317 = smul.addr %s316, 4
      %s318 = scalar_lea.vmem %s1, %s317
      %s319 = smul.u32 2, %s22
      %s320 = smul.u32 2, %s22
      %p321 = scmp.lt.s32.totalorder %s21, 1
      %s322 = scalar_select %p321, %s21, 1
      %p323 = scmp.lt.s32.totalorder %s320, 1
      %s324 = scalar_select %p323, %s320, 1
      %s325 = smul.addr %s322, 2
      %s326 = sadd.s32 %s324, %s325
      %s327 = smul.addr %s326, 8
      %s328 = scalar_lea.vmem %s6, %s327
      %s329 = smul.u32 2, %s22
      %v331 = vld [vmem:[%s307] sm:$0xf]
      %v332 = vld [vmem:[%s307 + $0x4] sm:$0xf]
      %v333 = vld [vmem:[%s318] sm:$0xff]
      %v334 = vld [vmem:[%s318 + $0x8] sm:$0xf]
      %v335 = vld [vmem:[%s318 + $0xc] sm:$0xff]
      %v336 = vld [vmem:[%s318 + $0x14] sm:$0xf]
      %v337 = vld [vmem:[%s2] sm:$0xff]
      %v338 = vld [vmem:[%s2 + $0x8] sm:$0xff]
      %v339 = vld [vmem:[%s2 + $0x10] sm:$0xf]
      %v340 = vld [vmem:[%s2 + $0x14] sm:$0xff]
      %v341 = vld [vmem:[%s2 + $0x1c] sm:$0xff]
      %v342 = vld [vmem:[%s2 + $0x24] sm:$0xf]
      %v343 = vld [vmem:[%s2 + $0x28] sm:$0xff]
      %v344 = vld [vmem:[%s2 + $0x30] sm:$0xff]
      %v345 = vld [vmem:[%s2 + $0x38] sm:$0xf]
      %v346 = vld [vmem:[%s2 + $0x3c] sm:$0xff]
      %v347 = vld [vmem:[%s2 + $0x44] sm:$0xff]
      %v348 = vld [vmem:[%s2 + $0x4c] sm:$0xf]
      %v349 = vld [vmem:[%s3] sm:$0xff]
      %v350 = vld [vmem:[%s3 + $0x8] sm:$0xff]
      %v351 = vld [vmem:[%s3 + $0x10] sm:$0xf]
      %v352 = vld [vmem:[%s3 + $0x14] sm:$0xff]
      %v353 = vld [vmem:[%s3 + $0x1c] sm:$0xff]
      %v354 = vld [vmem:[%s3 + $0x24] sm:$0xf]
      %v355 = vld [vmem:[%s3 + $0x28] sm:$0xff]
      %v356 = vld [vmem:[%s3 + $0x30] sm:$0xff]
      %v357 = vld [vmem:[%s3 + $0x38] sm:$0xf]
      %v358 = vld [vmem:[%s3 + $0x3c] sm:$0xff]
      %v359 = vld [vmem:[%s3 + $0x44] sm:$0xff]
      %v360 = vld [vmem:[%s3 + $0x4c] sm:$0xf]
      %v361 = vld [vmem:[%s3 + $0x50] sm:$0xff]
      %v362 = vld [vmem:[%s3 + $0x58] sm:$0xff]
      %v363 = vld [vmem:[%s3 + $0x60] sm:$0xf]
      %v364 = vld [vmem:[%s3 + $0x64] sm:$0xff]
      %v365 = vld [vmem:[%s3 + $0x6c] sm:$0xff]
      %v366 = vld [vmem:[%s3 + $0x74] sm:$0xf]
      %v367 = vld [vmem:[%s3 + $0x78] sm:$0xff]
      %v368 = vld [vmem:[%s3 + $0x80] sm:$0xff]
      %v369 = vld [vmem:[%s3 + $0x88] sm:$0xf]
      %v370 = vld [vmem:[%s3 + $0x8c] sm:$0xff]
      %v371 = vld [vmem:[%s3 + $0x94] sm:$0xff]
      %v372 = vld [vmem:[%s3 + $0x9c] sm:$0xf]
      %v373 = vld [vmem:[%s3 + $0xa0] sm:$0xff]
      %v374 = vld [vmem:[%s3 + $0xa8] sm:$0xff]
      %v375 = vld [vmem:[%s3 + $0xb0] sm:$0xf]
      %v376 = vld [vmem:[%s3 + $0xb4] sm:$0xff]
      %v377 = vld [vmem:[%s3 + $0xbc] sm:$0xff]
      %v378 = vld [vmem:[%s3 + $0xc4] sm:$0xf]
      %v379 = vld [vmem:[%s3 + $0xc8] sm:$0xff]
      %v380 = vld [vmem:[%s3 + $0xd0] sm:$0xff]
      %v381 = vld [vmem:[%s3 + $0xd8] sm:$0xf]
      %v382 = vld [vmem:[%s3 + $0xdc] sm:$0xff]
      %v383 = vld [vmem:[%s3 + $0xe4] sm:$0xff]
      %v384 = vld [vmem:[%s3 + $0xec] sm:$0xf]
      %v385 = vld [vmem:[%s3 + $0xf0] sm:$0xff]
      %v386 = vld [vmem:[%s3 + $0xf8] sm:$0xff]
      %v387 = vld [vmem:[%s3 + $0x100] sm:$0xf]
      %v388 = vld [vmem:[%s3 + $0x104] sm:$0xff]
      %v389 = vld [vmem:[%s3 + $0x10c] sm:$0xff]
      %v390 = vld [vmem:[%s3 + $0x114] sm:$0xf]
      %v391 = vld [vmem:[%s3 + $0x118] sm:$0xff]
      %v392 = vld [vmem:[%s3 + $0x120] sm:$0xff]
      %v393 = vld [vmem:[%s3 + $0x128] sm:$0xf]
      %v394 = vld [vmem:[%s3 + $0x12c] sm:$0xff]
      %v395 = vld [vmem:[%s3 + $0x134] sm:$0xff]
      %v396 = vld [vmem:[%s3 + $0x13c] sm:$0xf]
      %v397 = vld [vmem:[%s3 + $0x140] sm:$0xff]
      %v398 = vld [vmem:[%s3 + $0x148] sm:$0xff]
      %v399 = vld [vmem:[%s3 + $0x150] sm:$0xf]
      %v400 = vld [vmem:[%s3 + $0x154] sm:$0xff]
      %v401 = vld [vmem:[%s3 + $0x15c] sm:$0xff]
      %v402 = vld [vmem:[%s3 + $0x164] sm:$0xf]
      %v403 = vld [vmem:[%s3 + $0x168] sm:$0xff]
      %v404 = vld [vmem:[%s3 + $0x170] sm:$0xff]
      %v405 = vld [vmem:[%s3 + $0x178] sm:$0xf]
      %v406 = vld [vmem:[%s3 + $0x17c] sm:$0xff]
      %v407 = vld [vmem:[%s3 + $0x184] sm:$0xff]
      %v408 = vld [vmem:[%s3 + $0x18c] sm:$0xf]
      %v409 = vld [vmem:[%s3 + $0x190] sm:$0xff]
      %v410 = vld [vmem:[%s3 + $0x198] sm:$0xff]
      %v411 = vld [vmem:[%s3 + $0x1a0] sm:$0xf]
      %v412 = vld [vmem:[%s3 + $0x1a4] sm:$0xff]
      %v413 = vld [vmem:[%s3 + $0x1ac] sm:$0xff]
      %v414 = vld [vmem:[%s3 + $0x1b4] sm:$0xf]
      %v415 = vld [vmem:[%s3 + $0x1b8] sm:$0xff]
      %v416 = vld [vmem:[%s3 + $0x1c0] sm:$0xff]
      %v417 = vld [vmem:[%s3 + $0x1c8] sm:$0xf]
      %v418 = vld [vmem:[%s3 + $0x1cc] sm:$0xff]
      %v419 = vld [vmem:[%s3 + $0x1d4] sm:$0xff]
      %v420 = vld [vmem:[%s3 + $0x1dc] sm:$0xf]
      %v421 = vld [vmem:[%s3 + $0x1e0] sm:$0xff]
      %v422 = vld [vmem:[%s3 + $0x1e8] sm:$0xff]
      %v423 = vld [vmem:[%s3 + $0x1f0] sm:$0xf]
      %v424 = vld [vmem:[%s3 + $0x1f4] sm:$0xff]
      %v425 = vld [vmem:[%s3 + $0x1fc] sm:$0xff]
      %v426 = vld [vmem:[%s3 + $0x204] sm:$0xf]
      %v427 = vld [vmem:[%s3 + $0x208] sm:$0xff]
      %v428 = vld [vmem:[%s3 + $0x210] sm:$0xff]
      %v429 = vld [vmem:[%s3 + $0x218] sm:$0xf]
      %v430 = vld [vmem:[%s3 + $0x21c] sm:$0xff]
      %v431 = vld [vmem:[%s3 + $0x224] sm:$0xff]
      %v432 = vld [vmem:[%s3 + $0x22c] sm:$0xf]
      %v433 = vld [vmem:[%s3 + $0x230] sm:$0xff]
      %v434 = vld [vmem:[%s3 + $0x238] sm:$0xff]
      %v435 = vld [vmem:[%s3 + $0x240] sm:$0xf]
      %v436 = vld [vmem:[%s3 + $0x244] sm:$0xff]
      %v437 = vld [vmem:[%s3 + $0x24c] sm:$0xff]
      %v438 = vld [vmem:[%s3 + $0x254] sm:$0xf]
      %v439 = vld [vmem:[%s3 + $0x258] sm:$0xff]
      %v440 = vld [vmem:[%s3 + $0x260] sm:$0xff]
      %v441 = vld [vmem:[%s3 + $0x268] sm:$0xf]
      %v442 = vld [vmem:[%s3 + $0x26c] sm:$0xff]
      %v443 = vld [vmem:[%s3 + $0x274] sm:$0xff]
      %v444 = vld [vmem:[%s3 + $0x27c] sm:$0xf]
      %v445 = vld [vmem:[%s3 + $0x280] sm:$0xff]
      %v446 = vld [vmem:[%s3 + $0x288] sm:$0xff]
      %v447 = vld [vmem:[%s3 + $0x290] sm:$0xf]
      %v448 = vld [vmem:[%s3 + $0x294] sm:$0xff]
      %v449 = vld [vmem:[%s3 + $0x29c] sm:$0xff]
      %v450 = vld [vmem:[%s3 + $0x2a4] sm:$0xf]
      %v451 = vld [vmem:[%s3 + $0x2a8] sm:$0xff]
      %v452 = vld [vmem:[%s3 + $0x2b0] sm:$0xff]
      %v453 = vld [vmem:[%s3 + $0x2b8] sm:$0xf]
      %v454 = vld [vmem:[%s3 + $0x2bc] sm:$0xff]
      %v455 = vld [vmem:[%s3 + $0x2c4] sm:$0xff]
      %v456 = vld [vmem:[%s3 + $0x2cc] sm:$0xf]
      %v457 = vld [vmem:[%s3 + $0x2d0] sm:$0xff]
      %v458 = vld [vmem:[%s3 + $0x2d8] sm:$0xff]
      %v459 = vld [vmem:[%s3 + $0x2e0] sm:$0xf]
      %v460 = vld [vmem:[%s3 + $0x2e4] sm:$0xff]
      %v461 = vld [vmem:[%s3 + $0x2ec] sm:$0xff]
      %v462 = vld [vmem:[%s3 + $0x2f4] sm:$0xf]
      %v463 = vld [vmem:[%s3 + $0x2f8] sm:$0xff]
      %v464 = vld [vmem:[%s3 + $0x300] sm:$0xff]
      %v465 = vld [vmem:[%s3 + $0x308] sm:$0xf]
      %v466 = vld [vmem:[%s3 + $0x30c] sm:$0xff]
      %v467 = vld [vmem:[%s3 + $0x314] sm:$0xff]
      %v468 = vld [vmem:[%s3 + $0x31c] sm:$0xf]
      %v469 = vld [vmem:[%s3 + $0x320] sm:$0xff]
      %v470 = vld [vmem:[%s3 + $0x328] sm:$0xff]
      %v471 = vld [vmem:[%s3 + $0x330] sm:$0xf]
      %v472 = vld [vmem:[%s3 + $0x334] sm:$0xff]
      %v473 = vld [vmem:[%s3 + $0x33c] sm:$0xff]
      %v474 = vld [vmem:[%s3 + $0x344] sm:$0xf]
      %v475 = vld [vmem:[%s3 + $0x348] sm:$0xff]
      %v476 = vld [vmem:[%s3 + $0x350] sm:$0xff]
      %v477 = vld [vmem:[%s3 + $0x358] sm:$0xf]
      %v478 = vld [vmem:[%s3 + $0x35c] sm:$0x77]
      %v479 = vld [vmem:[%s3 + $0x364] sm:$0x77]
      %v480 = vld [vmem:[%s3 + $0x36c] sm:$0x7]
      %v485 = vunpack.c.l.b16 %v333
      %v486 = vunpack.c.h.b16 %v333
      %v487 = vunpack.c.l.b16 %v334
      %v488 = vunpack.c.l.b16 %v335
      %v489 = vunpack.c.h.b16 %v335
      %v490 = vunpack.c.l.b16 %v336
      %v491 = vpack.c.b16 %v488, %v485
      %v492 = vpack.c.b16 %v489, %v486
      %v493 = vpack.c.b16 %v490, %v487
      %v628 = vunpack.c.l.b16 %v349
      %v629 = vunpack.c.h.b16 %v349
      %v630 = vunpack.c.l.b16 %v350
      %v631 = vunpack.c.h.b16 %v350
      %v632 = vunpack.c.l.b16 %v351
      %v633 = vunpack.c.l.b16 %v352
      %v634 = vunpack.c.h.b16 %v352
      %v635 = vunpack.c.l.b16 %v353
      %v636 = vunpack.c.h.b16 %v353
      %v637 = vunpack.c.l.b16 %v354
      %v638 = vunpack.c.l.b16 %v355
      %v639 = vunpack.c.h.b16 %v355
      %v640 = vunpack.c.l.b16 %v356
      %v641 = vunpack.c.h.b16 %v356
      %v642 = vunpack.c.l.b16 %v357
      %v643 = vunpack.c.l.b16 %v358
      %v644 = vunpack.c.h.b16 %v358
      %v645 = vunpack.c.l.b16 %v359
      %v646 = vunpack.c.h.b16 %v359
      %v647 = vunpack.c.l.b16 %v360
      %v648 = vunpack.c.l.b16 %v361
      %v649 = vunpack.c.h.b16 %v361
      %v650 = vunpack.c.l.b16 %v362
      %v651 = vunpack.c.h.b16 %v362
      %v652 = vunpack.c.l.b16 %v363
      %v653 = vunpack.c.l.b16 %v364
      %v654 = vunpack.c.h.b16 %v364
      %v655 = vunpack.c.l.b16 %v365
      %v656 = vunpack.c.h.b16 %v365
      %v657 = vunpack.c.l.b16 %v366
      %v658 = vunpack.c.l.b16 %v367
      %v659 = vunpack.c.h.b16 %v367
      %v660 = vunpack.c.l.b16 %v368
      %v661 = vunpack.c.h.b16 %v368
      %v662 = vunpack.c.l.b16 %v369
      %v663 = vunpack.c.l.b16 %v370
      %v664 = vunpack.c.h.b16 %v370
      %v665 = vunpack.c.l.b16 %v371
      %v666 = vunpack.c.h.b16 %v371
      %v667 = vunpack.c.l.b16 %v372
      %v668 = vunpack.c.l.b16 %v373
      %v669 = vunpack.c.h.b16 %v373
      %v670 = vunpack.c.l.b16 %v374
      %v671 = vunpack.c.h.b16 %v374
      %v672 = vunpack.c.l.b16 %v375
      %v673 = vunpack.c.l.b16 %v376
      %v674 = vunpack.c.h.b16 %v376
      %v675 = vunpack.c.l.b16 %v377
      %v676 = vunpack.c.h.b16 %v377
      %v677 = vunpack.c.l.b16 %v378
      %v678 = vunpack.c.l.b16 %v379
      %v679 = vunpack.c.h.b16 %v379
      %v680 = vunpack.c.l.b16 %v380
      %v681 = vunpack.c.h.b16 %v380
      %v682 = vunpack.c.l.b16 %v381
      %v683 = vunpack.c.l.b16 %v382
      %v684 = vunpack.c.h.b16 %v382
      %v685 = vunpack.c.l.b16 %v383
      %v686 = vunpack.c.h.b16 %v383
      %v687 = vunpack.c.l.b16 %v384
      %v688 = vunpack.c.l.b16 %v385
      %v689 = vunpack.c.h.b16 %v385
      %v690 = vunpack.c.l.b16 %v386
      %v691 = vunpack.c.h.b16 %v386
      %v692 = vunpack.c.l.b16 %v387
      %v693 = vunpack.c.l.b16 %v388
      %v694 = vunpack.c.h.b16 %v388
      %v695 = vunpack.c.l.b16 %v389
      %v696 = vunpack.c.h.b16 %v389
      %v697 = vunpack.c.l.b16 %v390
      %v698 = vunpack.c.l.b16 %v391
      %v699 = vunpack.c.h.b16 %v391
      %v700 = vunpack.c.l.b16 %v392
      %v701 = vunpack.c.h.b16 %v392
      %v702 = vunpack.c.l.b16 %v393
      %v703 = vunpack.c.l.b16 %v394
      %v704 = vunpack.c.h.b16 %v394
      %v705 = vunpack.c.l.b16 %v395
      %v706 = vunpack.c.h.b16 %v395
      %v707 = vunpack.c.l.b16 %v396
      %v708 = vunpack.c.l.b16 %v397
      %v709 = vunpack.c.h.b16 %v397
      %v710 = vunpack.c.l.b16 %v398
      %v711 = vunpack.c.h.b16 %v398
      %v712 = vunpack.c.l.b16 %v399
      %v713 = vunpack.c.l.b16 %v400
      %v714 = vunpack.c.h.b16 %v400
      %v715 = vunpack.c.l.b16 %v401
      %v716 = vunpack.c.h.b16 %v401
      %v717 = vunpack.c.l.b16 %v402
      %v718 = vunpack.c.l.b16 %v403
      %v719 = vunpack.c.h.b16 %v403
      %v720 = vunpack.c.l.b16 %v404
      %v721 = vunpack.c.h.b16 %v404
      %v722 = vunpack.c.l.b16 %v405
      %v723 = vunpack.c.l.b16 %v406
      %v724 = vunpack.c.h.b16 %v406
      %v725 = vunpack.c.l.b16 %v407
      %v726 = vunpack.c.h.b16 %v407
      %v727 = vunpack.c.l.b16 %v408
      %v728 = vunpack.c.l.b16 %v409
      %v729 = vunpack.c.h.b16 %v409
      %v730 = vunpack.c.l.b16 %v410
      %v731 = vunpack.c.h.b16 %v410
      %v732 = vunpack.c.l.b16 %v411
      %v733 = vunpack.c.l.b16 %v412
      %v734 = vunpack.c.h.b16 %v412
      %v735 = vunpack.c.l.b16 %v413
      %v736 = vunpack.c.h.b16 %v413
      %v737 = vunpack.c.l.b16 %v414
      %v738 = vunpack.c.l.b16 %v415
      %v739 = vunpack.c.h.b16 %v415
      %v740 = vunpack.c.l.b16 %v416
      %v741 = vunpack.c.h.b16 %v416
      %v742 = vunpack.c.l.b16 %v417
      %v743 = vunpack.c.l.b16 %v418
      %v744 = vunpack.c.h.b16 %v418
      %v745 = vunpack.c.l.b16 %v419
      %v746 = vunpack.c.h.b16 %v419
      %v747 = vunpack.c.l.b16 %v420
      %v748 = vunpack.c.l.b16 %v421
      %v749 = vunpack.c.h.b16 %v421
      %v750 = vunpack.c.l.b16 %v422
      %v751 = vunpack.c.h.b16 %v422
      %v752 = vunpack.c.l.b16 %v423
      %v753 = vunpack.c.l.b16 %v424
      %v754 = vunpack.c.h.b16 %v424
      %v755 = vunpack.c.l.b16 %v425
      %v756 = vunpack.c.h.b16 %v425
      %v757 = vunpack.c.l.b16 %v426
      %v758 = vunpack.c.l.b16 %v427
      %v759 = vunpack.c.h.b16 %v427
      %v760 = vunpack.c.l.b16 %v428
      %v761 = vunpack.c.h.b16 %v428
      %v762 = vunpack.c.l.b16 %v429
      %v763 = vunpack.c.l.b16 %v430
      %v764 = vunpack.c.h.b16 %v430
      %v765 = vunpack.c.l.b16 %v431
      %v766 = vunpack.c.h.b16 %v431
      %v767 = vunpack.c.l.b16 %v432
      %v768 = vunpack.c.l.b16 %v433
      %v769 = vunpack.c.h.b16 %v433
      %v770 = vunpack.c.l.b16 %v434
      %v771 = vunpack.c.h.b16 %v434
      %v772 = vunpack.c.l.b16 %v435
      %v773 = vunpack.c.l.b16 %v436
      %v774 = vunpack.c.h.b16 %v436
      %v775 = vunpack.c.l.b16 %v437
      %v776 = vunpack.c.h.b16 %v437
      %v777 = vunpack.c.l.b16 %v438
      %v778 = vunpack.c.l.b16 %v439
      %v779 = vunpack.c.h.b16 %v439
      %v780 = vunpack.c.l.b16 %v440
      %v781 = vunpack.c.h.b16 %v440
      %v782 = vunpack.c.l.b16 %v441
      %v783 = vunpack.c.l.b16 %v442
      %v784 = vunpack.c.h.b16 %v442
      %v785 = vunpack.c.l.b16 %v443
      %v786 = vunpack.c.h.b16 %v443
      %v787 = vunpack.c.l.b16 %v444
      %v788 = vunpack.c.l.b16 %v445
      %v789 = vunpack.c.h.b16 %v445
      %v790 = vunpack.c.l.b16 %v446
      %v791 = vunpack.c.h.b16 %v446
      %v792 = vunpack.c.l.b16 %v447
      %v793 = vunpack.c.l.b16 %v448
      %v794 = vunpack.c.h.b16 %v448
      %v795 = vunpack.c.l.b16 %v449
      %v796 = vunpack.c.h.b16 %v449
      %v797 = vunpack.c.l.b16 %v450
      %v798 = vunpack.c.l.b16 %v451
      %v799 = vunpack.c.h.b16 %v451
      %v800 = vunpack.c.l.b16 %v452
      %v801 = vunpack.c.h.b16 %v452
      %v802 = vunpack.c.l.b16 %v453
      %v803 = vunpack.c.l.b16 %v454
      %v804 = vunpack.c.h.b16 %v454
      %v805 = vunpack.c.l.b16 %v455
      %v806 = vunpack.c.h.b16 %v455
      %v807 = vunpack.c.l.b16 %v456
      %v808 = vunpack.c.l.b16 %v457
      %v809 = vunpack.c.h.b16 %v457
      %v810 = vunpack.c.l.b16 %v458
      %v811 = vunpack.c.h.b16 %v458
      %v812 = vunpack.c.l.b16 %v459
      %v813 = vunpack.c.l.b16 %v460
      %v814 = vunpack.c.h.b16 %v460
      %v815 = vunpack.c.l.b16 %v461
      %v816 = vunpack.c.h.b16 %v461
      %v817 = vunpack.c.l.b16 %v462
      %v818 = vunpack.c.l.b16 %v463
      %v819 = vunpack.c.h.b16 %v463
      %v820 = vunpack.c.l.b16 %v464
      %v821 = vunpack.c.h.b16 %v464
      %v822 = vunpack.c.l.b16 %v465
      %v823 = vunpack.c.l.b16 %v466
      %v824 = vunpack.c.h.b16 %v466
      %v825 = vunpack.c.l.b16 %v467
      %v826 = vunpack.c.h.b16 %v467
      %v827 = vunpack.c.l.b16 %v468
      %v828 = vunpack.c.l.b16 %v469
      %v829 = vunpack.c.h.b16 %v469
      %v830 = vunpack.c.l.b16 %v470
      %v831 = vunpack.c.h.b16 %v470
      %v832 = vunpack.c.l.b16 %v471
      %v833 = vunpack.c.l.b16 %v472
      %v834 = vunpack.c.h.b16 %v472
      %v835 = vunpack.c.l.b16 %v473
      %v836 = vunpack.c.h.b16 %v473
      %v837 = vunpack.c.l.b16 %v474
      %v838 = vunpack.c.l.b16 %v475
      %v839 = vunpack.c.h.b16 %v475
      %v840 = vunpack.c.l.b16 %v476
      %v841 = vunpack.c.h.b16 %v476
      %v842 = vunpack.c.l.b16 %v477
      %v843 = vunpack.c.l.b16 %v478
      %v844 = vunpack.c.h.b16 %v478
      %v845 = vunpack.c.l.b16 %v479
      %v846 = vunpack.c.h.b16 %v479
      %v847 = vunpack.c.l.b16 %v480
      %v848 = vpack.c.b16 %v633, %v628
      %v849 = vpack.c.b16 %v634, %v629
      %v850 = vpack.c.b16 %v635, %v630
      %v851 = vpack.c.b16 %v636, %v631
      %v852 = vpack.c.b16 %v637, %v632
      %v853 = vpack.c.b16 %v643, %v638
      %v854 = vpack.c.b16 %v644, %v639
      %v855 = vpack.c.b16 %v645, %v640
      %v856 = vpack.c.b16 %v646, %v641
      %v857 = vpack.c.b16 %v647, %v642
      %v858 = vpack.c.b16 %v653, %v648
      %v859 = vpack.c.b16 %v654, %v649
      %v860 = vpack.c.b16 %v655, %v650
      %v861 = vpack.c.b16 %v656, %v651
      %v862 = vpack.c.b16 %v657, %v652
      %v863 = vpack.c.b16 %v663, %v658
      %v864 = vpack.c.b16 %v664, %v659
      %v865 = vpack.c.b16 %v665, %v660
      %v866 = vpack.c.b16 %v666, %v661
      %v867 = vpack.c.b16 %v667, %v662
      %v868 = vpack.c.b16 %v673, %v668
      %v869 = vpack.c.b16 %v674, %v669
      %v870 = vpack.c.b16 %v675, %v670
      %v871 = vpack.c.b16 %v676, %v671
      %v872 = vpack.c.b16 %v677, %v672
      %v873 = vpack.c.b16 %v683, %v678
      %v874 = vpack.c.b16 %v684, %v679
      %v875 = vpack.c.b16 %v685, %v680
      %v876 = vpack.c.b16 %v686, %v681
      %v877 = vpack.c.b16 %v687, %v682
      %v878 = vpack.c.b16 %v693, %v688
      %v879 = vpack.c.b16 %v694, %v689
      %v880 = vpack.c.b16 %v695, %v690
      %v881 = vpack.c.b16 %v696, %v691
      %v882 = vpack.c.b16 %v697, %v692
      %v883 = vpack.c.b16 %v703, %v698
      %v884 = vpack.c.b16 %v704, %v699
      %v885 = vpack.c.b16 %v705, %v700
      %v886 = vpack.c.b16 %v706, %v701
      %v887 = vpack.c.b16 %v707, %v702
      %v888 = vpack.c.b16 %v713, %v708
      %v889 = vpack.c.b16 %v714, %v709
      %v890 = vpack.c.b16 %v715, %v710
      %v891 = vpack.c.b16 %v716, %v711
      %v892 = vpack.c.b16 %v717, %v712
      %v893 = vpack.c.b16 %v723, %v718
      %v894 = vpack.c.b16 %v724, %v719
      %v895 = vpack.c.b16 %v725, %v720
      %v896 = vpack.c.b16 %v726, %v721
      %v897 = vpack.c.b16 %v727, %v722
      %v898 = vpack.c.b16 %v733, %v728
      %v899 = vpack.c.b16 %v734, %v729
      %v900 = vpack.c.b16 %v735, %v730
      %v901 = vpack.c.b16 %v736, %v731
      %v902 = vpack.c.b16 %v737, %v732
      %v903 = vpack.c.b16 %v743, %v738
      %v904 = vpack.c.b16 %v744, %v739
      %v905 = vpack.c.b16 %v745, %v740
      %v906 = vpack.c.b16 %v746, %v741
      %v907 = vpack.c.b16 %v747, %v742
      %v908 = vpack.c.b16 %v753, %v748
      %v909 = vpack.c.b16 %v754, %v749
      %v910 = vpack.c.b16 %v755, %v750
      %v911 = vpack.c.b16 %v756, %v751
      %v912 = vpack.c.b16 %v757, %v752
      %v913 = vpack.c.b16 %v763, %v758
      %v914 = vpack.c.b16 %v764, %v759
      %v915 = vpack.c.b16 %v765, %v760
      %v916 = vpack.c.b16 %v766, %v761
      %v917 = vpack.c.b16 %v767, %v762
      %v918 = vpack.c.b16 %v773, %v768
      %v919 = vpack.c.b16 %v774, %v769
      %v920 = vpack.c.b16 %v775, %v770
      %v921 = vpack.c.b16 %v776, %v771
      %v922 = vpack.c.b16 %v777, %v772
      %v923 = vpack.c.b16 %v783, %v778
      %v924 = vpack.c.b16 %v784, %v779
      %v925 = vpack.c.b16 %v785, %v780
      %v926 = vpack.c.b16 %v786, %v781
      %v927 = vpack.c.b16 %v787, %v782
      %v928 = vpack.c.b16 %v793, %v788
      %v929 = vpack.c.b16 %v794, %v789
      %v930 = vpack.c.b16 %v795, %v790
      %v931 = vpack.c.b16 %v796, %v791
      %v932 = vpack.c.b16 %v797, %v792
      %v933 = vpack.c.b16 %v803, %v798
      %v934 = vpack.c.b16 %v804, %v799
      %v935 = vpack.c.b16 %v805, %v800
      %v936 = vpack.c.b16 %v806, %v801
      %v937 = vpack.c.b16 %v807, %v802
      %v938 = vpack.c.b16 %v813, %v808
      %v939 = vpack.c.b16 %v814, %v809
      %v940 = vpack.c.b16 %v815, %v810
      %v941 = vpack.c.b16 %v816, %v811
      %v942 = vpack.c.b16 %v817, %v812
      %v943 = vpack.c.b16 %v823, %v818
      %v944 = vpack.c.b16 %v824, %v819
      %v945 = vpack.c.b16 %v825, %v820
      %v946 = vpack.c.b16 %v826, %v821
      %v947 = vpack.c.b16 %v827, %v822
      %v948 = vpack.c.b16 %v833, %v828
      %v949 = vpack.c.b16 %v834, %v829
      %v950 = vpack.c.b16 %v835, %v830
      %v951 = vpack.c.b16 %v836, %v831
      %v952 = vpack.c.b16 %v837, %v832
      %v953 = vpack.c.b16 %v843, %v838
      %v954 = vpack.c.b16 %v844, %v839
      %v955 = vpack.c.b16 %v845, %v840
      %v956 = vpack.c.b16 %v846, %v841
      %v957 = vpack.c.b16 %v847, %v842
      %vm1063 = vcmask 769024
      %v1065 = vsel %vm1063, %v493, 0
      %vm1067 = vcmask 1046528
      %v1069 = vsel %vm1067, %v953, 0
      %v1072 = vsel %vm1067, %v954, 0
      %v1075 = vsel %vm1067, %v955, 0
      %v1078 = vsel %vm1067, %v956, 0
      %v1081 = vsel %vm1067, %v957, 0
      %1083 = vmatprep.subr.bf16.mxu0 %v884
      %1084 = vmatpush1.bf16.msra.mxu0 %v883
      %1085 = vmatprep.subr.bf16.mxu0 %v879
      %1086 = vmatpush1.bf16.msra.mxu0 %v878
      %1087 = vmatprep.subr.bf16.mxu0 %v874
      %1088 = vmatpush1.bf16.msra.mxu0 %v873
      %1089 = vmatprep.subr.bf16.mxu0 %v869
      %1090 = vmatpush1.bf16.msra.mxu0 %v868
      %1091 = vmatprep.subr.bf16.mxu0 %v864
      %1092 = vmatpush1.bf16.msra.mxu0 %v863
      %1093 = vmatprep.subr.bf16.mxu0 %v859
      %1094 = vmatpush1.bf16.msra.mxu0 %v858
      %1095 = vmatprep.subr.bf16.mxu0 %v854
      %1096 = vmatpush1.bf16.msra.mxu0 %v853
      %1097 = vmatprep.subr.bf16.mxu0 %v849
      %1098 = vmatpush1.bf16.msra.mxu0 %v848
      %1099 = vmatprep.subr.bf16.mxu0 %v924
      %1100 = vmatpush2.bf16.msra.mxu0 %v923
      %1101 = vmatprep.subr.bf16.mxu0 %v919
      %1102 = vmatpush2.bf16.msra.mxu0 %v918
      %1103 = vmatprep.subr.bf16.mxu0 %v914
      %1104 = vmatpush2.bf16.msra.mxu0 %v913
      %1105 = vmatprep.subr.bf16.mxu0 %v909
      %1106 = vmatpush2.bf16.msra.mxu0 %v908
      %1107 = vmatprep.subr.bf16.mxu0 %v904
      %1108 = vmatpush2.bf16.msra.mxu0 %v903
      %1109 = vmatprep.subr.bf16.mxu0 %v899
      %1110 = vmatpush2.bf16.msra.mxu0 %v898
      %1111 = vmatprep.subr.bf16.mxu0 %v894
      %1112 = vmatpush2.bf16.msra.mxu0 %v893
      %1113 = vmatprep.subr.bf16.mxu0 %v889
      %1114 = vmatpush2.bf16.msra.mxu0 %v888
      %1115 = vmatprep.mubr.bf16.mxu0 %v492
      %1116 = vmatmul.mubr.bf16.gmra.mxu0 %v491
      %v1117 = vpop.f32.mrf.mxu0
      %v1118 = vadd.f32 0.0, %v1117
      %v1119 = vpop.f32.mrf.mxu0
      %v1120 = vadd.f32 0.0, %v1119
      %v1121 = vpop.f32.mrf.mxu0
      %v1122 = vadd.f32 0.0, %v1121
      %v1123 = vpop.f32.mrf.mxu0
      %v1124 = vadd.f32 0.0, %v1123
      %1125 = vdwg.mxu0
      %1126 = vmatprep.subr.bf16.mxu0 0
      %1127 = vmatpush1.bf16.msra.mxu0 0
      %1128 = vmatprep.subr.bf16.mxu0 0
      %1129 = vmatpush1.bf16.msra.mxu0 0
      %1130 = vmatprep.subr.bf16.mxu0 %v1072
      %1131 = vmatpush1.bf16.msra.mxu0 %v1069
      %1132 = vmatprep.subr.bf16.mxu0 %v949
      %1133 = vmatpush1.bf16.msra.mxu0 %v948
      %1134 = vmatprep.subr.bf16.mxu0 %v944
      %1135 = vmatpush1.bf16.msra.mxu0 %v943
      %1136 = vmatprep.subr.bf16.mxu0 %v939
      %1137 = vmatpush1.bf16.msra.mxu0 %v938
      %1138 = vmatprep.subr.bf16.mxu0 %v934
      %1139 = vmatpush1.bf16.msra.mxu0 %v933
      %1140 = vmatprep.subr.bf16.mxu0 %v929
      %1141 = vmatpush1.bf16.msra.mxu0 %v928
      %1142 = vmatprep.subr.bf16.mxu0 0
      %1143 = vmatpush2.bf16.msra.mxu0 0
      %1144 = vmatprep.subr.bf16.mxu0 0
      %1145 = vmatpush2.bf16.msra.mxu0 0
      %1146 = vmatprep.subr.bf16.mxu0 0
      %1147 = vmatpush2.bf16.msra.mxu0 0
      %1148 = vmatprep.subr.bf16.mxu0 0
      %1149 = vmatpush2.bf16.msra.mxu0 0
      %1150 = vmatprep.subr.bf16.mxu0 0
      %1151 = vmatpush2.bf16.msra.mxu0 0
      %1152 = vmatprep.subr.bf16.mxu0 0
      %1153 = vmatpush2.bf16.msra.mxu0 0
      %1154 = vmatprep.subr.bf16.mxu0 0
      %1155 = vmatpush2.bf16.msra.mxu0 0
      %1156 = vmatprep.subr.bf16.mxu0 0
      %1157 = vmatpush2.bf16.msra.mxu0 0
      %1158 = vmatprep.mubr.bf16.mxu0 0
      %1159 = vmatmul.mubr.bf16.gmra.mxu0 %v1065
      %v1160 = vpop.f32.mrf.mxu0
      %v1161 = vadd.f32 %v1118, %v1160
      %v1162 = vpop.f32.mrf.mxu0
      %v1163 = vadd.f32 %v1120, %v1162
      %v1164 = vpop.f32.mrf.mxu0
      %v1165 = vadd.f32 %v1122, %v1164
      %v1166 = vpop.f32.mrf.mxu0
      %v1167 = vadd.f32 %v1124, %v1166
      %1168 = vdwg.mxu0
      %1169 = vmatprep.subr.bf16.mxu0 %v886
      %1170 = vmatpush1.bf16.msra.mxu0 %v885
      %1171 = vmatprep.subr.bf16.mxu0 %v881
      %1172 = vmatpush1.bf16.msra.mxu0 %v880
      %1173 = vmatprep.subr.bf16.mxu0 %v876
      %1174 = vmatpush1.bf16.msra.mxu0 %v875
      %1175 = vmatprep.subr.bf16.mxu0 %v871
      %1176 = vmatpush1.bf16.msra.mxu0 %v870
      %1177 = vmatprep.subr.bf16.mxu0 %v866
      %1178 = vmatpush1.bf16.msra.mxu0 %v865
      %1179 = vmatprep.subr.bf16.mxu0 %v861
      %1180 = vmatpush1.bf16.msra.mxu0 %v860
      %1181 = vmatprep.subr.bf16.mxu0 %v856
      %1182 = vmatpush1.bf16.msra.mxu0 %v855
      %1183 = vmatprep.subr.bf16.mxu0 %v851
      %1184 = vmatpush1.bf16.msra.mxu0 %v850
      %1185 = vmatprep.subr.bf16.mxu0 %v926
      %1186 = vmatpush2.bf16.msra.mxu0 %v925
      %1187 = vmatprep.subr.bf16.mxu0 %v921
      %1188 = vmatpush2.bf16.msra.mxu0 %v920
      %1189 = vmatprep.subr.bf16.mxu0 %v916
      %1190 = vmatpush2.bf16.msra.mxu0 %v915
      %1191 = vmatprep.subr.bf16.mxu0 %v911
      %1192 = vmatpush2.bf16.msra.mxu0 %v910
      %1193 = vmatprep.subr.bf16.mxu0 %v906
      %1194 = vmatpush2.bf16.msra.mxu0 %v905
      %1195 = vmatprep.subr.bf16.mxu0 %v901
      %1196 = vmatpush2.bf16.msra.mxu0 %v900
      %1197 = vmatprep.subr.bf16.mxu0 %v896
      %1198 = vmatpush2.bf16.msra.mxu0 %v895
      %1199 = vmatprep.subr.bf16.mxu0 %v891
      %1200 = vmatpush2.bf16.msra.mxu0 %v890
      %1201 = vmatprep.mubr.bf16.mxu0 %v492
      %1202 = vmatmul.mubr.bf16.gmra.mxu0 %v491
      %v1203 = vpop.f32.mrf.mxu0
      %v1204 = vadd.f32 0.0, %v1203
      %v1205 = vpop.f32.mrf.mxu0
      %v1206 = vadd.f32 0.0, %v1205
      %v1207 = vpop.f32.mrf.mxu0
      %v1208 = vadd.f32 0.0, %v1207
      %v1209 = vpop.f32.mrf.mxu0
      %v1210 = vadd.f32 0.0, %v1209
      %1211 = vdwg.mxu0
      %1212 = vmatprep.subr.bf16.mxu0 0
      %1213 = vmatpush1.bf16.msra.mxu0 0
      %1214 = vmatprep.subr.bf16.mxu0 0
      %1215 = vmatpush1.bf16.msra.mxu0 0
      %1216 = vmatprep.subr.bf16.mxu0 %v1078
      %1217 = vmatpush1.bf16.msra.mxu0 %v1075
      %1218 = vmatprep.subr.bf16.mxu0 %v951
      %1219 = vmatpush1.bf16.msra.mxu0 %v950
      %1220 = vmatprep.subr.bf16.mxu0 %v946
      %1221 = vmatpush1.bf16.msra.mxu0 %v945
      %1222 = vmatprep.subr.bf16.mxu0 %v941
      %1223 = vmatpush1.bf16.msra.mxu0 %v940
      %1224 = vmatprep.subr.bf16.mxu0 %v936
      %1225 = vmatpush1.bf16.msra.mxu0 %v935
      %1226 = vmatprep.subr.bf16.mxu0 %v931
      %1227 = vmatpush1.bf16.msra.mxu0 %v930
      %1228 = vmatprep.subr.bf16.mxu0 0
      %1229 = vmatpush2.bf16.msra.mxu0 0
      %1230 = vmatprep.subr.bf16.mxu0 0
      %1231 = vmatpush2.bf16.msra.mxu0 0
      %1232 = vmatprep.subr.bf16.mxu0 0
      %1233 = vmatpush2.bf16.msra.mxu0 0
      %1234 = vmatprep.subr.bf16.mxu0 0
      %1235 = vmatpush2.bf16.msra.mxu0 0
      %1236 = vmatprep.subr.bf16.mxu0 0
      %1237 = vmatpush2.bf16.msra.mxu0 0
      %1238 = vmatprep.subr.bf16.mxu0 0
      %1239 = vmatpush2.bf16.msra.mxu0 0
      %1240 = vmatprep.subr.bf16.mxu0 0
      %1241 = vmatpush2.bf16.msra.mxu0 0
      %1242 = vmatprep.subr.bf16.mxu0 0
      %1243 = vmatpush2.bf16.msra.mxu0 0
      %1244 = vmatprep.mubr.bf16.mxu0 0
      %1245 = vmatmul.mubr.bf16.gmra.mxu0 %v1065
      %v1246 = vpop.f32.mrf.mxu0
      %v1247 = vadd.f32 %v1204, %v1246
      %v1248 = vpop.f32.mrf.mxu0
      %v1249 = vadd.f32 %v1206, %v1248
      %v1250 = vpop.f32.mrf.mxu0
      %v1251 = vadd.f32 %v1208, %v1250
      %v1252 = vpop.f32.mrf.mxu0
      %v1253 = vadd.f32 %v1210, %v1252
      %1254 = vdwg.mxu0
      %1255 = vmatprep.subr.bf16.mxu0 0
      %1256 = vmatpush1.bf16.msra.mxu0 %v887
      %1257 = vmatprep.subr.bf16.mxu0 0
      %1258 = vmatpush1.bf16.msra.mxu0 %v882
      %1259 = vmatprep.subr.bf16.mxu0 0
      %1260 = vmatpush1.bf16.msra.mxu0 %v877
      %1261 = vmatprep.subr.bf16.mxu0 0
      %1262 = vmatpush1.bf16.msra.mxu0 %v872
      %1263 = vmatprep.subr.bf16.mxu0 0
      %1264 = vmatpush1.bf16.msra.mxu0 %v867
      %1265 = vmatprep.subr.bf16.mxu0 0
      %1266 = vmatpush1.bf16.msra.mxu0 %v862
      %1267 = vmatprep.subr.bf16.mxu0 0
      %1268 = vmatpush1.bf16.msra.mxu0 %v857
      %1269 = vmatprep.subr.bf16.mxu0 0
      %1270 = vmatpush1.bf16.msra.mxu0 %v852
      %1271 = vmatprep.subr.bf16.mxu0 0
      %1272 = vmatpush2.bf16.msra.mxu0 %v927
      %1273 = vmatprep.subr.bf16.mxu0 0
      %1274 = vmatpush2.bf16.msra.mxu0 %v922
      %1275 = vmatprep.subr.bf16.mxu0 0
      %1276 = vmatpush2.bf16.msra.mxu0 %v917
      %1277 = vmatprep.subr.bf16.mxu0 0
      %1278 = vmatpush2.bf16.msra.mxu0 %v912
      %1279 = vmatprep.subr.bf16.mxu0 0
      %1280 = vmatpush2.bf16.msra.mxu0 %v907
      %1281 = vmatprep.subr.bf16.mxu0 0
      %1282 = vmatpush2.bf16.msra.mxu0 %v902
      %1283 = vmatprep.subr.bf16.mxu0 0
      %1284 = vmatpush2.bf16.msra.mxu0 %v897
      %1285 = vmatprep.subr.bf16.mxu0 0
      %1286 = vmatpush2.bf16.msra.mxu0 %v892
      %1287 = vmatprep.mubr.bf16.mxu0 %v492
      %1288 = vmatmul.mubr.bf16.gmra.mxu0 %v491
      %v1289 = vpop.f32.mrf.mxu0
      %v1290 = vadd.f32 0.0, %v1289
      %v1291 = vpop.f32.mrf.mxu0
      %v1292 = vpop.f32.mrf.mxu0
      %v1293 = vadd.f32 0.0, %v1292
      %v1294 = vpop.f32.mrf.mxu0
      %1295 = vdwg.mxu0
      %1296 = vmatprep.subr.bf16.mxu0 0
      %1297 = vmatpush1.bf16.msra.mxu0 0
      %1298 = vmatprep.subr.bf16.mxu0 0
      %1299 = vmatpush1.bf16.msra.mxu0 0
      %1300 = vmatprep.subr.bf16.mxu0 0
      %1301 = vmatpush1.bf16.msra.mxu0 %v1081
      %1302 = vmatprep.subr.bf16.mxu0 0
      %1303 = vmatpush1.bf16.msra.mxu0 %v952
      %1304 = vmatprep.subr.bf16.mxu0 0
      %1305 = vmatpush1.bf16.msra.mxu0 %v947
      %1306 = vmatprep.subr.bf16.mxu0 0
      %1307 = vmatpush1.bf16.msra.mxu0 %v942
      %1308 = vmatprep.subr.bf16.mxu0 0
      %1309 = vmatpush1.bf16.msra.mxu0 %v937
      %1310 = vmatprep.subr.bf16.mxu0 0
      %1311 = vmatpush1.bf16.msra.mxu0 %v932
      %1312 = vmatprep.subr.bf16.mxu0 0
      %1313 = vmatpush2.bf16.msra.mxu0 0
      %1314 = vmatprep.subr.bf16.mxu0 0
      %1315 = vmatpush2.bf16.msra.mxu0 0
      %1316 = vmatprep.subr.bf16.mxu0 0
      %1317 = vmatpush2.bf16.msra.mxu0 0
      %1318 = vmatprep.subr.bf16.mxu0 0
      %1319 = vmatpush2.bf16.msra.mxu0 0
      %1320 = vmatprep.subr.bf16.mxu0 0
      %1321 = vmatpush2.bf16.msra.mxu0 0
      %1322 = vmatprep.subr.bf16.mxu0 0
      %1323 = vmatpush2.bf16.msra.mxu0 0
      %1324 = vmatprep.subr.bf16.mxu0 0
      %1325 = vmatpush2.bf16.msra.mxu0 0
      %1326 = vmatprep.subr.bf16.mxu0 0
      %1327 = vmatpush2.bf16.msra.mxu0 0
      %1328 = vmatprep.mubr.bf16.mxu0 0
      %1329 = vmatmul.mubr.bf16.gmra.mxu0 %v1065
      %v1330 = vpop.f32.mrf.mxu0
      %v1331 = vadd.f32 %v1290, %v1330
      %v1332 = vpop.f32.mrf.mxu0
      %v1333 = vpop.f32.mrf.mxu0
      %v1334 = vadd.f32 %v1293, %v1333
      %v1335 = vpop.f32.mrf.mxu0
      %1336 = vdwg.mxu0
      %v1339 = vunpack.c.l.b16 %v331
      %v1340 = vunpack.c.l.b16 %v332
      %v1341 = vpack.c.b16 %v1340, %v1339
      %v1354 = vunpack.c.l.b16 %v337
      %v1355 = vunpack.c.h.b16 %v337
      %v1356 = vunpack.c.l.b16 %v338
      %v1357 = vunpack.c.h.b16 %v338
      %v1358 = vunpack.c.l.b16 %v339
      %v1359 = vunpack.c.l.b16 %v340
      %v1360 = vunpack.c.h.b16 %v340
      %v1361 = vunpack.c.l.b16 %v341
      %v1362 = vunpack.c.h.b16 %v341
      %v1363 = vunpack.c.l.b16 %v342
      %v1364 = vunpack.c.l.b16 %v343
      %v1365 = vunpack.c.h.b16 %v343
      %v1366 = vunpack.c.l.b16 %v344
      %v1367 = vunpack.c.h.b16 %v344
      %v1368 = vunpack.c.l.b16 %v345
      %v1369 = vunpack.c.l.b16 %v346
      %v1370 = vunpack.c.h.b16 %v346
      %v1371 = vunpack.c.l.b16 %v347
      %v1372 = vunpack.c.h.b16 %v347
      %v1373 = vunpack.c.l.b16 %v348
      %v1374 = vpack.c.b16 %v1359, %v1354
      %v1375 = vpack.c.b16 %v1360, %v1355
      %v1376 = vpack.c.b16 %v1361, %v1356
      %v1377 = vpack.c.b16 %v1362, %v1357
      %v1378 = vpack.c.b16 %v1363, %v1358
      %v1379 = vpack.c.b16 %v1369, %v1364
      %v1380 = vpack.c.b16 %v1370, %v1365
      %v1381 = vpack.c.b16 %v1371, %v1366
      %v1382 = vpack.c.b16 %v1372, %v1367
      %v1383 = vpack.c.b16 %v1373, %v1368
      %vm1394 = vcmask 261120
      %v1396 = vsel %vm1394, %v1341, 0
      %1398 = vmatprep.subr.bf16.mxu0 0
      %1399 = vmatpush1.bf16.msra.mxu0 0
      %1400 = vmatprep.subr.bf16.mxu0 0
      %1401 = vmatpush1.bf16.msra.mxu0 0
      %1402 = vmatprep.subr.bf16.mxu0 0
      %1403 = vmatpush1.bf16.msra.mxu0 0
      %1404 = vmatprep.subr.bf16.mxu0 0
      %1405 = vmatpush1.bf16.msra.mxu0 0
      %1406 = vmatprep.subr.bf16.mxu0 0
      %1407 = vmatpush1.bf16.msra.mxu0 0
      %1408 = vmatprep.subr.bf16.mxu0 0
      %1409 = vmatpush1.bf16.msra.mxu0 0
      %1410 = vmatprep.subr.bf16.mxu0 %v1380
      %1411 = vmatpush1.bf16.msra.mxu0 %v1379
      %1412 = vmatprep.subr.bf16.mxu0 %v1375
      %1413 = vmatpush1.bf16.msra.mxu0 %v1374
      %1414 = vmatprep.subr.bf16.mxu0 0
      %1415 = vmatpush2.bf16.msra.mxu0 0
      %1416 = vmatprep.subr.bf16.mxu0 0
      %1417 = vmatpush2.bf16.msra.mxu0 0
      %1418 = vmatprep.subr.bf16.mxu0 0
      %1419 = vmatpush2.bf16.msra.mxu0 0
      %1420 = vmatprep.subr.bf16.mxu0 0
      %1421 = vmatpush2.bf16.msra.mxu0 0
      %1422 = vmatprep.subr.bf16.mxu0 0
      %1423 = vmatpush2.bf16.msra.mxu0 0
      %1424 = vmatprep.subr.bf16.mxu0 0
      %1425 = vmatpush2.bf16.msra.mxu0 0
      %1426 = vmatprep.subr.bf16.mxu0 0
      %1427 = vmatpush2.bf16.msra.mxu0 0
      %1428 = vmatprep.subr.bf16.mxu0 0
      %1429 = vmatpush2.bf16.msra.mxu0 0
      %1430 = vmatprep.mubr.bf16.mxu0 0
      %1431 = vmatmul.mubr.bf16.gmra.mxu0 %v1396
      %v1432 = vpop.f32.mrf.mxu0
      %v1433 = vadd.f32 %v1161, %v1432
      %v1434 = vpop.f32.mrf.mxu0
      %v1435 = vadd.f32 %v1163, %v1434
      %v1436 = vpop.f32.mrf.mxu0
      %v1437 = vadd.f32 %v1165, %v1436
      %v1438 = vpop.f32.mrf.mxu0
      %v1439 = vadd.f32 %v1167, %v1438
      %1440 = vdwg.mxu0
      %1441 = vmatprep.subr.bf16.mxu0 0
      %1442 = vmatpush1.bf16.msra.mxu0 0
      %1443 = vmatprep.subr.bf16.mxu0 0
      %1444 = vmatpush1.bf16.msra.mxu0 0
      %1445 = vmatprep.subr.bf16.mxu0 0
      %1446 = vmatpush1.bf16.msra.mxu0 0
      %1447 = vmatprep.subr.bf16.mxu0 0
      %1448 = vmatpush1.bf16.msra.mxu0 0
      %1449 = vmatprep.subr.bf16.mxu0 0
      %1450 = vmatpush1.bf16.msra.mxu0 0
      %1451 = vmatprep.subr.bf16.mxu0 0
      %1452 = vmatpush1.bf16.msra.mxu0 0
      %1453 = vmatprep.subr.bf16.mxu0 %v1382
      %1454 = vmatpush1.bf16.msra.mxu0 %v1381
      %1455 = vmatprep.subr.bf16.mxu0 %v1377
      %1456 = vmatpush1.bf16.msra.mxu0 %v1376
      %1457 = vmatprep.subr.bf16.mxu0 0
      %1458 = vmatpush2.bf16.msra.mxu0 0
      %1459 = vmatprep.subr.bf16.mxu0 0
      %1460 = vmatpush2.bf16.msra.mxu0 0
      %1461 = vmatprep.subr.bf16.mxu0 0
      %1462 = vmatpush2.bf16.msra.mxu0 0
      %1463 = vmatprep.subr.bf16.mxu0 0
      %1464 = vmatpush2.bf16.msra.mxu0 0
      %1465 = vmatprep.subr.bf16.mxu0 0
      %1466 = vmatpush2.bf16.msra.mxu0 0
      %1467 = vmatprep.subr.bf16.mxu0 0
      %1468 = vmatpush2.bf16.msra.mxu0 0
      %1469 = vmatprep.subr.bf16.mxu0 0
      %1470 = vmatpush2.bf16.msra.mxu0 0
      %1471 = vmatprep.subr.bf16.mxu0 0
      %1472 = vmatpush2.bf16.msra.mxu0 0
      %1473 = vmatprep.mubr.bf16.mxu0 0
      %1474 = vmatmul.mubr.bf16.gmra.mxu0 %v1396
      %v1475 = vpop.f32.mrf.mxu0
      %v1476 = vadd.f32 %v1247, %v1475
      %v1477 = vpop.f32.mrf.mxu0
      %v1478 = vadd.f32 %v1249, %v1477
      %v1479 = vpop.f32.mrf.mxu0
      %v1480 = vadd.f32 %v1251, %v1479
      %v1481 = vpop.f32.mrf.mxu0
      %v1482 = vadd.f32 %v1253, %v1481
      %1483 = vdwg.mxu0
      %1484 = vmatprep.subr.bf16.mxu0 0
      %1485 = vmatpush1.bf16.msra.mxu0 0
      %1486 = vmatprep.subr.bf16.mxu0 0
      %1487 = vmatpush1.bf16.msra.mxu0 0
      %1488 = vmatprep.subr.bf16.mxu0 0
      %1489 = vmatpush1.bf16.msra.mxu0 0
      %1490 = vmatprep.subr.bf16.mxu0 0
      %1491 = vmatpush1.bf16.msra.mxu0 0
      %1492 = vmatprep.subr.bf16.mxu0 0
      %1493 = vmatpush1.bf16.msra.mxu0 0
      %1494 = vmatprep.subr.bf16.mxu0 0
      %1495 = vmatpush1.bf16.msra.mxu0 0
      %1496 = vmatprep.subr.bf16.mxu0 0
      %1497 = vmatpush1.bf16.msra.mxu0 %v1383
      %1498 = vmatprep.subr.bf16.mxu0 0
      %1499 = vmatpush1.bf16.msra.mxu0 %v1378
      %1500 = vmatprep.subr.bf16.mxu0 0
      %1501 = vmatpush2.bf16.msra.mxu0 0
      %1502 = vmatprep.subr.bf16.mxu0 0
      %1503 = vmatpush2.bf16.msra.mxu0 0
      %1504 = vmatprep.subr.bf16.mxu0 0
      %1505 = vmatpush2.bf16.msra.mxu0 0
      %1506 = vmatprep.subr.bf16.mxu0 0
      %1507 = vmatpush2.bf16.msra.mxu0 0
      %1508 = vmatprep.subr.bf16.mxu0 0
      %1509 = vmatpush2.bf16.msra.mxu0 0
      %1510 = vmatprep.subr.bf16.mxu0 0
      %1511 = vmatpush2.bf16.msra.mxu0 0
      %1512 = vmatprep.subr.bf16.mxu0 0
      %1513 = vmatpush2.bf16.msra.mxu0 0
      %1514 = vmatprep.subr.bf16.mxu0 0
      %1515 = vmatpush2.bf16.msra.mxu0 0
      %1516 = vmatprep.mubr.bf16.mxu0 0
      %1517 = vmatmul.mubr.bf16.gmra.mxu0 %v1396
      %v1518 = vpop.f32.mrf.mxu0
      %v1519 = vadd.f32 %v1331, %v1518
      %v1520 = vpop.f32.mrf.mxu0
      %v1521 = vpop.f32.mrf.mxu0
      %v1522 = vadd.f32 %v1334, %v1521
      %v1523 = vpop.f32.mrf.mxu0
      %1524 = vdwg.mxu0
      %v1525 = vld [vmem:[%s4] sm:$0x1f]
      %v1527 = vlaneseq
      %v1528 = vshrl.u32 %v1527, 7
      %v1529 = vsub.s32 0, %v1528
      %v1530 = vrot.slane %v1525, %v1529
      %v1531 = vlaneseq
      %v1532 = vshrl.u32 %v1531, 7
      %v1533 = vsub.s32 1, %v1532
      %v1534 = vrot.slane %v1525, %v1533
      %v1535 = vlaneseq
      %v1536 = vshrl.u32 %v1535, 7
      %v1537 = vsub.s32 2, %v1536
      %v1538 = vrot.slane %v1525, %v1537
      %v1539 = vlaneseq
      %v1540 = vshrl.u32 %v1539, 7
      %v1541 = vsub.s32 3, %v1540
      %v1542 = vrot.slane %v1525, %v1541
      %v1543 = vlaneseq
      %v1544 = vshrl.u32 %v1543, 7
      %v1545 = vsub.s32 4, %v1544
      %v1546 = vrot.slane %v1525, %v1545
      %v1552 = vadd.f32 %v1433, %v1530
      %v1553 = vadd.f32 %v1435, %v1534
      %v1554 = vadd.f32 %v1476, %v1538
      %v1555 = vadd.f32 %v1478, %v1542
      %v1556 = vadd.f32 %v1519, %v1546
      %v1557 = vadd.f32 %v1437, %v1530
      %v1558 = vadd.f32 %v1439, %v1534
      %v1559 = vadd.f32 %v1480, %v1538
      %v1560 = vadd.f32 %v1482, %v1542
      %v1561 = vadd.f32 %v1522, %v1546
      %v1562 = vmax.f32 %v1552, 0.0
      %v1563 = vmax.f32 %v1553, 0.0
      %v1564 = vmax.f32 %v1554, 0.0
      %v1565 = vmax.f32 %v1555, 0.0
      %v1566 = vmax.f32 %v1556, 0.0
      %v1567 = vmax.f32 %v1557, 0.0
      %v1568 = vmax.f32 %v1558, 0.0
      %v1569 = vmax.f32 %v1559, 0.0
      %v1570 = vmax.f32 %v1560, 0.0
      %v1571 = vmax.f32 %v1561, 0.0
      %v1572 = vpack.c.bf16 %v1567, %v1562
      %v1573 = vpack.c.bf16 %v1568, %v1563
      %v1574 = vpack.c.bf16 %v1569, %v1564
      %v1575 = vpack.c.bf16 %v1570, %v1565
      %v1576 = vpack.c.bf16 %v1571, %v1566
      %v1577 = vld [vmem:[%s5] sm:$0xf]
      %v1578 = vld [vmem:[%s5 + $0x4] sm:$0xf]
      %v1579 = vld [vmem:[%s5 + $0x8] sm:$0xf]
      %v1580 = vld [vmem:[%s5 + $0xc] sm:$0xf]
      %v1581 = vld [vmem:[%s5 + $0x10] sm:$0xf]
      %v1582 = vld [vmem:[%s5 + $0x14] sm:$0xf]
      %v1583 = vld [vmem:[%s5 + $0x18] sm:$0xf]
      %v1584 = vld [vmem:[%s5 + $0x1c] sm:$0xf]
      %v1585 = vld [vmem:[%s5 + $0x20] sm:$0xf]
      %v1586 = vld [vmem:[%s5 + $0x24] sm:$0xf]
      %v1587 = vld [vmem:[%s5 + $0x28] sm:$0xf]
      %v1588 = vld [vmem:[%s5 + $0x2c] sm:$0xf]
      %v1589 = vld [vmem:[%s5 + $0x30] sm:$0xf]
      %v1590 = vld [vmem:[%s5 + $0x34] sm:$0xf]
      %v1591 = vld [vmem:[%s5 + $0x38] sm:$0xf]
      %v1592 = vld [vmem:[%s5 + $0x3c] sm:$0xf]
      %v1593 = vld [vmem:[%s5 + $0x40] sm:$0xf]
      %v1594 = vld [vmem:[%s5 + $0x44] sm:$0xf]
      %v1595 = vld [vmem:[%s5 + $0x48] sm:$0xf]
      %v1596 = vld [vmem:[%s5 + $0x4c] sm:$0xf]
      %v1597 = vld [vmem:[%s5 + $0x50] sm:$0xf]
      %v1598 = vld [vmem:[%s5 + $0x54] sm:$0xf]
      %v1599 = vld [vmem:[%s5 + $0x58] sm:$0xf]
      %v1600 = vld [vmem:[%s5 + $0x5c] sm:$0xf]
      %v1601 = vld [vmem:[%s5 + $0x60] sm:$0xf]
      %v1602 = vld [vmem:[%s5 + $0x64] sm:$0xf]
      %v1603 = vld [vmem:[%s5 + $0x68] sm:$0xf]
      %v1604 = vld [vmem:[%s5 + $0x6c] sm:$0xf]
      %v1605 = vld [vmem:[%s5 + $0x70] sm:$0xf]
      %v1606 = vld [vmem:[%s5 + $0x74] sm:$0xf]
      %v1607 = vld [vmem:[%s5 + $0x78] sm:$0xf]
      %v1608 = vld [vmem:[%s5 + $0x7c] sm:$0xf]
      %v1609 = vld [vmem:[%s5 + $0x80] sm:$0xf]
      %v1610 = vld [vmem:[%s5 + $0x84] sm:$0xf]
      %v1611 = vld [vmem:[%s5 + $0x88] sm:$0xf]
      %v1612 = vld [vmem:[%s5 + $0x8c] sm:$0xf]
      %v1613 = vld [vmem:[%s5 + $0x90] sm:$0xf]
      %v1614 = vld [vmem:[%s5 + $0x94] sm:$0xf]
      %v1615 = vld [vmem:[%s5 + $0x98] sm:$0xf]
      %v1616 = vld [vmem:[%s5 + $0x9c] sm:$0xf]
      %v1617 = vld [vmem:[%s5 + $0xa0] sm:$0xf]
      %v1618 = vld [vmem:[%s5 + $0xa4] sm:$0xf]
      %v1619 = vld [vmem:[%s5 + $0xa8] sm:$0xf]
      %v1620 = vld [vmem:[%s5 + $0xac] sm:$0xf]
      %v1621 = vld [vmem:[%s5 + $0xb0] sm:$0xf]
      %v1622 = vld [vmem:[%s5 + $0xb4] sm:$0xf]
      %v1623 = vld [vmem:[%s5 + $0xb8] sm:$0xf]
      %v1624 = vld [vmem:[%s5 + $0xbc] sm:$0xf]
      %v1625 = vld [vmem:[%s5 + $0xc0] sm:$0xf]
      %v1626 = vld [vmem:[%s5 + $0xc4] sm:$0xf]
      %v1627 = vld [vmem:[%s5 + $0xc8] sm:$0xf]
      %v1628 = vld [vmem:[%s5 + $0xcc] sm:$0xf]
      %v1629 = vld [vmem:[%s5 + $0xd0] sm:$0xf]
      %v1630 = vld [vmem:[%s5 + $0xd4] sm:$0xf]
      %v1631 = vld [vmem:[%s5 + $0xd8] sm:$0xf]
      %v1632 = vld [vmem:[%s5 + $0xdc] sm:$0xf]
      %v1633 = vld [vmem:[%s5 + $0xe0] sm:$0xf]
      %v1634 = vld [vmem:[%s5 + $0xe4] sm:$0xf]
      %v1635 = vld [vmem:[%s5 + $0xe8] sm:$0xf]
      %v1636 = vld [vmem:[%s5 + $0xec] sm:$0xf]
      %v1637 = vld [vmem:[%s5 + $0xf0] sm:$0xf]
      %v1638 = vld [vmem:[%s5 + $0xf4] sm:$0xf]
      %v1639 = vld [vmem:[%s5 + $0xf8] sm:$0xf]
      %v1640 = vld [vmem:[%s5 + $0xfc] sm:$0xf]
      %v1641 = vld [vmem:[%s5 + $0x100] sm:$0xf]
      %v1642 = vld [vmem:[%s5 + $0x104] sm:$0xf]
      %v1643 = vld [vmem:[%s5 + $0x108] sm:$0xf]
      %v1644 = vld [vmem:[%s5 + $0x10c] sm:$0xf]
      %v1645 = vld [vmem:[%s5 + $0x110] sm:$0xf]
      %v1646 = vld [vmem:[%s5 + $0x114] sm:$0xf]
      %v1647 = vld [vmem:[%s5 + $0x118] sm:$0xf]
      %v1648 = vld [vmem:[%s5 + $0x11c] sm:$0xf]
      %v1649 = vld [vmem:[%s5 + $0x120] sm:$0xf]
      %v1650 = vld [vmem:[%s5 + $0x124] sm:$0xf]
      %v1651 = vld [vmem:[%s5 + $0x128] sm:$0xf]
      %v1652 = vld [vmem:[%s5 + $0x12c] sm:$0xf]
      %v1653 = vld [vmem:[%s5 + $0x130] sm:$0xf]
      %v1654 = vld [vmem:[%s5 + $0x134] sm:$0xf]
      %v1655 = vld [vmem:[%s5 + $0x138] sm:$0xf]
      %v1656 = vld [vmem:[%s5 + $0x13c] sm:$0xf]
      %v1737 = vunpack.c.l.b16 %v1577
      %v1738 = vunpack.c.l.b16 %v1578
      %v1739 = vunpack.c.l.b16 %v1579
      %v1740 = vunpack.c.l.b16 %v1580
      %v1741 = vunpack.c.l.b16 %v1581
      %v1742 = vunpack.c.l.b16 %v1582
      %v1743 = vunpack.c.l.b16 %v1583
      %v1744 = vunpack.c.l.b16 %v1584
      %v1745 = vunpack.c.l.b16 %v1585
      %v1746 = vunpack.c.l.b16 %v1586
      %v1747 = vunpack.c.l.b16 %v1587
      %v1748 = vunpack.c.l.b16 %v1588
      %v1749 = vunpack.c.l.b16 %v1589
      %v1750 = vunpack.c.l.b16 %v1590
      %v1751 = vunpack.c.l.b16 %v1591
      %v1752 = vunpack.c.l.b16 %v1592
      %v1753 = vunpack.c.l.b16 %v1593
      %v1754 = vunpack.c.l.b16 %v1594
      %v1755 = vunpack.c.l.b16 %v1595
      %v1756 = vunpack.c.l.b16 %v1596
      %v1757 = vunpack.c.l.b16 %v1597
      %v1758 = vunpack.c.l.b16 %v1598
      %v1759 = vunpack.c.l.b16 %v1599
      %v1760 = vunpack.c.l.b16 %v1600
      %v1761 = vunpack.c.l.b16 %v1601
      %v1762 = vunpack.c.l.b16 %v1602
      %v1763 = vunpack.c.l.b16 %v1603
      %v1764 = vunpack.c.l.b16 %v1604
      %v1765 = vunpack.c.l.b16 %v1605
      %v1766 = vunpack.c.l.b16 %v1606
      %v1767 = vunpack.c.l.b16 %v1607
      %v1768 = vunpack.c.l.b16 %v1608
      %v1769 = vunpack.c.l.b16 %v1609
      %v1770 = vunpack.c.l.b16 %v1610
      %v1771 = vunpack.c.l.b16 %v1611
      %v1772 = vunpack.c.l.b16 %v1612
      %v1773 = vunpack.c.l.b16 %v1613
      %v1774 = vunpack.c.l.b16 %v1614
      %v1775 = vunpack.c.l.b16 %v1615
      %v1776 = vunpack.c.l.b16 %v1616
      %v1777 = vunpack.c.l.b16 %v1617
      %v1778 = vunpack.c.l.b16 %v1618
      %v1779 = vunpack.c.l.b16 %v1619
      %v1780 = vunpack.c.l.b16 %v1620
      %v1781 = vunpack.c.l.b16 %v1621
      %v1782 = vunpack.c.l.b16 %v1622
      %v1783 = vunpack.c.l.b16 %v1623
      %v1784 = vunpack.c.l.b16 %v1624
      %v1785 = vunpack.c.l.b16 %v1625
      %v1786 = vunpack.c.l.b16 %v1626
      %v1787 = vunpack.c.l.b16 %v1627
      %v1788 = vunpack.c.l.b16 %v1628
      %v1789 = vunpack.c.l.b16 %v1629
      %v1790 = vunpack.c.l.b16 %v1630
      %v1791 = vunpack.c.l.b16 %v1631
      %v1792 = vunpack.c.l.b16 %v1632
      %v1793 = vunpack.c.l.b16 %v1633
      %v1794 = vunpack.c.l.b16 %v1634
      %v1795 = vunpack.c.l.b16 %v1635
      %v1796 = vunpack.c.l.b16 %v1636
      %v1797 = vunpack.c.l.b16 %v1637
      %v1798 = vunpack.c.l.b16 %v1638
      %v1799 = vunpack.c.l.b16 %v1639
      %v1800 = vunpack.c.l.b16 %v1640
      %v1801 = vunpack.c.l.b16 %v1641
      %v1802 = vunpack.c.l.b16 %v1642
      %v1803 = vunpack.c.l.b16 %v1643
      %v1804 = vunpack.c.l.b16 %v1644
      %v1805 = vunpack.c.l.b16 %v1645
      %v1806 = vunpack.c.l.b16 %v1646
      %v1807 = vunpack.c.l.b16 %v1647
      %v1808 = vunpack.c.l.b16 %v1648
      %v1809 = vunpack.c.l.b16 %v1649
      %v1810 = vunpack.c.l.b16 %v1650
      %v1811 = vunpack.c.l.b16 %v1651
      %v1812 = vunpack.c.l.b16 %v1652
      %v1813 = vunpack.c.l.b16 %v1653
      %v1814 = vunpack.c.l.b16 %v1654
      %v1815 = vunpack.c.l.b16 %v1655
      %v1816 = vunpack.c.l.b16 %v1656
      %v1817 = vpack.c.b16 %v1738, %v1737
      %v1818 = vpack.c.b16 %v1740, %v1739
      %v1819 = vpack.c.b16 %v1742, %v1741
      %v1820 = vpack.c.b16 %v1744, %v1743
      %v1821 = vpack.c.b16 %v1746, %v1745
      %v1822 = vpack.c.b16 %v1748, %v1747
      %v1823 = vpack.c.b16 %v1750, %v1749
      %v1824 = vpack.c.b16 %v1752, %v1751
      %v1825 = vpack.c.b16 %v1754, %v1753
      %v1826 = vpack.c.b16 %v1756, %v1755
      %v1827 = vpack.c.b16 %v1758, %v1757
      %v1828 = vpack.c.b16 %v1760, %v1759
      %v1829 = vpack.c.b16 %v1762, %v1761
      %v1830 = vpack.c.b16 %v1764, %v1763
      %v1831 = vpack.c.b16 %v1766, %v1765
      %v1832 = vpack.c.b16 %v1768, %v1767
      %v1833 = vpack.c.b16 %v1770, %v1769
      %v1834 = vpack.c.b16 %v1772, %v1771
      %v1835 = vpack.c.b16 %v1774, %v1773
      %v1836 = vpack.c.b16 %v1776, %v1775
      %v1837 = vpack.c.b16 %v1778, %v1777
      %v1838 = vpack.c.b16 %v1780, %v1779
      %v1839 = vpack.c.b16 %v1782, %v1781
      %v1840 = vpack.c.b16 %v1784, %v1783
      %v1841 = vpack.c.b16 %v1786, %v1785
      %v1842 = vpack.c.b16 %v1788, %v1787
      %v1843 = vpack.c.b16 %v1790, %v1789
      %v1844 = vpack.c.b16 %v1792, %v1791
      %v1845 = vpack.c.b16 %v1794, %v1793
      %v1846 = vpack.c.b16 %v1796, %v1795
      %v1847 = vpack.c.b16 %v1798, %v1797
      %v1848 = vpack.c.b16 %v1800, %v1799
      %v1849 = vpack.c.b16 %v1802, %v1801
      %v1850 = vpack.c.b16 %v1804, %v1803
      %v1851 = vpack.c.b16 %v1806, %v1805
      %v1852 = vpack.c.b16 %v1808, %v1807
      %v1853 = vpack.c.b16 %v1810, %v1809
      %v1854 = vpack.c.b16 %v1812, %v1811
      %v1855 = vpack.c.b16 %v1814, %v1813
      %v1856 = vpack.c.b16 %v1816, %v1815
      %1897 = vmatprep.subr.bf16.mxu0 0
      %1898 = vmatpush1.bf16.msra.mxu0 %v1824
      %1899 = vmatprep.subr.bf16.mxu0 0
      %1900 = vmatpush1.bf16.msra.mxu0 %v1823
      %1901 = vmatprep.subr.bf16.mxu0 0
      %1902 = vmatpush1.bf16.msra.mxu0 %v1822
      %1903 = vmatprep.subr.bf16.mxu0 0
      %1904 = vmatpush1.bf16.msra.mxu0 %v1821
      %1905 = vmatprep.subr.bf16.mxu0 0
      %1906 = vmatpush1.bf16.msra.mxu0 %v1820
      %1907 = vmatprep.subr.bf16.mxu0 0
      %1908 = vmatpush1.bf16.msra.mxu0 %v1819
      %1909 = vmatprep.subr.bf16.mxu0 0
      %1910 = vmatpush1.bf16.msra.mxu0 %v1818
      %1911 = vmatprep.subr.bf16.mxu0 0
      %1912 = vmatpush1.bf16.msra.mxu0 %v1817
      %1913 = vmatprep.subr.bf16.mxu0 0
      %1914 = vmatpush2.bf16.msra.mxu0 %v1832
      %1915 = vmatprep.subr.bf16.mxu0 0
      %1916 = vmatpush2.bf16.msra.mxu0 %v1831
      %1917 = vmatprep.subr.bf16.mxu0 0
      %1918 = vmatpush2.bf16.msra.mxu0 %v1830
      %1919 = vmatprep.subr.bf16.mxu0 0
      %1920 = vmatpush2.bf16.msra.mxu0 %v1829
      %1921 = vmatprep.subr.bf16.mxu0 0
      %1922 = vmatpush2.bf16.msra.mxu0 %v1828
      %1923 = vmatprep.subr.bf16.mxu0 0
      %1924 = vmatpush2.bf16.msra.mxu0 %v1827
      %1925 = vmatprep.subr.bf16.mxu0 0
      %1926 = vmatpush2.bf16.msra.mxu0 %v1826
      %1927 = vmatprep.subr.bf16.mxu0 0
      %1928 = vmatpush2.bf16.msra.mxu0 %v1825
      %1929 = vmatprep.mubr.bf16.mxu0 %v1573
      %1930 = vmatmul.mubr.bf16.gmra.mxu0 %v1572
      %v1931 = vpop.f32.mrf.mxu0
      %v1932 = vadd.f32 0.0, %v1931
      %v1933 = vpop.f32.mrf.mxu0
      %v1934 = vpop.f32.mrf.mxu0
      %v1935 = vadd.f32 0.0, %v1934
      %v1936 = vpop.f32.mrf.mxu0
      %1937 = vdwg.mxu0
      %1938 = vmatprep.subr.bf16.mxu0 0
      %1939 = vmatpush1.bf16.msra.mxu0 %v1840
      %1940 = vmatprep.subr.bf16.mxu0 0
      %1941 = vmatpush1.bf16.msra.mxu0 %v1839
      %1942 = vmatprep.subr.bf16.mxu0 0
      %1943 = vmatpush1.bf16.msra.mxu0 %v1838
      %1944 = vmatprep.subr.bf16.mxu0 0
      %1945 = vmatpush1.bf16.msra.mxu0 %v1837
      %1946 = vmatprep.subr.bf16.mxu0 0
      %1947 = vmatpush1.bf16.msra.mxu0 %v1836
      %1948 = vmatprep.subr.bf16.mxu0 0
      %1949 = vmatpush1.bf16.msra.mxu0 %v1835
      %1950 = vmatprep.subr.bf16.mxu0 0
      %1951 = vmatpush1.bf16.msra.mxu0 %v1834
      %1952 = vmatprep.subr.bf16.mxu0 0
      %1953 = vmatpush1.bf16.msra.mxu0 %v1833
      %1954 = vmatprep.subr.bf16.mxu0 0
      %1955 = vmatpush2.bf16.msra.mxu0 %v1848
      %1956 = vmatprep.subr.bf16.mxu0 0
      %1957 = vmatpush2.bf16.msra.mxu0 %v1847
      %1958 = vmatprep.subr.bf16.mxu0 0
      %1959 = vmatpush2.bf16.msra.mxu0 %v1846
      %1960 = vmatprep.subr.bf16.mxu0 0
      %1961 = vmatpush2.bf16.msra.mxu0 %v1845
      %1962 = vmatprep.subr.bf16.mxu0 0
      %1963 = vmatpush2.bf16.msra.mxu0 %v1844
      %1964 = vmatprep.subr.bf16.mxu0 0
      %1965 = vmatpush2.bf16.msra.mxu0 %v1843
      %1966 = vmatprep.subr.bf16.mxu0 0
      %1967 = vmatpush2.bf16.msra.mxu0 %v1842
      %1968 = vmatprep.subr.bf16.mxu0 0
      %1969 = vmatpush2.bf16.msra.mxu0 %v1841
      %1970 = vmatprep.mubr.bf16.mxu0 %v1575
      %1971 = vmatmul.mubr.bf16.gmra.mxu0 %v1574
      %v1972 = vpop.f32.mrf.mxu0
      %v1973 = vadd.f32 %v1932, %v1972
      %v1974 = vpop.f32.mrf.mxu0
      %v1975 = vpop.f32.mrf.mxu0
      %v1976 = vadd.f32 %v1935, %v1975
      %v1977 = vpop.f32.mrf.mxu0
      %1978 = vdwg.mxu0
      %1979 = vmatprep.subr.bf16.mxu0 0
      %1980 = vmatpush1.bf16.msra.mxu0 %v1856
      %1981 = vmatprep.subr.bf16.mxu0 0
      %1982 = vmatpush1.bf16.msra.mxu0 %v1855
      %1983 = vmatprep.subr.bf16.mxu0 0
      %1984 = vmatpush1.bf16.msra.mxu0 %v1854
      %1985 = vmatprep.subr.bf16.mxu0 0
      %1986 = vmatpush1.bf16.msra.mxu0 %v1853
      %1987 = vmatprep.subr.bf16.mxu0 0
      %1988 = vmatpush1.bf16.msra.mxu0 %v1852
      %1989 = vmatprep.subr.bf16.mxu0 0
      %1990 = vmatpush1.bf16.msra.mxu0 %v1851
      %1991 = vmatprep.subr.bf16.mxu0 0
      %1992 = vmatpush1.bf16.msra.mxu0 %v1850
      %1993 = vmatprep.subr.bf16.mxu0 0
      %1994 = vmatpush1.bf16.msra.mxu0 %v1849
      %1995 = vmatprep.subr.bf16.mxu0 0
      %1996 = vmatpush2.bf16.msra.mxu0 0
      %1997 = vmatprep.subr.bf16.mxu0 0
      %1998 = vmatpush2.bf16.msra.mxu0 0
      %1999 = vmatprep.subr.bf16.mxu0 0
      %2000 = vmatpush2.bf16.msra.mxu0 0
      %2001 = vmatprep.subr.bf16.mxu0 0
      %2002 = vmatpush2.bf16.msra.mxu0 0
      %2003 = vmatprep.subr.bf16.mxu0 0
      %2004 = vmatpush2.bf16.msra.mxu0 0
      %2005 = vmatprep.subr.bf16.mxu0 0
      %2006 = vmatpush2.bf16.msra.mxu0 0
      %2007 = vmatprep.subr.bf16.mxu0 0
      %2008 = vmatpush2.bf16.msra.mxu0 0
      %2009 = vmatprep.subr.bf16.mxu0 0
      %2010 = vmatpush2.bf16.msra.mxu0 0
      %2011 = vmatprep.mubr.bf16.mxu0 0
      %2012 = vmatmul.mubr.bf16.gmra.mxu0 %v1576
      %v2013 = vpop.f32.mrf.mxu0
      %v2014 = vadd.f32 %v1973, %v2013
      %v2015 = vpop.f32.mrf.mxu0
      %v2016 = vpop.f32.mrf.mxu0
      %v2017 = vadd.f32 %v1976, %v2016
      %v2018 = vpop.f32.mrf.mxu0
      %2019 = vdwg.mxu0
      %vm2020 = vcmask 80896
      %v2021 = vsel %vm2020, %v2014, -inf
      %2022 = vmax.xlane.f32.xlu0 %v2021
      %v2023 = vpop.xlane.xlu0 %2022
      %v2024 = vsel %vm2020, %v2017, -inf
      %2025 = vmax.xlane.f32.xlu0 %v2024
      %v2026 = vpop.xlane.xlu0 %2025
      %v2027 = vsub.f32 %v2014, %v2023
      %v2028 = vsub.f32 %v2017, %v2026
      %v2029 = vmul.f32 %v2027, 1.442695
      %v2030 = vpow.pop %v2029
      %v2031 = vmul.f32 %v2028, 1.442695
      %v2032 = vpow.pop %v2031
      %v2033 = vsel %vm2020, %v2030, 0.0
      %2034 = vadd.xlane.f32.xlu0 %v2033
      %v2035 = vpop.xlane.xlu0 %2034
      %v2036 = vsel %vm2020, %v2032, 0.0
      %2037 = vadd.xlane.f32.xlu0 %v2036
      %v2038 = vpop.xlane.xlu0 %2037
      %v2039 = vrcp.pop %v2035
      %v2040 = vrcp.pop %v2038
      %v2041 = vmul.f32 %v2030, %v2039
      %v2042 = vmul.f32 %v2032, %v2040
      %2043 = vst.msk [vmem:[%s328] sm:$0xff] %vm2020, %v2041
      %2044 = vst.msk [vmem:[%s328 + $0x8] sm:$0xff] %vm2020, %v2042
      %s2045 = smul.u32 2, %s22
      %p2046 = scmp.lt.s32.totalorder %s21, 1
      %s2047 = scalar_select %p2046, %s21, 1
      %p2048 = scmp.lt.s32.totalorder %s2045, 1
      %s2049 = scalar_select %p2048, %s2045, 1
      %s2050 = smul.addr %s2047, 2
      %s2051 = sadd.s32 %s2049, %s2050
      %s2052 = smul.addr %s2051, 8
      %s2053 = scalar_lea.vmem %s6, %s2052
      // Predicated region
      $region45: #{_forward_padded.4} parent=43 // pred_check
        %p2054 = pneg %p189
      $region46: #{_forward_padded.4} parent=43 // pred_check_branch
        %2056 = sbr.rel (%p2054) target = $region48
      $region47: #{_forward_padded.4} parent=43 // pred_region
        %s2057 = smul.u32 2, %s22
      $region48: #{_forward_padded.4} parent=43 // pred_fallthru
        _
    $region44: #{_forward_padded.4} parent=5 // pred_fallthru
      _
    %p2058 = scmp.le.s32.totalorder 2, %s12
    // Predicated region
    $region49: #{_forward_padded.4} parent=5 // pred_check
      %p2059 = pneg %p2058
    $region50: #{_forward_padded.4} parent=5 // pred_check_branch
      %2061 = sbr.rel (%p2059) target = $region52
    $region51: #{_forward_padded.4} parent=5 // pred_region
      %s2062 = ssub.s32 %s12, 2
      // Predicated region
      $region53: #{_forward_padded.4} parent=51 // pred_check
        %p2063 = pneg %p195
      $region54: #{_forward_padded.4} parent=51 // pred_check_branch
        %2065 = sbr.rel (%p2063) target = $region56
      $region55: #{_forward_padded.4} parent=51 // pred_region
        %s2066 = smul.u32 2, %s24
        %p2067 = scmp.lt.s32.totalorder %s23, 1
        %s2068 = scalar_select %p2067, %s23, 1
        %p2069 = scmp.lt.s32.totalorder %s2066, 1
        %s2070 = scalar_select %p2069, %s2066, 1
        %s2071 = smul.addr %s2068, 2
        %s2072 = sadd.s32 %s2070, %s2071
        %s2073 = smul.addr %s2072, 8
        %s2074 = scalar_lea.vmem %s6, %s2073
      $region56: #{_forward_padded.4} parent=51 // pred_fallthru
        _
    $region52: #{_forward_padded.4} parent=5 // pred_fallthru
      _
  $region6: #{_forward_padded.4} parent=0 // loop_footer
    %s16 = sadd.s32 1, %s12
  $region7: #{_forward_padded.4} parent=0 // loop_footer_branch
    %11 = sbr.rel target = $region3
  $region8: #{_forward_padded.4} parent=0 // loop_exit
    _

// kernel: _forward_padded.5
$region0: #{_forward_padded.5}
  #allocation0 [shape = 'u32[]', space=smem, size = 0x4, offset = 0x4, fixed_abs, tag = 'smem constant byte address 0x4 - core index']
  #allocation1 [shape = 'u32[144,128]{1,0:T(1,128)}', space=vmem, size = 0x12000, scoped, tag = 'internal scratch']
  %s0 = inlined_call_operand.vmem [shape: bf16[2,16,32], index: 0, kind: input, shape index: {}]
  %s1 = inlined_call_operand.vmem [shape: bf16[2,4,16,32], index: 1, kind: input, shape index: {}]
  %s2 = inlined_call_operand.vmem [shape: bf16[32,32], index: 2, kind: input, shape index: {}]
  %s3 = inlined_call_operand.vmem [shape: f32[1,32], index: 3, kind: input, shape index: {}]
  %s4 = inlined_call_operand.vmem [shape: bf16[32,32], index: 4, kind: input, shape index: {}]
  %s5 = inlined_call_operand.vmem [shape: f32[1,32], index: 5, kind: input, shape index: {}]
  %s6 = inlined_call_operand.vmem [shape: bf16[32,32], index: 6, kind: input, shape index: {}]
  %s7 = inlined_call_operand.vmem [shape: f32[1,32], index: 7, kind: input, shape index: {}]
  %s8 = inlined_call_operand.vmem [shape: bf16[32,32], index: 8, kind: input, shape index: {}]
  %s9 = inlined_call_operand.vmem [shape: f32[1,32], index: 9, kind: input, shape index: {}]
  %s10 = inlined_call_operand.vmem [shape: bf16[32,4], index: 10, kind: input, shape index: {}]
  %s11 = inlined_call_operand.vmem [shape: bf16[4,32], index: 11, kind: input, shape index: {}]
  %s12 = inlined_call_operand.hbm [shape: f32[2,16,32], index: 12, kind: output, shape index: {}]
  %s13 = sld [smem:[#allocation0]]
  $region81: #{_forward_padded.5} parent=0
    _
  %s15 = ssub.s32 1, %s13
  %s16 = scalar_select 0, %s15, %s13
  $region1: #{_forward_padded.5} parent=0
    #allocation2 [shape = 'u8[16384]{0}', space=vmem, size = 0x4000, scoped, tag = 'output window, operand 0']
    #allocation3 [shape = 's32[2]{0}', space=sflag, size = 0x8, scoped, tag = 'scoped memory for _forward_padded.5']
    %17 = vsyncpa [#allocation3], 0
    %s18 = scalar_lea.sflag [#allocation3], 1
    %19 = vsyncpa %s18, 0
    loop: start=0, step=1, limit=4
    $region2: #{_forward_padded.5} parent=1 // loop_pre_header
      _
    $region3: #{_forward_padded.5} parent=1 // loop_header
      %s21 = sphi 0, %s25
      %p22 = scmp.ge.s32.totalorder %s21, 4
      %s28 = sphi 0, %s40
      %s29 = sphi 0, %s36
      %s30 = sphi 0, %s28
      %s31 = sphi 0, %s29
      %s32 = sphi 0, %s30
      %s33 = sphi 0, %s31
      %s45 = sphi 0, %s47
      %s48 = sphi 0, %s45
      %s49 = sphi 0, %s48
      %s65 = sphi 0, %s49
      %s73 = sphi 0, %s75
      %s76 = sphi 0, %s73
      %s77 = sphi 0, %s76
      %s93 = sphi 0, %s77
      %s97 = sphi 0, %s97
      %s99 = sphi 0, %s97
      %s100 = sphi 0, %s99
      %s114 = sphi 0, %s100
      %s118 = sphi 0, %s118
      %s120 = sphi 0, %s118
      %s121 = sphi 0, %s120
      %s135 = sphi 0, %s121
      %s139 = sphi 0, %s139
      %s141 = sphi 0, %s139
      %s142 = sphi 0, %s141
      %s156 = sphi 0, %s142
      %s160 = sphi 0, %s160
      %s162 = sphi 0, %s160
      %s163 = sphi 0, %s162
      %s177 = sphi 0, %s163
      %s181 = sphi 0, %s181
      %s183 = sphi 0, %s181
      %s184 = sphi 0, %s183
      %s198 = sphi 0, %s184
      %s202 = sphi 0, %s202
      %s204 = sphi 0, %s202
      %s205 = sphi 0, %s204
      %s219 = sphi 0, %s205
      %s223 = sphi 0, %s223
      %s225 = sphi 0, %s223
      %s226 = sphi 0, %s225
      %s240 = sphi 0, %s226
      %s244 = sphi 0, %s244
      %s246 = sphi 0, %s244
      %s247 = sphi 0, %s246
      %s261 = sphi 0, %s247
      %s265 = sphi 0, %s265
      %s267 = sphi 0, %s265
      %s268 = sphi 0, %s267
      %s282 = sphi 0, %s268
      %s286 = sphi 0, %s286
      %s288 = sphi 0, %s286
      %s289 = sphi 0, %s288
      %s303 = sphi 0, %s289
      %s311 = sphi 0, %s313
      %s314 = sphi 0, %s311
      %s315 = sphi 0, %s314
      %s331 = sphi 0, %s315
    $region4: #{_forward_padded.5} parent=1 // loop_header_branch
      %24 = sbr.rel (%p22) target = $region8
    $region5: #{_forward_padded.5} parent=1 // loop_body
      %s26 = ssub.s32 %s21, 1
      %s27 = ssub.s32 %s21, 2
      %s34 = sadd.s32 1, %s29
      %p35 = scmp.ge.s32.totalorder %s34, 1
      %s36 = scalar_select %p35, 0, %s34
      %s37 = sadd.s32 1, %s28
      %s38 = scalar_select %p35, %s37, %s28
      %p39 = scmp.ge.s32.totalorder %s38, 2
      %s40 = scalar_select %p39, 0, %s38
      %s41 = ssub.s32 %s28, %s40
      %s42 = ssub.s32 %s29, %s36
      %s43 = sor.u32 %s41, %s42
      %p44 = scmp.eq.s32.totalorder %s43, 0
      %s46 = sadd.s32 %s45, 1
      %s47 = scalar_select %p44, %s45, %s46
      %p50 = pneg %p44
      %p51 = scmp.eq.s32.totalorder %s21, 1
      %p52 = por %p50, %p51
      %p53 = scmp.ne.s32.totalorder %s45, %s48
      %p54 = scmp.eq.s32.totalorder %s21, 0
      %p55 = por %p53, %p54
      %p56 = scmp.ne.s32.totalorder %s45, %s48
      %p57 = scmp.eq.s32.totalorder %s26, 1
      %p58 = por %p56, %p57
      %p59 = scmp.ne.s32.totalorder %s48, %s49
      %p60 = scmp.eq.s32.totalorder %s26, 0
      %p61 = por %p59, %p60
      %p62 = scmp.ne.s32.totalorder %s48, %s49
      %p63 = scmp.eq.s32.totalorder %s27, 1
      %p64 = por %p62, %p63
      %p66 = scmp.ne.s32.totalorder %s49, %s65
      %p67 = scmp.eq.s32.totalorder %s27, 0
      %p68 = por %p66, %p67
      %s69 = ssub.s32 %s28, %s40
      %s70 = ssub.s32 %s29, %s36
      %s71 = sor.u32 %s69, %s70
      %p72 = scmp.eq.s32.totalorder %s71, 0
      %s74 = sadd.s32 %s73, 1
      %s75 = scalar_select %p72, %s73, %s74
      %p78 = pneg %p72
      %p79 = scmp.eq.s32.totalorder %s21, 1
      %p80 = por %p78, %p79
      %p81 = scmp.ne.s32.totalorder %s73, %s76
      %p82 = scmp.eq.s32.totalorder %s21, 0
      %p83 = por %p81, %p82
      %p84 = scmp.ne.s32.totalorder %s73, %s76
      %p85 = scmp.eq.s32.totalorder %s26, 1
      %p86 = por %p84, %p85
      %p87 = scmp.ne.s32.totalorder %s76, %s77
      %p88 = scmp.eq.s32.totalorder %s26, 0
      %p89 = por %p87, %p88
      %p90 = scmp.ne.s32.totalorder %s76, %s77
      %p91 = scmp.eq.s32.totalorder %s27, 1
      %p92 = por %p90, %p91
      %p94 = scmp.ne.s32.totalorder %s77, %s93
      %p95 = scmp.eq.s32.totalorder %s27, 0
      %p96 = por %p94, %p95
      %s98 = sadd.s32 %s97, 1
      %p101 = scmp.eq.s32.totalorder %s21, 1
      %p102 = scmp.ne.s32.totalorder %s97, %s99
      %p103 = scmp.eq.s32.totalorder %s21, 0
      %p104 = por %p102, %p103
      %p105 = scmp.ne.s32.totalorder %s97, %s99
      %p106 = scmp.eq.s32.totalorder %s26, 1
      %p107 = por %p105, %p106
      %p108 = scmp.ne.s32.totalorder %s99, %s100
      %p109 = scmp.eq.s32.totalorder %s26, 0
      %p110 = por %p108, %p109
      %p111 = scmp.ne.s32.totalorder %s99, %s100
      %p112 = scmp.eq.s32.totalorder %s27, 1
      %p113 = por %p111, %p112
      %p115 = scmp.ne.s32.totalorder %s100, %s114
      %p116 = scmp.eq.s32.totalorder %s27, 0
      %p117 = por %p115, %p116
      %s119 = sadd.s32 %s118, 1
      %p122 = scmp.eq.s32.totalorder %s21, 1
      %p123 = scmp.ne.s32.totalorder %s118, %s120
      %p124 = scmp.eq.s32.totalorder %s21, 0
      %p125 = por %p123, %p124
      %p126 = scmp.ne.s32.totalorder %s118, %s120
      %p127 = scmp.eq.s32.totalorder %s26, 1
      %p128 = por %p126, %p127
      %p129 = scmp.ne.s32.totalorder %s120, %s121
      %p130 = scmp.eq.s32.totalorder %s26, 0
      %p131 = por %p129, %p130
      %p132 = scmp.ne.s32.totalorder %s120, %s121
      %p133 = scmp.eq.s32.totalorder %s27, 1
      %p134 = por %p132, %p133
      %p136 = scmp.ne.s32.totalorder %s121, %s135
      %p137 = scmp.eq.s32.totalorder %s27, 0
      %p138 = por %p136, %p137
      %s140 = sadd.s32 %s139, 1
      %p143 = scmp.eq.s32.totalorder %s21, 1
      %p144 = scmp.ne.s32.totalorder %s139, %s141
      %p145 = scmp.eq.s32.totalorder %s21, 0
      %p146 = por %p144, %p145
      %p147 = scmp.ne.s32.totalorder %s139, %s141
      %p148 = scmp.eq.s32.totalorder %s26, 1
      %p149 = por %p147, %p148
      %p150 = scmp.ne.s32.totalorder %s141, %s142
      %p151 = scmp.eq.s32.totalorder %s26, 0
      %p152 = por %p150, %p151
      %p153 = scmp.ne.s32.totalorder %s141, %s142
      %p154 = scmp.eq.s32.totalorder %s27, 1
      %p155 = por %p153, %p154
      %p157 = scmp.ne.s32.totalorder %s142, %s156
      %p158 = scmp.eq.s32.totalorder %s27, 0
      %p159 = por %p157, %p158
      %s161 = sadd.s32 %s160, 1
      %p164 = scmp.eq.s32.totalorder %s21, 1
      %p165 = scmp.ne.s32.totalorder %s160, %s162
      %p166 = scmp.eq.s32.totalorder %s21, 0
      %p167 = por %p165, %p166
      %p168 = scmp.ne.s32.totalorder %s160, %s162
      %p169 = scmp.eq.s32.totalorder %s26, 1
      %p170 = por %p168, %p169
      %p171 = scmp.ne.s32.totalorder %s162, %s163
      %p172 = scmp.eq.s32.totalorder %s26, 0
      %p173 = por %p171, %p172
      %p174 = scmp.ne.s32.totalorder %s162, %s163
      %p175 = scmp.eq.s32.totalorder %s27, 1
      %p176 = por %p174, %p175
      %p178 = scmp.ne.s32.totalorder %s163, %s177
      %p179 = scmp.eq.s32.totalorder %s27, 0
      %p180 = por %p178, %p179
      %s182 = sadd.s32 %s181, 1
      %p185 = scmp.eq.s32.totalorder %s21, 1
      %p186 = scmp.ne.s32.totalorder %s181, %s183
      %p187 = scmp.eq.s32.totalorder %s21, 0
      %p188 = por %p186, %p187
      %p189 = scmp.ne.s32.totalorder %s181, %s183
      %p190 = scmp.eq.s32.totalorder %s26, 1
      %p191 = por %p189, %p190
      %p192 = scmp.ne.s32.totalorder %s183, %s184
      %p193 = scmp.eq.s32.totalorder %s26, 0
      %p194 = por %p192, %p193
      %p195 = scmp.ne.s32.totalorder %s183, %s184
      %p196 = scmp.eq.s32.totalorder %s27, 1
      %p197 = por %p195, %p196
      %p199 = scmp.ne.s32.totalorder %s184, %s198
      %p200 = scmp.eq.s32.totalorder %s27, 0
      %p201 = por %p199, %p200
      %s203 = sadd.s32 %s202, 1
      %p206 = scmp.eq.s32.totalorder %s21, 1
      %p207 = scmp.ne.s32.totalorder %s202, %s204
      %p208 = scmp.eq.s32.totalorder %s21, 0
      %p209 = por %p207, %p208
      %p210 = scmp.ne.s32.totalorder %s202, %s204
      %p211 = scmp.eq.s32.totalorder %s26, 1
      %p212 = por %p210, %p211
      %p213 = scmp.ne.s32.totalorder %s204, %s205
      %p214 = scmp.eq.s32.totalorder %s26, 0
      %p215 = por %p213, %p214
      %p216 = scmp.ne.s32.totalorder %s204, %s205
      %p217 = scmp.eq.s32.totalorder %s27, 1
      %p218 = por %p216, %p217
      %p220 = scmp.ne.s32.totalorder %s205, %s219
      %p221 = scmp.eq.s32.totalorder %s27, 0
      %p222 = por %p220, %p221
      %s224 = sadd.s32 %s223, 1
      %p227 = scmp.eq.s32.totalorder %s21, 1
      %p228 = scmp.ne.s32.totalorder %s223, %s225
      %p229 = scmp.eq.s32.totalorder %s21, 0
      %p230 = por %p228, %p229
      %p231 = scmp.ne.s32.totalorder %s223, %s225
      %p232 = scmp.eq.s32.totalorder %s26, 1
      %p233 = por %p231, %p232
      %p234 = scmp.ne.s32.totalorder %s225, %s226
      %p235 = scmp.eq.s32.totalorder %s26, 0
      %p236 = por %p234, %p235
      %p237 = scmp.ne.s32.totalorder %s225, %s226
      %p238 = scmp.eq.s32.totalorder %s27, 1
      %p239 = por %p237, %p238
      %p241 = scmp.ne.s32.totalorder %s226, %s240
      %p242 = scmp.eq.s32.totalorder %s27, 0
      %p243 = por %p241, %p242
      %s245 = sadd.s32 %s244, 1
      %p248 = scmp.eq.s32.totalorder %s21, 1
      %p249 = scmp.ne.s32.totalorder %s244, %s246
      %p250 = scmp.eq.s32.totalorder %s21, 0
      %p251 = por %p249, %p250
      %p252 = scmp.ne.s32.totalorder %s244, %s246
      %p253 = scmp.eq.s32.totalorder %s26, 1
      %p254 = por %p252, %p253
      %p255 = scmp.ne.s32.totalorder %s246, %s247
      %p256 = scmp.eq.s32.totalorder %s26, 0
      %p257 = por %p255, %p256
      %p258 = scmp.ne.s32.totalorder %s246, %s247
      %p259 = scmp.eq.s32.totalorder %s27, 1
      %p260 = por %p258, %p259
      %p262 = scmp.ne.s32.totalorder %s247, %s261
      %p263 = scmp.eq.s32.totalorder %s27, 0
      %p264 = por %p262, %p263
      %s266 = sadd.s32 %s265, 1
      %p269 = scmp.eq.s32.totalorder %s21, 1
      %p270 = scmp.ne.s32.totalorder %s265, %s267
      %p271 = scmp.eq.s32.totalorder %s21, 0
      %p272 = por %p270, %p271
      %p273 = scmp.ne.s32.totalorder %s265, %s267
      %p274 = scmp.eq.s32.totalorder %s26, 1
      %p275 = por %p273, %p274
      %p276 = scmp.ne.s32.totalorder %s267, %s268
      %p277 = scmp.eq.s32.totalorder %s26, 0
      %p278 = por %p276, %p277
      %p279 = scmp.ne.s32.totalorder %s267, %s268
      %p280 = scmp.eq.s32.totalorder %s27, 1
      %p281 = por %p279, %p280
      %p283 = scmp.ne.s32.totalorder %s268, %s282
      %p284 = scmp.eq.s32.totalorder %s27, 0
      %p285 = por %p283, %p284
      %s287 = sadd.s32 %s286, 1
      %p290 = scmp.eq.s32.totalorder %s21, 1
      %p291 = scmp.ne.s32.totalorder %s286, %s288
      %p292 = scmp.eq.s32.totalorder %s21, 0
      %p293 = por %p291, %p292
      %p294 = scmp.ne.s32.totalorder %s286, %s288
      %p295 = scmp.eq.s32.totalorder %s26, 1
      %p296 = por %p294, %p295
      %p297 = scmp.ne.s32.totalorder %s288, %s289
      %p298 = scmp.eq.s32.totalorder %s26, 0
      %p299 = por %p297, %p298
      %p300 = scmp.ne.s32.totalorder %s288, %s289
      %p301 = scmp.eq.s32.totalorder %s27, 1
      %p302 = por %p300, %p301
      %p304 = scmp.ne.s32.totalorder %s289, %s303
      %p305 = scmp.eq.s32.totalorder %s27, 0
      %p306 = por %p304, %p305
      %s307 = ssub.s32 %s28, %s40
      %s308 = ssub.s32 %s29, %s36
      %s309 = sor.u32 %s307, %s308
      %p310 = scmp.eq.s32.totalorder %s309, 0
      %s312 = sadd.s32 %s311, 1
      %s313 = scalar_select %p310, %s311, %s312
      %p316 = pneg %p310
      %p317 = scmp.eq.s32.totalorder %s21, 1
      %p318 = por %p316, %p317
      %p319 = scmp.ne.s32.totalorder %s311, %s314
      %p320 = scmp.eq.s32.totalorder %s21, 0
      %p321 = por %p319, %p320
      %p322 = scmp.ne.s32.totalorder %s311, %s314
      %p323 = scmp.eq.s32.totalorder %s26, 1
      %p324 = por %p322, %p323
      %p325 = scmp.ne.s32.totalorder %s314, %s315
      %p326 = scmp.eq.s32.totalorder %s26, 0
      %p327 = por %p325, %p326
      %p328 = scmp.ne.s32.totalorder %s314, %s315
      %p329 = scmp.eq.s32.totalorder %s27, 1
      %p330 = por %p328, %p329
      %p332 = scmp.ne.s32.totalorder %s315, %s331
      %p333 = scmp.eq.s32.totalorder %s27, 0
      %p334 = por %p332, %p333
      %p335 = scmp.le.s32.totalorder 1, %s21
      %p336 = scmp.lt.s32.totalorder %s21, 3
      %p337 = pnand %p335, %p336
      %p338 = pneg %p337
      // Predicated region
      $region9: #{_forward_padded.5} parent=5 // pred_check
        _
      $region10: #{_forward_padded.5} parent=5 // pred_check_branch
        %340 = sbr.rel (%p337) target = $region12
      $region11: #{_forward_padded.5} parent=5 // pred_region
        %s341 = ssub.s32 %s21, 1
        // Predicated region
        $region13: #{_forward_padded.5} parent=11 // pred_check
          %p342 = pneg %p110
        $region14: #{_forward_padded.5} parent=11 // pred_check_branch
          %344 = sbr.rel (%p342) target = $region16
        $region15: #{_forward_padded.5} parent=11 // pred_region
          _
        $region16: #{_forward_padded.5} parent=11 // pred_fallthru
          _
        // Predicated region
        $region17: #{_forward_padded.5} parent=11 // pred_check
          %p345 = pneg %p131
        $region18: #{_forward_padded.5} parent=11 // pred_check_branch
          %347 = sbr.rel (%p345) target = $region20
        $region19: #{_forward_padded.5} parent=11 // pred_region
          _
        $region20: #{_forward_padded.5} parent=11 // pred_fallthru
          _
        // Predicated region
        $region21: #{_forward_padded.5} parent=11 // pred_check
          %p348 = pneg %p152
        $region22: #{_forward_padded.5} parent=11 // pred_check_branch
          %350 = sbr.rel (%p348) target = $region24
        $region23: #{_forward_padded.5} parent=11 // pred_region
          _
        $region24: #{_forward_padded.5} parent=11 // pred_fallthru
          _
        // Predicated region
        $region25: #{_forward_padded.5} parent=11 // pred_check
          %p351 = pneg %p173
        $region26: #{_forward_padded.5} parent=11 // pred_check_branch
          %353 = sbr.rel (%p351) target = $region28
        $region27: #{_forward_padded.5} parent=11 // pred_region
          _
        $region28: #{_forward_padded.5} parent=11 // pred_fallthru
          _
        // Predicated region
        $region29: #{_forward_padded.5} parent=11 // pred_check
          %p354 = pneg %p194
        $region30: #{_forward_padded.5} parent=11 // pred_check_branch
          %356 = sbr.rel (%p354) target = $region32
        $region31: #{_forward_padded.5} parent=11 // pred_region
          _
        $region32: #{_forward_padded.5} parent=11 // pred_fallthru
          _
        // Predicated region
        $region33: #{_forward_padded.5} parent=11 // pred_check
          %p357 = pneg %p215
        $region34: #{_forward_padded.5} parent=11 // pred_check_branch
          %359 = sbr.rel (%p357) target = $region36
        $region35: #{_forward_padded.5} parent=11 // pred_region
          _
        $region36: #{_forward_padded.5} parent=11 // pred_fallthru
          _
        // Predicated region
        $region37: #{_forward_padded.5} parent=11 // pred_check
          %p360 = pneg %p236
        $region38: #{_forward_padded.5} parent=11 // pred_check_branch
          %362 = sbr.rel (%p360) target = $region40
        $region39: #{_forward_padded.5} parent=11 // pred_region
          _
        $region40: #{_forward_padded.5} parent=11 // pred_fallthru
          _
        // Predicated region
        $region41: #{_forward_padded.5} parent=11 // pred_check
          %p363 = pneg %p257
        $region42: #{_forward_padded.5} parent=11 // pred_check_branch
          %365 = sbr.rel (%p363) target = $region44
        $region43: #{_forward_padded.5} parent=11 // pred_region
          _
        $region44: #{_forward_padded.5} parent=11 // pred_fallthru
          _
        // Predicated region
        $region45: #{_forward_padded.5} parent=11 // pred_check
          %p366 = pneg %p278
        $region46: #{_forward_padded.5} parent=11 // pred_check_branch
          %368 = sbr.rel (%p366) target = $region48
        $region47: #{_forward_padded.5} parent=11 // pred_region
          _
        $region48: #{_forward_padded.5} parent=11 // pred_fallthru
          _
        // Predicated region
        $region49: #{_forward_padded.5} parent=11 // pred_check
          %p369 = pneg %p299
        $region50: #{_forward_padded.5} parent=11 // pred_check_branch
          %371 = sbr.rel (%p369) target = $region52
        $region51: #{_forward_padded.5} parent=11 // pred_region
          _
        $region52: #{_forward_padded.5} parent=11 // pred_fallthru
          _
      $region12: #{_forward_padded.5} parent=5 // pred_fallthru
        _
      %p372 = scmp.lt.s32.totalorder %s21, 2
      // Predicated region
      $region53: #{_forward_padded.5} parent=5 // pred_check
        %p373 = pneg %p372
      $region54: #{_forward_padded.5} parent=5 // pred_check_branch
        %375 = sbr.rel (%p373) target = $region56
      $region55: #{_forward_padded.5} parent=5 // pred_region
        // Predicated region
        $region57: #{_forward_padded.5} parent=55 // pred_check
          %p376 = pneg %p55
        $region58: #{_forward_padded.5} parent=55 // pred_check_branch
          %378 = sbr.rel (%p376) target = $region60
        $region59: #{_forward_padded.5} parent=55 // pred_region
          %s379 = smul.u32 2, %s29
          %p380 = scmp.lt.s32.totalorder %s28, 1
          %s381 = scalar_select %p380, %s28, 1
          %p382 = scmp.lt.s32.totalorder %s379, 1
          %s383 = scalar_select %p382, %s379, 1
          %s384 = smul.addr %s381, 2
          %s385 = sadd.s32 %s383, %s384
          %s386 = smul.addr %s385, 4
          %s387 = scalar_lea.vmem %s0, %s386
          %s388 = smul.u32 2, %s29
        $region60: #{_forward_padded.5} parent=55 // pred_fallthru
          _
        // Predicated region
        $region61: #{_forward_padded.5} parent=55 // pred_check
          %p389 = pneg %p83
        $region62: #{_forward_padded.5} parent=55 // pred_check_branch
          %391 = sbr.rel (%p389) target = $region64
        $region63: #{_forward_padded.5} parent=55 // pred_region
          %s392 = smul.u32 2, %s29
          %p393 = scmp.lt.s32.totalorder %s28, 1
          %s394 = scalar_select %p393, %s28, 1
          %p395 = scmp.lt.s32.totalorder %s392, 1
          %s396 = scalar_select %p395, %s392, 1
          %s397 = smul.addr %s394, 8
          %s398 = sadd.s32 %s396, %s397
          %s399 = smul.addr %s398, 4
          %s400 = scalar_lea.vmem %s1, %s399
          %s401 = smul.u32 2, %s29
        $region64: #{_forward_padded.5} parent=55 // pred_fallthru
          _
      $region56: #{_forward_padded.5} parent=5 // pred_fallthru
        _
      %p402 = scmp.le.s32.totalorder 1, %s21
      %p403 = scmp.lt.s32.totalorder %s21, 3
      %p404 = pnand %p402, %p403
      %p405 = pneg %p404
      // Predicated region
      $region65: #{_forward_padded.5} parent=5 // pred_check
        _
      $region66: #{_forward_padded.5} parent=5 // pred_check_branch
        %407 = sbr.rel (%p404) target = $region68
      $region67: #{_forward_padded.5} parent=5 // pred_region
        %s408 = ssub.s32 %s21, 1
        %s409 = smul.u32 2, %s31
        %p410 = scmp.lt.s32.totalorder %s30, 1
        %s411 = scalar_select %p410, %s30, 1
        %p412 = scmp.lt.s32.totalorder %s409, 1
        %s413 = scalar_select %p412, %s409, 1
        %s414 = smul.addr %s411, 2
        %s415 = sadd.s32 %s413, %s414
        %s416 = smul.addr %s415, 4
        %s417 = scalar_lea.vmem %s0, %s416
        %p418 = pneg %p61
        %p419 = pneg %p58
        %s420 = smul.u32 2, %s31
        %p421 = scmp.lt.s32.totalorder %s30, 1
        %s422 = scalar_select %p421, %s30, 1
        %p423 = scmp.lt.s32.totalorder %s420, 1
        %s424 = scalar_select %p423, %s420, 1
        %s425 = smul.addr %s422, 8
        %s426 = sadd.s32 %s424, %s425
        %s427 = smul.addr %s426, 4
        %s428 = scalar_lea.vmem %s1, %s427
        %p429 = pneg %p89
        %p430 = pneg %p86
        %p431 = pneg %p110
        %p432 = pneg %p107
        %p433 = pneg %p131
        %p434 = pneg %p128
        %p435 = pneg %p152
        %p436 = pneg %p149
        %p437 = pneg %p173
        %p438 = pneg %p170
        %p439 = pneg %p194
        %p440 = pneg %p191
        %p441 = pneg %p215
        %p442 = pneg %p212
        %p443 = pneg %p236
        %p444 = pneg %p233
        %p445 = pneg %p257
        %p446 = pneg %p254
        %p447 = pneg %p278
        %p448 = pneg %p275
        %p449 = pneg %p299
        %p450 = pneg %p296
        %p451 = pneg %p327
        %p452 = pneg %p324
        %s453 = sand.u32 %s314, 1
        %s454 = scalar_lea.sflag [#allocation3], %s453
        %s455 = sand.u32 %s314, 1
        %s456 = smul.addr %s455, 16
        %s457 = scalar_lea.vmem [#allocation2], %s456
        %s458 = smul.u32 2, %s31
        %p459 = scmp.lt.s32.totalorder %s30, 1
        %s460 = scalar_select %p459, %s30, 1
        %p461 = scmp.lt.s32.totalorder %s458, 1
        %s462 = scalar_select %p461, %s458, 1
        %s463 = smul.addr %s460, 2
        %s464 = sadd.s32 %s462, %s463
        %s465 = smul.addr %s464, 4
        %s466 = scalar_lea.vmem %s0, %s465
        %s467 = smul.u32 2, %s31
        %s468 = smul.u32 2, %s31
        %p469 = scmp.lt.s32.totalorder %s30, 1
        %s470 = scalar_select %p469, %s30, 1
        %p471 = scmp.lt.s32.totalorder %s468, 1
        %s472 = scalar_select %p471, %s468, 1
        %s473 = smul.addr %s470, 8
        %s474 = sadd.s32 %s472, %s473
        %s475 = smul.addr %s474, 4
        %s476 = scalar_lea.vmem %s1, %s475
        %s477 = smul.u32 2, %s31
        %s478 = smul.u32 2, %s31
        %v480 = vld [vmem:[%s466] sm:$0xf]
        %v481 = vld [vmem:[%s466 + $0x4] sm:$0xf]
        %v482 = vld [vmem:[%s2] sm:$0xf]
        %v483 = vld [vmem:[%s2 + $0x4] sm:$0xf]
        %v484 = vld [vmem:[%s2 + $0x8] sm:$0xf]
        %v485 = vld [vmem:[%s2 + $0xc] sm:$0xf]
        %v486 = vld [vmem:[%s3] sm:$0x1]
        %v488 = vlaneseq
        %v489 = vshrl.u32 %v488, 7
        %v490 = vsub.s32 0, %v489
        %v491 = vrot.slane %v486, %v490
        %v495 = vunpack.c.l.b16 %v480
        %v496 = vunpack.c.l.b16 %v481
        %v497 = vpack.c.b16 %v496, %v495
        %v502 = vunpack.c.l.b16 %v482
        %v503 = vunpack.c.l.b16 %v483
        %v504 = vunpack.c.l.b16 %v484
        %v505 = vunpack.c.l.b16 %v485
        %v506 = vpack.c.b16 %v503, %v502
        %v507 = vpack.c.b16 %v505, %v504
        %vm510 = vcmask 261120
        %v512 = vsel %vm510, %v497, 0
        %514 = vmatprep.subr.bf16.mxu0 0
        %515 = vmatpush1.bf16.msra.mxu0 0
        %516 = vmatprep.subr.bf16.mxu0 0
        %517 = vmatpush1.bf16.msra.mxu0 0
        %518 = vmatprep.subr.bf16.mxu0 0
        %519 = vmatpush1.bf16.msra.mxu0 0
        %520 = vmatprep.subr.bf16.mxu0 0
        %521 = vmatpush1.bf16.msra.mxu0 0
        %522 = vmatprep.subr.bf16.mxu0 0
        %523 = vmatpush1.bf16.msra.mxu0 0
        %524 = vmatprep.subr.bf16.mxu0 0
        %525 = vmatpush1.bf16.msra.mxu0 0
        %526 = vmatprep.subr.bf16.mxu0 0
        %527 = vmatpush1.bf16.msra.mxu0 %v507
        %528 = vmatprep.subr.bf16.mxu0 0
        %529 = vmatpush1.bf16.msra.mxu0 %v506
        %530 = vmatprep.subr.bf16.mxu0 0
        %531 = vmatpush2.bf16.msra.mxu0 0
        %532 = vmatprep.subr.bf16.mxu0 0
        %533 = vmatpush2.bf16.msra.mxu0 0
        %534 = vmatprep.subr.bf16.mxu0 0
        %535 = vmatpush2.bf16.msra.mxu0 0
        %536 = vmatprep.subr.bf16.mxu0 0
        %537 = vmatpush2.bf16.msra.mxu0 0
        %538 = vmatprep.subr.bf16.mxu0 0
        %539 = vmatpush2.bf16.msra.mxu0 0
        %540 = vmatprep.subr.bf16.mxu0 0
        %541 = vmatpush2.bf16.msra.mxu0 0
        %542 = vmatprep.subr.bf16.mxu0 0
        %543 = vmatpush2.bf16.msra.mxu0 0
        %544 = vmatprep.subr.bf16.mxu0 0
        %545 = vmatpush2.bf16.msra.mxu0 0
        %546 = vmatprep.mubr.bf16.mxu0 0
        %547 = vmatmul.mubr.bf16.gmra.mxu0 %v512
        %v548 = vpop.f32.mrf.mxu0
        %v549 = vadd.f32 %v491, %v548
        %v550 = vpop.f32.mrf.mxu0
        %v551 = vpop.f32.mrf.mxu0
        %v552 = vadd.f32 %v491, %v551
        %v553 = vpop.f32.mrf.mxu0
        %554 = vdwg.mxu0
        %v555 = vmul.f32 %v549, 0.35355338
        %v556 = vmul.f32 %v552, 0.35355338
        %v557 = vld [vmem:[%s10] sm:$0xf]
        %v558 = vld [vmem:[%s10 + $0x4] sm:$0xf]
        %v559 = vld [vmem:[%s10 + $0x8] sm:$0xf]
        %v560 = vld [vmem:[%s10 + $0xc] sm:$0xf]
        %v561 = vld [vmem:[%s11] sm:$0x3]
        %v562 = vld [vmem:[%s476] sm:$0xf]
        %v563 = vld [vmem:[%s476 + $0x4] sm:$0xf]
        %v564 = vld [vmem:[%s4] sm:$0xf]
        %v565 = vld [vmem:[%s4 + $0x4] sm:$0xf]
        %v566 = vld [vmem:[%s4 + $0x8] sm:$0xf]
        %v567 = vld [vmem:[%s4 + $0xc] sm:$0xf]
        %v568 = vld [vmem:[%s5] sm:$0x1]
        %v570 = vlaneseq
        %v571 = vshrl.u32 %v570, 7
        %v572 = vsub.s32 0, %v571
        %v573 = vrot.slane %v568, %v572
        %v577 = vunpack.c.l.b16 %v562
        %v578 = vunpack.c.l.b16 %v563
        %v579 = vpack.c.b16 %v578, %v577
        %v584 = vunpack.c.l.b16 %v564
        %v585 = vunpack.c.l.b16 %v565
        %v586 = vunpack.c.l.b16 %v566
        %v587 = vunpack.c.l.b16 %v567
        %v588 = vpack.c.b16 %v585, %v584
        %v589 = vpack.c.b16 %v587, %v586
        %v593 = vsel %vm510, %v579, 0
        %595 = vmatprep.subr.bf16.mxu0 0
        %596 = vmatpush1.bf16.msra.mxu0 0
        %597 = vmatprep.subr.bf16.mxu0 0
        %598 = vmatpush1.bf16.msra.mxu0 0
        %599 = vmatprep.subr.bf16.mxu0 0
        %600 = vmatpush1.bf16.msra.mxu0 0
        %601 = vmatprep.subr.bf16.mxu0 0
        %602 = vmatpush1.bf16.msra.mxu0 0
        %603 = vmatprep.subr.bf16.mxu0 0
        %604 = vmatpush1.bf16.msra.mxu0 0
        %605 = vmatprep.subr.bf16.mxu0 0
        %606 = vmatpush1.bf16.msra.mxu0 0
        %607 = vmatprep.subr.bf16.mxu0 0
        %608 = vmatpush1.bf16.msra.mxu0 %v589
        %609 = vmatprep.subr.bf16.mxu0 0
        %610 = vmatpush1.bf16.msra.mxu0 %v588
        %611 = vmatprep.subr.bf16.mxu0 0
        %612 = vmatpush2.bf16.msra.mxu0 0
        %613 = vmatprep.subr.bf16.mxu0 0
        %614 = vmatpush2.bf16.msra.mxu0 0
        %615 = vmatprep.subr.bf16.mxu0 0
        %616 = vmatpush2.bf16.msra.mxu0 0
        %617 = vmatprep.subr.bf16.mxu0 0
        %618 = vmatpush2.bf16.msra.mxu0 0
        %619 = vmatprep.subr.bf16.mxu0 0
        %620 = vmatpush2.bf16.msra.mxu0 0
        %621 = vmatprep.subr.bf16.mxu0 0
        %622 = vmatpush2.bf16.msra.mxu0 0
        %623 = vmatprep.subr.bf16.mxu0 0
        %624 = vmatpush2.bf16.msra.mxu0 0
        %625 = vmatprep.subr.bf16.mxu0 0
        %626 = vmatpush2.bf16.msra.mxu0 0
        %627 = vmatprep.mubr.bf16.mxu0 0
        %628 = vmatmul.mubr.bf16.gmra.mxu0 %v593
        %v629 = vpop.f32.mrf.mxu0
        %v630 = vadd.f32 %v573, %v629
        %v631 = vpop.f32.mrf.mxu0
        %v632 = vpop.f32.mrf.mxu0
        %v633 = vadd.f32 %v573, %v632
        %v634 = vpop.f32.mrf.mxu0
        %635 = vdwg.mxu0
        %v636 = vld [vmem:[%s6] sm:$0xf]
        %v637 = vld [vmem:[%s6 + $0x4] sm:$0xf]
        %v638 = vld [vmem:[%s6 + $0x8] sm:$0xf]
        %v639 = vld [vmem:[%s6 + $0xc] sm:$0xf]
        %v640 = vld [vmem:[%s7] sm:$0x1]
        %v642 = vlaneseq
        %v643 = vshrl.u32 %v642, 7
        %v644 = vsub.s32 0, %v643
        %v645 = vrot.slane %v640, %v644
        %v651 = vunpack.c.l.b16 %v636
        %v652 = vunpack.c.l.b16 %v637
        %v653 = vunpack.c.l.b16 %v638
        %v654 = vunpack.c.l.b16 %v639
        %v655 = vpack.c.b16 %v652, %v651
        %v656 = vpack.c.b16 %v654, %v653
        %659 = vmatprep.subr.bf16.mxu0 0
        %660 = vmatpush1.bf16.msra.mxu0 0
        %661 = vmatprep.subr.bf16.mxu0 0
        %662 = vmatpush1.bf16.msra.mxu0 0
        %663 = vmatprep.subr.bf16.mxu0 0
        %664 = vmatpush1.bf16.msra.mxu0 0
        %665 = vmatprep.subr.bf16.mxu0 0
        %666 = vmatpush1.bf16.msra.mxu0 0
        %667 = vmatprep.subr.bf16.mxu0 0
        %668 = vmatpush1.bf16.msra.mxu0 0
        %669 = vmatprep.subr.bf16.mxu0 0
        %670 = vmatpush1.bf16.msra.mxu0 0
        %671 = vmatprep.subr.bf16.mxu0 0
        %672 = vmatpush1.bf16.msra.mxu0 %v656
        %673 = vmatprep.subr.bf16.mxu0 0
        %674 = vmatpush1.bf16.msra.mxu0 %v655
        %675 = vmatprep.subr.bf16.mxu0 0
        %676 = vmatpush2.bf16.msra.mxu0 0
        %677 = vmatprep.subr.bf16.mxu0 0
        %678 = vmatpush2.bf16.msra.mxu0 0
        %679 = vmatprep.subr.bf16.mxu0 0
        %680 = vmatpush2.bf16.msra.mxu0 0
        %681 = vmatprep.subr.bf16.mxu0 0
        %682 = vmatpush2.bf16.msra.mxu0 0
        %683 = vmatprep.subr.bf16.mxu0 0
        %684 = vmatpush2.bf16.msra.mxu0 0
        %685 = vmatprep.subr.bf16.mxu0 0
        %686 = vmatpush2.bf16.msra.mxu0 0
        %687 = vmatprep.subr.bf16.mxu0 0
        %688 = vmatpush2.bf16.msra.mxu0 0
        %689 = vmatprep.subr.bf16.mxu0 0
        %690 = vmatpush2.bf16.msra.mxu0 0
        %691 = vmatprep.mubr.bf16.mxu0 0
        %692 = vmatmul.mubr.bf16.gmra.mxu0 %v593
        %v693 = vpop.f32.mrf.mxu0
        %v694 = vadd.f32 %v645, %v693
        %v695 = vpop.f32.mrf.mxu0
        %v696 = vpop.f32.mrf.mxu0
        %v697 = vadd.f32 %v645, %v696
        %v698 = vpop.f32.mrf.mxu0
        %699 = vdwg.mxu0
        %v700 = vmul.f32 %v555, %v630
        %v701 = vmul.f32 %v556, %v633
        %v702 = vpack.c.bf16 %v701, %v700
        %v707 = vunpack.c.l.b16 %v557
        %v708 = vunpack.c.l.b16 %v558
        %v709 = vunpack.c.l.b16 %v559
        %v710 = vunpack.c.l.b16 %v560
        %v711 = vpack.c.b16 %v708, %v707
        %v712 = vpack.c.b16 %v710, %v709
        %v716 = vsel %vm510, %v702, 0
        %718 = vmatprep.subr.bf16.mxu0 0
        %719 = vmatpush1.bf16.msra.mxu0 0
        %720 = vmatprep.subr.bf16.mxu0 0
        %721 = vmatpush1.bf16.msra.mxu0 0
        %722 = vmatprep.subr.bf16.mxu0 0
        %723 = vmatpush1.bf16.msra.mxu0 0
        %724 = vmatprep.subr.bf16.mxu0 0
        %725 = vmatpush1.bf16.msra.mxu0 0
        %726 = vmatprep.subr.bf16.mxu0 0
        %727 = vmatpush1.bf16.msra.mxu0 0
        %728 = vmatprep.subr.bf16.mxu0 0
        %729 = vmatpush1.bf16.msra.mxu0 0
        %730 = vmatprep.subr.bf16.mxu0 0
        %731 = vmatpush1.bf16.msra.mxu0 %v712
        %732 = vmatprep.subr.bf16.mxu0 0
        %733 = vmatpush1.bf16.msra.mxu0 %v711
        %734 = vmatprep.subr.bf16.mxu0 0
        %735 = vmatpush2.bf16.msra.mxu0 0
        %736 = vmatprep.subr.bf16.mxu0 0
        %737 = vmatpush2.bf16.msra.mxu0 0
        %738 = vmatprep.subr.bf16.mxu0 0
        %739 = vmatpush2.bf16.msra.mxu0 0
        %740 = vmatprep.subr.bf16.mxu0 0
        %741 = vmatpush2.bf16.msra.mxu0 0
        %742 = vmatprep.subr.bf16.mxu0 0
        %743 = vmatpush2.bf16.msra.mxu0 0
        %744 = vmatprep.subr.bf16.mxu0 0
        %745 = vmatpush2.bf16.msra.mxu0 0
        %746 = vmatprep.subr.bf16.mxu0 0
        %747 = vmatpush2.bf16.msra.mxu0 0
        %748 = vmatprep.subr.bf16.mxu0 0
        %749 = vmatpush2.bf16.msra.mxu0 0
        %750 = vmatprep.mubr.bf16.mxu0 0
        %751 = vmatmul.mubr.bf16.gmra.mxu0 %v716
        %v752 = vpop.f32.mrf.mxu0
        %v753 = vadd.f32 0.0, %v752
        %v754 = vpop.f32.mrf.mxu0
        %v755 = vpop.f32.mrf.mxu0
        %v756 = vadd.f32 0.0, %v755
        %v757 = vpop.f32.mrf.mxu0
        %758 = vdwg.mxu0
        %s759 = scalar_lea.vmem %s476, 8
        %v760 = vld [vmem:[%s759] sm:$0xf]
        %v761 = vld [vmem:[%s759 + $0x4] sm:$0xf]
        %v764 = vunpack.c.l.b16 %v760
        %v765 = vunpack.c.l.b16 %v761
        %v766 = vpack.c.b16 %v765, %v764
        %v768 = vsel %vm510, %v766, 0
        %770 = vmatprep.subr.bf16.mxu0 0
        %771 = vmatpush1.bf16.msra.mxu0 0
        %772 = vmatprep.subr.bf16.mxu0 0
        %773 = vmatpush1.bf16.msra.mxu0 0
        %774 = vmatprep.subr.bf16.mxu0 0
        %775 = vmatpush1.bf16.msra.mxu0 0
        %776 = vmatprep.subr.bf16.mxu0 0
        %777 = vmatpush1.bf16.msra.mxu0 0
        %778 = vmatprep.subr.bf16.mxu0 0
        %779 = vmatpush1.bf16.msra.mxu0 0
        %780 = vmatprep.subr.bf16.mxu0 0
        %781 = vmatpush1.bf16.msra.mxu0 0
        %782 = vmatprep.subr.bf16.mxu0 0
        %783 = vmatpush1.bf16.msra.mxu0 %v589
        %784 = vmatprep.subr.bf16.mxu0 0
        %785 = vmatpush1.bf16.msra.mxu0 %v588
        %786 = vmatprep.subr.bf16.mxu0 0
        %787 = vmatpush2.bf16.msra.mxu0 0
        %788 = vmatprep.subr.bf16.mxu0 0
        %789 = vmatpush2.bf16.msra.mxu0 0
        %790 = vmatprep.subr.bf16.mxu0 0
        %791 = vmatpush2.bf16.msra.mxu0 0
        %792 = vmatprep.subr.bf16.mxu0 0
        %793 = vmatpush2.bf16.msra.mxu0 0
        %794 = vmatprep.subr.bf16.mxu0 0
        %795 = vmatpush2.bf16.msra.mxu0 0
        %796 = vmatprep.subr.bf16.mxu0 0
        %797 = vmatpush2.bf16.msra.mxu0 0
        %798 = vmatprep.subr.bf16.mxu0 0
        %799 = vmatpush2.bf16.msra.mxu0 0
        %800 = vmatprep.subr.bf16.mxu0 0
        %801 = vmatpush2.bf16.msra.mxu0 0
        %802 = vmatprep.mubr.bf16.mxu0 0
        %803 = vmatmul.mubr.bf16.gmra.mxu0 %v768
        %v804 = vpop.f32.mrf.mxu0
        %v805 = vadd.f32 %v573, %v804
        %v806 = vpop.f32.mrf.mxu0
        %v807 = vpop.f32.mrf.mxu0
        %v808 = vadd.f32 %v573, %v807
        %v809 = vpop.f32.mrf.mxu0
        %810 = vdwg.mxu0
        %811 = vmatprep.subr.bf16.mxu0 0
        %812 = vmatpush1.bf16.msra.mxu0 0
        %813 = vmatprep.subr.bf16.mxu0 0
        %814 = vmatpush1.bf16.msra.mxu0 0
        %815 = vmatprep.subr.bf16.mxu0 0
        %816 = vmatpush1.bf16.msra.mxu0 0
        %817 = vmatprep.subr.bf16.mxu0 0
        %818 = vmatpush1.bf16.msra.mxu0 0
        %819 = vmatprep.subr.bf16.mxu0 0
        %820 = vmatpush1.bf16.msra.mxu0 0
        %821 = vmatprep.subr.bf16.mxu0 0
        %822 = vmatpush1.bf16.msra.mxu0 0
        %823 = vmatprep.subr.bf16.mxu0 0
        %824 = vmatpush1.bf16.msra.mxu0 %v656
        %825 = vmatprep.subr.bf16.mxu0 0
        %826 = vmatpush1.bf16.msra.mxu0 %v655
        %827 = vmatprep.subr.bf16.mxu0 0
        %828 = vmatpush2.bf16.msra.mxu0 0
        %829 = vmatprep.subr.bf16.mxu0 0
        %830 = vmatpush2.bf16.msra.mxu0 0
        %831 = vmatprep.subr.bf16.mxu0 0
        %832 = vmatpush2.bf16.msra.mxu0 0
        %833 = vmatprep.subr.bf16.mxu0 0
        %834 = vmatpush2.bf16.msra.mxu0 0
        %835 = vmatprep.subr.bf16.mxu0 0
        %836 = vmatpush2.bf16.msra.mxu0 0
        %837 = vmatprep.subr.bf16.mxu0 0
        %838 = vmatpush2.bf16.msra.mxu0 0
        %839 = vmatprep.subr.bf16.mxu0 0
        %840 = vmatpush2.bf16.msra.mxu0 0
        %841 = vmatprep.subr.bf16.mxu0 0
        %842 = vmatpush2.bf16.msra.mxu0 0
        %843 = vmatprep.mubr.bf16.mxu0 0
        %844 = vmatmul.mubr.bf16.gmra.mxu0 %v768
        %v845 = vpop.f32.mrf.mxu0
        %v846 = vadd.f32 %v645, %v845
        %v847 = vpop.f32.mrf.mxu0
        %v848 = vpop.f32.mrf.mxu0
        %v849 = vadd.f32 %v645, %v848
        %v850 = vpop.f32.mrf.mxu0
        %851 = vdwg.mxu0
        %v852 = vmul.f32 %v555, %v805
        %v853 = vmul.f32 %v556, %v808
        %v854 = vpack.c.bf16 %v853, %v852
        %v856 = vsel %vm510, %v854, 0
        %858 = vmatprep.subr.bf16.mxu0 0
        %859 = vmatpush1.bf16.msra.mxu0 0
        %860 = vmatprep.subr.bf16.mxu0 0
        %861 = vmatpush1.bf16.msra.mxu0 0
        %862 = vmatprep.subr.bf16.mxu0 0
        %863 = vmatpush1.bf16.msra.mxu0 0
        %864 = vmatprep.subr.bf16.mxu0 0
        %865 = vmatpush1.bf16.msra.mxu0 0
        %866 = vmatprep.subr.bf16.mxu0 0
        %867 = vmatpush1.bf16.msra.mxu0 0
        %868 = vmatprep.subr.bf16.mxu0 0
        %869 = vmatpush1.bf16.msra.mxu0 0
        %870 = vmatprep.subr.bf16.mxu0 0
        %871 = vmatpush1.bf16.msra.mxu0 %v712
        %872 = vmatprep.subr.bf16.mxu0 0
        %873 = vmatpush1.bf16.msra.mxu0 %v711
        %874 = vmatprep.subr.bf16.mxu0 0
        %875 = vmatpush2.bf16.msra.mxu0 0
        %876 = vmatprep.subr.bf16.mxu0 0
        %877 = vmatpush2.bf16.msra.mxu0 0
        %878 = vmatprep.subr.bf16.mxu0 0
        %879 = vmatpush2.bf16.msra.mxu0 0
        %880 = vmatprep.subr.bf16.mxu0 0
        %881 = vmatpush2.bf16.msra.mxu0 0
        %882 = vmatprep.subr.bf16.mxu0 0
        %883 = vmatpush2.bf16.msra.mxu0 0
        %884 = vmatprep.subr.bf16.mxu0 0
        %885 = vmatpush2.bf16.msra.mxu0 0
        %886 = vmatprep.subr.bf16.mxu0 0
        %887 = vmatpush2.bf16.msra.mxu0 0
        %888 = vmatprep.subr.bf16.mxu0 0
        %889 = vmatpush2.bf16.msra.mxu0 0
        %890 = vmatprep.mubr.bf16.mxu0 0
        %891 = vmatmul.mubr.bf16.gmra.mxu0 %v856
        %v892 = vpop.f32.mrf.mxu0
        %v893 = vadd.f32 0.0, %v892
        %v894 = vpop.f32.mrf.mxu0
        %v895 = vpop.f32.mrf.mxu0
        %v896 = vadd.f32 0.0, %v895
        %v897 = vpop.f32.mrf.mxu0
        %898 = vdwg.mxu0
        %s899 = scalar_lea.vmem %s476, 16
        %v900 = vld [vmem:[%s899] sm:$0xf]
        %v901 = vld [vmem:[%s899 + $0x4] sm:$0xf]
        %v904 = vunpack.c.l.b16 %v900
        %v905 = vunpack.c.l.b16 %v901
        %v906 = vpack.c.b16 %v905, %v904
        %v908 = vsel %vm510, %v906, 0
        %910 = vmatprep.subr.bf16.mxu0 0
        %911 = vmatpush1.bf16.msra.mxu0 0
        %912 = vmatprep.subr.bf16.mxu0 0
        %913 = vmatpush1.bf16.msra.mxu0 0
        %914 = vmatprep.subr.bf16.mxu0 0
        %915 = vmatpush1.bf16.msra.mxu0 0
        %916 = vmatprep.subr.bf16.mxu0 0
        %917 = vmatpush1.bf16.msra.mxu0 0
        %918 = vmatprep.subr.bf16.mxu0 0
        %919 = vmatpush1.bf16.msra.mxu0 0
        %920 = vmatprep.subr.bf16.mxu0 0
        %921 = vmatpush1.bf16.msra.mxu0 0
        %922 = vmatprep.subr.bf16.mxu0 0
        %923 = vmatpush1.bf16.msra.mxu0 %v589
        %924 = vmatprep.subr.bf16.mxu0 0
        %925 = vmatpush1.bf16.msra.mxu0 %v588
        %926 = vmatprep.subr.bf16.mxu0 0
        %927 = vmatpush2.bf16.msra.mxu0 0
        %928 = vmatprep.subr.bf16.mxu0 0
        %929 = vmatpush2.bf16.msra.mxu0 0
        %930 = vmatprep.subr.bf16.mxu0 0
        %931 = vmatpush2.bf16.msra.mxu0 0
        %932 = vmatprep.subr.bf16.mxu0 0
        %933 = vmatpush2.bf16.msra.mxu0 0
        %934 = vmatprep.subr.bf16.mxu0 0
        %935 = vmatpush2.bf16.msra.mxu0 0
        %936 = vmatprep.subr.bf16.mxu0 0
        %937 = vmatpush2.bf16.msra.mxu0 0
        %938 = vmatprep.subr.bf16.mxu0 0
        %939 = vmatpush2.bf16.msra.mxu0 0
        %940 = vmatprep.subr.bf16.mxu0 0
        %941 = vmatpush2.bf16.msra.mxu0 0
        %942 = vmatprep.mubr.bf16.mxu0 0
        %943 = vmatmul.mubr.bf16.gmra.mxu0 %v908
        %v944 = vpop.f32.mrf.mxu0
        %v945 = vadd.f32 %v573, %v944
        %v946 = vpop.f32.mrf.mxu0
        %v947 = vpop.f32.mrf.mxu0
        %v948 = vadd.f32 %v573, %v947
        %v949 = vpop.f32.mrf.mxu0
        %950 = vdwg.mxu0
        %951 = vmatprep.subr.bf16.mxu0 0
        %952 = vmatpush1.bf16.msra.mxu0 0
        %953 = vmatprep.subr.bf16.mxu0 0
        %954 = vmatpush1.bf16.msra.mxu0 0
        %955 = vmatprep.subr.bf16.mxu0 0
        %956 = vmatpush1.bf16.msra.mxu0 0
        %957 = vmatprep.subr.bf16.mxu0 0
        %958 = vmatpush1.bf16.msra.mxu0 0
        %959 = vmatprep.subr.bf16.mxu0 0
        %960 = vmatpush1.bf16.msra.mxu0 0
        %961 = vmatprep.subr.bf16.mxu0 0
        %962 = vmatpush1.bf16.msra.mxu0 0
        %963 = vmatprep.subr.bf16.mxu0 0
        %964 = vmatpush1.bf16.msra.mxu0 %v656
        %965 = vmatprep.subr.bf16.mxu0 0
        %966 = vmatpush1.bf16.msra.mxu0 %v655
        %967 = vmatprep.subr.bf16.mxu0 0
        %968 = vmatpush2.bf16.msra.mxu0 0
        %969 = vmatprep.subr.bf16.mxu0 0
        %970 = vmatpush2.bf16.msra.mxu0 0
        %971 = vmatprep.subr.bf16.mxu0 0
        %972 = vmatpush2.bf16.msra.mxu0 0
        %973 = vmatprep.subr.bf16.mxu0 0
        %974 = vmatpush2.bf16.msra.mxu0 0
        %975 = vmatprep.subr.bf16.mxu0 0
        %976 = vmatpush2.bf16.msra.mxu0 0
        %977 = vmatprep.subr.bf16.mxu0 0
        %978 = vmatpush2.bf16.msra.mxu0 0
        %979 = vmatprep.subr.bf16.mxu0 0
        %980 = vmatpush2.bf16.msra.mxu0 0
        %981 = vmatprep.subr.bf16.mxu0 0
        %982 = vmatpush2.bf16.msra.mxu0 0
        %983 = vmatprep.mubr.bf16.mxu0 0
        %984 = vmatmul.mubr.bf16.gmra.mxu0 %v908
        %v985 = vpop.f32.mrf.mxu0
        %v986 = vadd.f32 %v645, %v985
        %v987 = vpop.f32.mrf.mxu0
        %v988 = vpop.f32.mrf.mxu0
        %v989 = vadd.f32 %v645, %v988
        %v990 = vpop.f32.mrf.mxu0
        %991 = vdwg.mxu0
        %v992 = vmul.f32 %v555, %v945
        %v993 = vmul.f32 %v556, %v948
        %v994 = vpack.c.bf16 %v993, %v992
        %v996 = vsel %vm510, %v994, 0
        %998 = vmatprep.subr.bf16.mxu0 0
        %999 = vmatpush1.bf16.msra.mxu0 0
        %1000 = vmatprep.subr.bf16.mxu0 0
        %1001 = vmatpush1.bf16.msra.mxu0 0
        %1002 = vmatprep.subr.bf16.mxu0 0
        %1003 = vmatpush1.bf16.msra.mxu0 0
        %1004 = vmatprep.subr.bf16.mxu0 0
        %1005 = vmatpush1.bf16.msra.mxu0 0
        %1006 = vmatprep.subr.bf16.mxu0 0
        %1007 = vmatpush1.bf16.msra.mxu0 0
        %1008 = vmatprep.subr.bf16.mxu0 0
        %1009 = vmatpush1.bf16.msra.mxu0 0
        %1010 = vmatprep.subr.bf16.mxu0 0
        %1011 = vmatpush1.bf16.msra.mxu0 %v712
        %1012 = vmatprep.subr.bf16.mxu0 0
        %1013 = vmatpush1.bf16.msra.mxu0 %v711
        %1014 = vmatprep.subr.bf16.mxu0 0
        %1015 = vmatpush2.bf16.msra.mxu0 0
        %1016 = vmatprep.subr.bf16.mxu0 0
        %1017 = vmatpush2.bf16.msra.mxu0 0
        %1018 = vmatprep.subr.bf16.mxu0 0
        %1019 = vmatpush2.bf16.msra.mxu0 0
        %1020 = vmatprep.subr.bf16.mxu0 0
        %1021 = vmatpush2.bf16.msra.mxu0 0
        %1022 = vmatprep.subr.bf16.mxu0 0
        %1023 = vmatpush2.bf16.msra.mxu0 0
        %1024 = vmatprep.subr.bf16.mxu0 0
        %1025 = vmatpush2.bf16.msra.mxu0 0
        %1026 = vmatprep.subr.bf16.mxu0 0
        %1027 = vmatpush2.bf16.msra.mxu0 0
        %1028 = vmatprep.subr.bf16.mxu0 0
        %1029 = vmatpush2.bf16.msra.mxu0 0
        %1030 = vmatprep.mubr.bf16.mxu0 0
        %1031 = vmatmul.mubr.bf16.gmra.mxu0 %v996
        %v1032 = vpop.f32.mrf.mxu0
        %v1033 = vadd.f32 0.0, %v1032
        %v1034 = vpop.f32.mrf.mxu0
        %v1035 = vpop.f32.mrf.mxu0
        %v1036 = vadd.f32 0.0, %v1035
        %v1037 = vpop.f32.mrf.mxu0
        %1038 = vdwg.mxu0
        %s1039 = scalar_lea.vmem %s476, 24
        %v1040 = vld [vmem:[%s1039] sm:$0xf]
        %v1041 = vld [vmem:[%s1039 + $0x4] sm:$0xf]
        %v1044 = vunpack.c.l.b16 %v1040
        %v1045 = vunpack.c.l.b16 %v1041
        %v1046 = vpack.c.b16 %v1045, %v1044
        %v1048 = vsel %vm510, %v1046, 0
        %1050 = vmatprep.subr.bf16.mxu0 0
        %1051 = vmatpush1.bf16.msra.mxu0 0
        %1052 = vmatprep.subr.bf16.mxu0 0
        %1053 = vmatpush1.bf16.msra.mxu0 0
        %1054 = vmatprep.subr.bf16.mxu0 0
        %1055 = vmatpush1.bf16.msra.mxu0 0
        %1056 = vmatprep.subr.bf16.mxu0 0
        %1057 = vmatpush1.bf16.msra.mxu0 0
        %1058 = vmatprep.subr.bf16.mxu0 0
        %1059 = vmatpush1.bf16.msra.mxu0 0
        %1060 = vmatprep.subr.bf16.mxu0 0
        %1061 = vmatpush1.bf16.msra.mxu0 0
        %1062 = vmatprep.subr.bf16.mxu0 0
        %1063 = vmatpush1.bf16.msra.mxu0 %v589
        %1064 = vmatprep.subr.bf16.mxu0 0
        %1065 = vmatpush1.bf16.msra.mxu0 %v588
        %1066 = vmatprep.subr.bf16.mxu0 0
        %1067 = vmatpush2.bf16.msra.mxu0 0
        %1068 = vmatprep.subr.bf16.mxu0 0
        %1069 = vmatpush2.bf16.msra.mxu0 0
        %1070 = vmatprep.subr.bf16.mxu0 0
        %1071 = vmatpush2.bf16.msra.mxu0 0
        %1072 = vmatprep.subr.bf16.mxu0 0
        %1073 = vmatpush2.bf16.msra.mxu0 0
        %1074 = vmatprep.subr.bf16.mxu0 0
        %1075 = vmatpush2.bf16.msra.mxu0 0
        %1076 = vmatprep.subr.bf16.mxu0 0
        %1077 = vmatpush2.bf16.msra.mxu0 0
        %1078 = vmatprep.subr.bf16.mxu0 0
        %1079 = vmatpush2.bf16.msra.mxu0 0
        %1080 = vmatprep.subr.bf16.mxu0 0
        %1081 = vmatpush2.bf16.msra.mxu0 0
        %1082 = vmatprep.mubr.bf16.mxu0 0
        %1083 = vmatmul.mubr.bf16.gmra.mxu0 %v1048
        %v1084 = vpop.f32.mrf.mxu0
        %v1085 = vadd.f32 %v573, %v1084
        %v1086 = vpop.f32.mrf.mxu0
        %v1087 = vpop.f32.mrf.mxu0
        %v1088 = vadd.f32 %v573, %v1087
        %v1089 = vpop.f32.mrf.mxu0
        %1090 = vdwg.mxu0
        %1091 = vmatprep.subr.bf16.mxu0 0
        %1092 = vmatpush1.bf16.msra.mxu0 0
        %1093 = vmatprep.subr.bf16.mxu0 0
        %1094 = vmatpush1.bf16.msra.mxu0 0
        %1095 = vmatprep.subr.bf16.mxu0 0
        %1096 = vmatpush1.bf16.msra.mxu0 0
        %1097 = vmatprep.subr.bf16.mxu0 0
        %1098 = vmatpush1.bf16.msra.mxu0 0
        %1099 = vmatprep.subr.bf16.mxu0 0
        %1100 = vmatpush1.bf16.msra.mxu0 0
        %1101 = vmatprep.subr.bf16.mxu0 0
        %1102 = vmatpush1.bf16.msra.mxu0 0
        %1103 = vmatprep.subr.bf16.mxu0 0
        %1104 = vmatpush1.bf16.msra.mxu0 %v656
        %1105 = vmatprep.subr.bf16.mxu0 0
        %1106 = vmatpush1.bf16.msra.mxu0 %v655
        %1107 = vmatprep.subr.bf16.mxu0 0
        %1108 = vmatpush2.bf16.msra.mxu0 0
        %1109 = vmatprep.subr.bf16.mxu0 0
        %1110 = vmatpush2.bf16.msra.mxu0 0
        %1111 = vmatprep.subr.bf16.mxu0 0
        %1112 = vmatpush2.bf16.msra.mxu0 0
        %1113 = vmatprep.subr.bf16.mxu0 0
        %1114 = vmatpush2.bf16.msra.mxu0 0
        %1115 = vmatprep.subr.bf16.mxu0 0
        %1116 = vmatpush2.bf16.msra.mxu0 0
        %1117 = vmatprep.subr.bf16.mxu0 0
        %1118 = vmatpush2.bf16.msra.mxu0 0
        %1119 = vmatprep.subr.bf16.mxu0 0
        %1120 = vmatpush2.bf16.msra.mxu0 0
        %1121 = vmatprep.subr.bf16.mxu0 0
        %1122 = vmatpush2.bf16.msra.mxu0 0
        %1123 = vmatprep.mubr.bf16.mxu0 0
        %1124 = vmatmul.mubr.bf16.gmra.mxu0 %v1048
        %v1125 = vpop.f32.mrf.mxu0
        %v1126 = vadd.f32 %v645, %v1125
        %v1127 = vpop.f32.mrf.mxu0
        %v1128 = vpop.f32.mrf.mxu0
        %v1129 = vadd.f32 %v645, %v1128
        %v1130 = vpop.f32.mrf.mxu0
        %1131 = vdwg.mxu0
        %v1132 = vmul.f32 %v555, %v1085
        %v1133 = vmul.f32 %v556, %v1088
        %v1134 = vpack.c.bf16 %v1133, %v1132
        %v1136 = vsel %vm510, %v1134, 0
        %1138 = vmatprep.subr.bf16.mxu0 0
        %1139 = vmatpush1.bf16.msra.mxu0 0
        %1140 = vmatprep.subr.bf16.mxu0 0
        %1141 = vmatpush1.bf16.msra.mxu0 0
        %1142 = vmatprep.subr.bf16.mxu0 0
        %1143 = vmatpush1.bf16.msra.mxu0 0
        %1144 = vmatprep.subr.bf16.mxu0 0
        %1145 = vmatpush1.bf16.msra.mxu0 0
        %1146 = vmatprep.subr.bf16.mxu0 0
        %1147 = vmatpush1.bf16.msra.mxu0 0
        %1148 = vmatprep.subr.bf16.mxu0 0
        %1149 = vmatpush1.bf16.msra.mxu0 0
        %1150 = vmatprep.subr.bf16.mxu0 0
        %1151 = vmatpush1.bf16.msra.mxu0 %v712
        %1152 = vmatprep.subr.bf16.mxu0 0
        %1153 = vmatpush1.bf16.msra.mxu0 %v711
        %1154 = vmatprep.subr.bf16.mxu0 0
        %1155 = vmatpush2.bf16.msra.mxu0 0
        %1156 = vmatprep.subr.bf16.mxu0 0
        %1157 = vmatpush2.bf16.msra.mxu0 0
        %1158 = vmatprep.subr.bf16.mxu0 0
        %1159 = vmatpush2.bf16.msra.mxu0 0
        %1160 = vmatprep.subr.bf16.mxu0 0
        %1161 = vmatpush2.bf16.msra.mxu0 0
        %1162 = vmatprep.subr.bf16.mxu0 0
        %1163 = vmatpush2.bf16.msra.mxu0 0
        %1164 = vmatprep.subr.bf16.mxu0 0
        %1165 = vmatpush2.bf16.msra.mxu0 0
        %1166 = vmatprep.subr.bf16.mxu0 0
        %1167 = vmatpush2.bf16.msra.mxu0 0
        %1168 = vmatprep.subr.bf16.mxu0 0
        %1169 = vmatpush2.bf16.msra.mxu0 0
        %1170 = vmatprep.mubr.bf16.mxu0 0
        %1171 = vmatmul.mubr.bf16.gmra.mxu0 %v1136
        %v1172 = vpop.f32.mrf.mxu0
        %v1173 = vadd.f32 0.0, %v1172
        %v1174 = vpop.f32.mrf.mxu0
        %v1175 = vpop.f32.mrf.mxu0
        %v1176 = vadd.f32 0.0, %v1175
        %v1177 = vpop.f32.mrf.mxu0
        %1178 = vdwg.mxu0
        %v1179 = vmax.f32 %v753, %v893
        %v1180 = vmax.f32 %v756, %v896
        %v1181 = vmax.f32 %v1179, %v1033
        %v1182 = vmax.f32 %v1180, %v1036
        %v1183 = vmax.f32 %v1181, %v1173
        %v1184 = vmax.f32 %v1182, %v1176
        %v1185 = vsub.f32 %v753, %v1183
        %v1186 = vsub.f32 %v756, %v1184
        %v1187 = vmul.f32 %v1185, 1.442695
        %v1188 = vpow.pop %v1187
        %v1189 = vmul.f32 %v1186, 1.442695
        %v1190 = vpow.pop %v1189
        %v1191 = vsub.f32 %v893, %v1183
        %v1192 = vsub.f32 %v896, %v1184
        %v1193 = vmul.f32 %v1191, 1.442695
        %v1194 = vpow.pop %v1193
        %v1195 = vmul.f32 %v1192, 1.442695
        %v1196 = vpow.pop %v1195
        %v1197 = vsub.f32 %v1033, %v1183
        %v1198 = vsub.f32 %v1036, %v1184
        %v1199 = vmul.f32 %v1197, 1.442695
        %v1200 = vpow.pop %v1199
        %v1201 = vmul.f32 %v1198, 1.442695
        %v1202 = vpow.pop %v1201
        %v1203 = vsub.f32 %v1173, %v1183
        %v1204 = vsub.f32 %v1176, %v1184
        %v1205 = vmul.f32 %v1203, 1.442695
        %v1206 = vpow.pop %v1205
        %v1207 = vmul.f32 %v1204, 1.442695
        %v1208 = vpow.pop %v1207
        %v1209 = vadd.f32 %v1188, %v1194
        %v1210 = vadd.f32 %v1190, %v1196
        %v1211 = vadd.f32 %v1209, %v1200
        %v1212 = vadd.f32 %v1210, %v1202
        %v1213 = vadd.f32 %v1211, %v1206
        %v1214 = vadd.f32 %v1212, %v1208
        %v1215 = vrcp.pop %v1213
        %v1216 = vrcp.pop %v1214
        %v1217 = vmul.f32 %v1188, %v1215
        %v1218 = vmul.f32 %v1190, %v1216
        %v1219 = vpack.c.bf16 %v1218, %v1217
        %vm1220 = vcmask 31744
        %v1222 = vsel %vm1220, %v1219, 0
        %vm1224 = vcmask 1041408
        %v1226 = vsel %vm1224, %v561, 0
        %1228 = vmatprep.subr.bf16.mxu0 0
        %1229 = vmatpush1.bf16.msra.mxu0 0
        %1230 = vmatprep.subr.bf16.mxu0 0
        %1231 = vmatpush1.bf16.msra.mxu0 0
        %1232 = vmatprep.subr.bf16.mxu0 0
        %1233 = vmatpush1.bf16.msra.mxu0 0
        %1234 = vmatprep.subr.bf16.mxu0 0
        %1235 = vmatpush1.bf16.msra.mxu0 0
        %1236 = vmatprep.subr.bf16.mxu0 0
        %1237 = vmatpush1.bf16.msra.mxu0 0
        %1238 = vmatprep.subr.bf16.mxu0 0
        %1239 = vmatpush1.bf16.msra.mxu0 0
        %1240 = vmatprep.subr.bf16.mxu0 0
        %1241 = vmatpush1.bf16.msra.mxu0 0
        %1242 = vmatprep.subr.bf16.mxu0 0
        %1243 = vmatpush1.bf16.msra.mxu0 %v1226
        %1244 = vmatprep.subr.bf16.mxu0 0
        %1245 = vmatpush2.bf16.msra.mxu0 0
        %1246 = vmatprep.subr.bf16.mxu0 0
        %1247 = vmatpush2.bf16.msra.mxu0 0
        %1248 = vmatprep.subr.bf16.mxu0 0
        %1249 = vmatpush2.bf16.msra.mxu0 0
        %1250 = vmatprep.subr.bf16.mxu0 0
        %1251 = vmatpush2.bf16.msra.mxu0 0
        %1252 = vmatprep.subr.bf16.mxu0 0
        %1253 = vmatpush2.bf16.msra.mxu0 0
        %1254 = vmatprep.subr.bf16.mxu0 0
        %1255 = vmatpush2.bf16.msra.mxu0 0
        %1256 = vmatprep.subr.bf16.mxu0 0
        %1257 = vmatpush2.bf16.msra.mxu0 0
        %1258 = vmatprep.subr.bf16.mxu0 0
        %1259 = vmatpush2.bf16.msra.mxu0 0
        %1260 = vmatprep.mubr.bf16.mxu0 0
        %1261 = vmatmul.mubr.bf16.gmra.mxu0 %v1222
        %v1262 = vpop.f32.mrf.mxu0
        %v1263 = vadd.f32 0.0, %v1262
        %v1264 = vpop.f32.mrf.mxu0
        %v1265 = vpop.f32.mrf.mxu0
        %v1266 = vadd.f32 0.0, %v1265
        %v1267 = vpop.f32.mrf.mxu0
        %1268 = vdwg.mxu0
        %v1269 = vmul.f32 %v1263, %v694
        %v1270 = vmul.f32 %v1266, %v697
        %v1271 = vadd.f32 %v1269, 0.0
        %v1272 = vadd.f32 %v1270, 0.0
        %v1273 = vmul.f32 %v1194, %v1215
        %v1274 = vmul.f32 %v1196, %v1216
        %v1275 = vpack.c.bf16 %v1274, %v1273
        %v1277 = vsel %vm1220, %v1275, 0
        %1279 = vmatprep.subr.bf16.mxu0 0
        %1280 = vmatpush1.bf16.msra.mxu0 0
        %1281 = vmatprep.subr.bf16.mxu0 0
        %1282 = vmatpush1.bf16.msra.mxu0 0
        %1283 = vmatprep.subr.bf16.mxu0 0
        %1284 = vmatpush1.bf16.msra.mxu0 0
        %1285 = vmatprep.subr.bf16.mxu0 0
        %1286 = vmatpush1.bf16.msra.mxu0 0
        %1287 = vmatprep.subr.bf16.mxu0 0
        %1288 = vmatpush1.bf16.msra.mxu0 0
        %1289 = vmatprep.subr.bf16.mxu0 0
        %1290 = vmatpush1.bf16.msra.mxu0 0
        %1291 = vmatprep.subr.bf16.mxu0 0
        %1292 = vmatpush1.bf16.msra.mxu0 0
        %1293 = vmatprep.subr.bf16.mxu0 0
        %1294 = vmatpush1.bf16.msra.mxu0 %v1226
        %1295 = vmatprep.subr.bf16.mxu0 0
        %1296 = vmatpush2.bf16.msra.mxu0 0
        %1297 = vmatprep.subr.bf16.mxu0 0
        %1298 = vmatpush2.bf16.msra.mxu0 0
        %1299 = vmatprep.subr.bf16.mxu0 0
        %1300 = vmatpush2.bf16.msra.mxu0 0
        %1301 = vmatprep.subr.bf16.mxu0 0
        %1302 = vmatpush2.bf16.msra.mxu0 0
        %1303 = vmatprep.subr.bf16.mxu0 0
        %1304 = vmatpush2.bf16.msra.mxu0 0
        %1305 = vmatprep.subr.bf16.mxu0 0
        %1306 = vmatpush2.bf16.msra.mxu0 0
        %1307 = vmatprep.subr.bf16.mxu0 0
        %1308 = vmatpush2.bf16.msra.mxu0 0
        %1309 = vmatprep.subr.bf16.mxu0 0
        %1310 = vmatpush2.bf16.msra.mxu0 0
        %1311 = vmatprep.mubr.bf16.mxu0 0
        %1312 = vmatmul.mubr.bf16.gmra.mxu0 %v1277
        %v1313 = vpop.f32.mrf.mxu0
        %v1314 = vadd.f32 0.0, %v1313
        %v1315 = vpop.f32.mrf.mxu0
        %v1316 = vpop.f32.mrf.mxu0
        %v1317 = vadd.f32 0.0, %v1316
        %v1318 = vpop.f32.mrf.mxu0
        %1319 = vdwg.mxu0
        %v1320 = vmul.f32 %v1314, %v846
        %v1321 = vmul.f32 %v1317, %v849
        %v1322 = vadd.f32 %v1271, %v1320
        %v1323 = vadd.f32 %v1272, %v1321
        %v1324 = vmul.f32 %v1200, %v1215
        %v1325 = vmul.f32 %v1202, %v1216
        %v1326 = vpack.c.bf16 %v1325, %v1324
        %v1328 = vsel %vm1220, %v1326, 0
        %1330 = vmatprep.subr.bf16.mxu0 0
        %1331 = vmatpush1.bf16.msra.mxu0 0
        %1332 = vmatprep.subr.bf16.mxu0 0
        %1333 = vmatpush1.bf16.msra.mxu0 0
        %1334 = vmatprep.subr.bf16.mxu0 0
        %1335 = vmatpush1.bf16.msra.mxu0 0
        %1336 = vmatprep.subr.bf16.mxu0 0
        %1337 = vmatpush1.bf16.msra.mxu0 0
        %1338 = vmatprep.subr.bf16.mxu0 0
        %1339 = vmatpush1.bf16.msra.mxu0 0
        %1340 = vmatprep.subr.bf16.mxu0 0
        %1341 = vmatpush1.bf16.msra.mxu0 0
        %1342 = vmatprep.subr.bf16.mxu0 0
        %1343 = vmatpush1.bf16.msra.mxu0 0
        %1344 = vmatprep.subr.bf16.mxu0 0
        %1345 = vmatpush1.bf16.msra.mxu0 %v1226
        %1346 = vmatprep.subr.bf16.mxu0 0
        %1347 = vmatpush2.bf16.msra.mxu0 0
        %1348 = vmatprep.subr.bf16.mxu0 0
        %1349 = vmatpush2.bf16.msra.mxu0 0
        %1350 = vmatprep.subr.bf16.mxu0 0
        %1351 = vmatpush2.bf16.msra.mxu0 0
        %1352 = vmatprep.subr.bf16.mxu0 0
        %1353 = vmatpush2.bf16.msra.mxu0 0
        %1354 = vmatprep.subr.bf16.mxu0 0
        %1355 = vmatpush2.bf16.msra.mxu0 0
        %1356 = vmatprep.subr.bf16.mxu0 0
        %1357 = vmatpush2.bf16.msra.mxu0 0
        %1358 = vmatprep.subr.bf16.mxu0 0
        %1359 = vmatpush2.bf16.msra.mxu0 0
        %1360 = vmatprep.subr.bf16.mxu0 0
        %1361 = vmatpush2.bf16.msra.mxu0 0
        %1362 = vmatprep.mubr.bf16.mxu0 0
        %1363 = vmatmul.mubr.bf16.gmra.mxu0 %v1328
        %v1364 = vpop.f32.mrf.mxu0
        %v1365 = vadd.f32 0.0, %v1364
        %v1366 = vpop.f32.mrf.mxu0
        %v1367 = vpop.f32.mrf.mxu0
        %v1368 = vadd.f32 0.0, %v1367
        %v1369 = vpop.f32.mrf.mxu0
        %1370 = vdwg.mxu0
        %v1371 = vmul.f32 %v1365, %v986
        %v1372 = vmul.f32 %v1368, %v989
        %v1373 = vadd.f32 %v1322, %v1371
        %v1374 = vadd.f32 %v1323, %v1372
        %v1375 = vmul.f32 %v1206, %v1215
        %v1376 = vmul.f32 %v1208, %v1216
        %v1377 = vpack.c.bf16 %v1376, %v1375
        %v1379 = vsel %vm1220, %v1377, 0
        %1381 = vmatprep.subr.bf16.mxu0 0
        %1382 = vmatpush1.bf16.msra.mxu0 0
        %1383 = vmatprep.subr.bf16.mxu0 0
        %1384 = vmatpush1.bf16.msra.mxu0 0
        %1385 = vmatprep.subr.bf16.mxu0 0
        %1386 = vmatpush1.bf16.msra.mxu0 0
        %1387 = vmatprep.subr.bf16.mxu0 0
        %1388 = vmatpush1.bf16.msra.mxu0 0
        %1389 = vmatprep.subr.bf16.mxu0 0
        %1390 = vmatpush1.bf16.msra.mxu0 0
        %1391 = vmatprep.subr.bf16.mxu0 0
        %1392 = vmatpush1.bf16.msra.mxu0 0
        %1393 = vmatprep.subr.bf16.mxu0 0
        %1394 = vmatpush1.bf16.msra.mxu0 0
        %1395 = vmatprep.subr.bf16.mxu0 0
        %1396 = vmatpush1.bf16.msra.mxu0 %v1226
        %1397 = vmatprep.subr.bf16.mxu0 0
        %1398 = vmatpush2.bf16.msra.mxu0 0
        %1399 = vmatprep.subr.bf16.mxu0 0
        %1400 = vmatpush2.bf16.msra.mxu0 0
        %1401 = vmatprep.subr.bf16.mxu0 0
        %1402 = vmatpush2.bf16.msra.mxu0 0
        %1403 = vmatprep.subr.bf16.mxu0 0
        %1404 = vmatpush2.bf16.msra.mxu0 0
        %1405 = vmatprep.subr.bf16.mxu0 0
        %1406 = vmatpush2.bf16.msra.mxu0 0
        %1407 = vmatprep.subr.bf16.mxu0 0
        %1408 = vmatpush2.bf16.msra.mxu0 0
        %1409 = vmatprep.subr.bf16.mxu0 0
        %1410 = vmatpush2.bf16.msra.mxu0 0
        %1411 = vmatprep.subr.bf16.mxu0 0
        %1412 = vmatpush2.bf16.msra.mxu0 0
        %1413 = vmatprep.mubr.bf16.mxu0 0
        %1414 = vmatmul.mubr.bf16.gmra.mxu0 %v1379
        %v1415 = vpop.f32.mrf.mxu0
        %v1416 = vadd.f32 0.0, %v1415
        %v1417 = vpop.f32.mrf.mxu0
        %v1418 = vpop.f32.mrf.mxu0
        %v1419 = vadd.f32 0.0, %v1418
        %v1420 = vpop.f32.mrf.mxu0
        %1421 = vdwg.mxu0
        %v1422 = vmul.f32 %v1416, %v1126
        %v1423 = vmul.f32 %v1419, %v1129
        %v1424 = vadd.f32 %v1373, %v1422
        %v1425 = vadd.f32 %v1374, %v1423
        %v1426 = vpack.c.bf16 %v1425, %v1424
        %v1427 = vld [vmem:[%s8] sm:$0xf]
        %v1428 = vld [vmem:[%s8 + $0x4] sm:$0xf]
        %v1429 = vld [vmem:[%s8 + $0x8] sm:$0xf]
        %v1430 = vld [vmem:[%s8 + $0xc] sm:$0xf]
        %v1431 = vld [vmem:[%s9] sm:$0x1]
        %v1433 = vlaneseq
        %v1434 = vshrl.u32 %v1433, 7
        %v1435 = vsub.s32 0, %v1434
        %v1436 = vrot.slane %v1431, %v1435
        %v1442 = vunpack.c.l.b16 %v1427
        %v1443 = vunpack.c.l.b16 %v1428
        %v1444 = vunpack.c.l.b16 %v1429
        %v1445 = vunpack.c.l.b16 %v1430
        %v1446 = vpack.c.b16 %v1443, %v1442
        %v1447 = vpack.c.b16 %v1445, %v1444
        %v1451 = vsel %vm510, %v1426, 0
        %1453 = vmatprep.subr.bf16.mxu0 0
        %1454 = vmatpush1.bf16.msra.mxu0 0
        %1455 = vmatprep.subr.bf16.mxu0 0
        %1456 = vmatpush1.bf16.msra.mxu0 0
        %1457 = vmatprep.subr.bf16.mxu0 0
        %1458 = vmatpush1.bf16.msra.mxu0 0
        %1459 = vmatprep.subr.bf16.mxu0 0
        %1460 = vmatpush1.bf16.msra.mxu0 0
        %1461 = vmatprep.subr.bf16.mxu0 0
        %1462 = vmatpush1.bf16.msra.mxu0 0
        %1463 = vmatprep.subr.bf16.mxu0 0
        %1464 = vmatpush1.bf16.msra.mxu0 0
        %1465 = vmatprep.subr.bf16.mxu0 0
        %1466 = vmatpush1.bf16.msra.mxu0 %v1447
        %1467 = vmatprep.subr.bf16.mxu0 0
        %1468 = vmatpush1.bf16.msra.mxu0 %v1446
        %1469 = vmatprep.subr.bf16.mxu0 0
        %1470 = vmatpush2.bf16.msra.mxu0 0
        %1471 = vmatprep.subr.bf16.mxu0 0
        %1472 = vmatpush2.bf16.msra.mxu0 0
        %1473 = vmatprep.subr.bf16.mxu0 0
        %1474 = vmatpush2.bf16.msra.mxu0 0
        %1475 = vmatprep.subr.bf16.mxu0 0
        %1476 = vmatpush2.bf16.msra.mxu0 0
        %1477 = vmatprep.subr.bf16.mxu0 0
        %1478 = vmatpush2.bf16.msra.mxu0 0
        %1479 = vmatprep.subr.bf16.mxu0 0
        %1480 = vmatpush2.bf16.msra.mxu0 0
        %1481 = vmatprep.subr.bf16.mxu0 0
        %1482 = vmatpush2.bf16.msra.mxu0 0
        %1483 = vmatprep.subr.bf16.mxu0 0
        %1484 = vmatpush2.bf16.msra.mxu0 0
        %1485 = vmatprep.mubr.bf16.mxu0 0
        %1486 = vmatmul.mubr.bf16.gmra.mxu0 %v1451
        %v1487 = vpop.f32.mrf.mxu0
        %v1488 = vadd.f32 %v1436, %v1487
        %v1489 = vpop.f32.mrf.mxu0
        %v1490 = vpop.f32.mrf.mxu0
        %v1491 = vadd.f32 %v1436, %v1490
        %v1492 = vpop.f32.mrf.mxu0
        %1493 = vdwg.mxu0
        %1494 = vst.msk [vmem:[%s457] sm:$0xff] %vm510, %v1488
        %1495 = vst.msk [vmem:[%s457 + $0x8] sm:$0xff] %vm510, %v1491
        %s1496 = sand.u32 %s314, 1
        %s1497 = scalar_lea.sflag [#allocation3], %s1496
        %s1498 = sand.u32 %s314, 1
        %s1499 = smul.addr %s1498, 16
        %s1500 = scalar_lea.vmem [#allocation2], %s1499
        // Predicated region
        $region69: #{_forward_padded.5} parent=67 // pred_check
          %p1501 = pneg %p324
        $region70: #{_forward_padded.5} parent=67 // pred_check_branch
          %1503 = sbr.rel (%p1501) target = $region72
        $region71: #{_forward_padded.5} parent=67 // pred_region
          %s1504 = smul.u32 2, %s31
          %s1506 = ssub.s32 256, 256
          %1507 = vsyncadd %s1497, %s1506
          %s1508 = smul.addr %s30, 2
          %s1509 = sadd.s32 %s1504, %s1508
          %s1510 = smul.addr %s1509, 128
          %s1511 = scalar_lea.hbm %s12, %s1510
          %s1512 = sshll.u32 %s1500, 4
          %s1513 = int_to_ptr.vmem [resolvable:$true] %s1512
          %1518 = dma.vmem_to_hbm [thread:$0]  %s1513, 256, %s1511, %s1497, 128, 128, 8
        $region72: #{_forward_padded.5} parent=67 // pred_fallthru
          _
      $region68: #{_forward_padded.5} parent=5 // pred_fallthru
        _
      %p1519 = scmp.le.s32.totalorder 2, %s21
      // Predicated region
      $region73: #{_forward_padded.5} parent=5 // pred_check
        %p1520 = pneg %p1519
      $region74: #{_forward_padded.5} parent=5 // pred_check_branch
        %1522 = sbr.rel (%p1520) target = $region76
      $region75: #{_forward_padded.5} parent=5 // pred_region
        %s1523 = ssub.s32 %s21, 2
        // Predicated region
        $region77: #{_forward_padded.5} parent=75 // pred_check
          %p1524 = pneg %p330
        $region78: #{_forward_padded.5} parent=75 // pred_check_branch
          %1526 = sbr.rel (%p1524) target = $region80
        $region79: #{_forward_padded.5} parent=75 // pred_region
          %s1527 = sand.u32 %s315, 1
          %s1528 = scalar_lea.sflag [#allocation3], %s1527
          %s1529 = sand.u32 %s315, 1
          %s1530 = smul.addr %s1529, 16
          %s1531 = scalar_lea.vmem [#allocation2], %s1530
          %1532 = dma.done %s1528, 256
        $region80: #{_forward_padded.5} parent=75 // pred_fallthru
          _
      $region76: #{_forward_padded.5} parent=5 // pred_fallthru
        _
    $region6: #{_forward_padded.5} parent=1 // loop_footer
      %s25 = sadd.s32 1, %s21
    $region7: #{_forward_padded.5} parent=1 // loop_footer_branch
      %20 = sbr.rel target = $region3
    $region8: #{_forward_padded.5} parent=1 // loop_exit
      _
    %1533 = vsyncpa [#allocation3], 1
    %s1534 = scalar_lea.sflag [#allocation3], 1
    %1535 = vsyncpa %s1534, 1

</llo_original>
